<compile_context>
chip_gen: v7x
topology: tpu7x:2x2x1
jax: 0.10.0
libtpu: 0.0.40
codegen_flags: <defaults>
</compile_context>

<pallas_src>
import math

import jax
import jax.numpy as jnp
from jax.experimental import pallas as pl
from jax.experimental.pallas import tpu as pltpu


def _recip(x):
    # EUP approximate reciprocal (free slot) + one Newton step so the
    # probability invariants keep ~f32 accuracy while the divide stays off the
    # VPU.  Callers guarantee x > 0 (clamped / >= 1).
    r = pl.reciprocal(x, approx=True)
    return r * (2.0 - x * r)


# ------------------------------ fused kernel -------------------------------- #

def hier_effnet_kernel(xs_ref, wc_ref, bc_ref, pool_ref, wfc_ref, bfc_ref,
                       wh_ref, bh_ref, seg_ref, segt_ref, o_ref):
    nwords, nclasses = seg_ref.shape

    # ---- 3x3 'same' stem conv: ONE K=27 MXU dot (im2col done in wrapper) ----
    y = jnp.dot(xs_ref[...], wc_ref[...],
                preferred_element_type=jnp.float32) + bc_ref[...]
    # swish in tanh form (identical to y*sigmoid(y)); elementwise stays f32.
    y = y * (0.5 * (1.0 + jnp.tanh(0.5 * y)))                     # (rows, Cstem)

    # ---- global average pool as an MXU contraction (selector precomputed) ----
    pooled = jnp.dot(pool_ref[...], y.astype(jnp.bfloat16),
                     preferred_element_type=jnp.float32)          # (Bp, Cstem)

    # ---- replaced _fc (-> nhid) + relu (from forward()) ----
    feat = jnp.dot(pooled.astype(jnp.bfloat16), wfc_ref[...],
                   preferred_element_type=jnp.float32) + bfc_ref[...]
    feat = jnp.maximum(feat, 0.0)                                 # (Bp, nhid)

    # ---- HierarchicalSoftmax, inference path (labels is None) ----
    # fused head: [bottom logits | top logits] in one lane-dense MXU dot
    lh = jnp.dot(feat.astype(jnp.bfloat16), wh_ref[...],
                 preferred_element_type=jnp.float32) + bh_ref[...]
    lb = lh[:, :nwords]                                           # (Bp, nwords)
    lt = lh[:, nwords:]                                           # (Bp, nclasses)

    # top-level softmax over classes (denominator >= 1 after max shift)
    et = jnp.exp(lt - jnp.max(lt, axis=-1, keepdims=True))
    top = et * _recip(jnp.sum(et, axis=-1, keepdims=True))        # (Bp, nclasses)

    # bottom softmax: global row max is a constant shift within each class, so
    # the per-class softmax is unchanged; the epsilon clamp below removes the
    # NaN path for classes whose logits underflow far below the global max.
    eb = jnp.exp(lb - jnp.max(lb, axis=-1, keepdims=True))
    denom = jnp.dot(eb, seg_ref[...],
                    preferred_element_type=jnp.float32)           # per-class sum
    denom = jnp.maximum(denom, 1e-30)
    scale = top * _recip(denom)                                   # (Bp, nclasses)
    # word_probs[b, c*ntpc + t] = top[b, c] * softmax_within_class_c[b, t]
    o_ref[...] = eb * jnp.dot(scale, segt_ref[...],
                              preferred_element_type=jnp.float32)


# ------------------------------ JAX wrapper -------------------------------- #

def hierarchical_efficientnet_forward(x_nchw, params):
    """forward(x, y=None) -> word probabilities (B, nclasses * ntokens_per_class)."""
    x = jnp.transpose(x_nchw, (0, 2, 3, 1)).astype(jnp.float32)   # NCHW -> NHWC
    B, H, W, Cin = x.shape

    # Pad batch to a multiple of 8 (sublane-dense vregs); slice output after.
    Bp = ((B + 7) // 8) * 8
    if Bp != B:
        x = jnp.pad(x, ((0, Bp - B), (0, 0), (0, 0), (0, 0)))
    xp = jnp.pad(x, ((0, 0), (1, 1), (1, 1), (0, 0)))             # 'same' pad
    rows = Bp * H * W

    # im2col in the wrapper (fuses with the transpose/pad copy under jit):
    # xs[(b,h,w), (di,dj,cin)] matches stem_w.reshape(9*Cin, Cstem) flattening.
    patches = jnp.stack([xp[:, di:di + H, dj:dj + W, :]
                         for di in range(3) for dj in range(3)], axis=3)
    xs = patches.reshape(rows, 9 * Cin).astype(jnp.bfloat16)

    Cstem = params["stem_w"].shape[-1]
    nhid = params["fc_w"].shape[-1]
    nclasses, _, ntpc = params["bot_w"].shape
    nwords = nclasses * ntpc

    # Weights reshaped / concatenated / bf16-cast once (constant-folded by jit).
    wc = params["stem_w"].reshape(9 * Cin, Cstem).astype(jnp.bfloat16)
    bc = params["stem_b"].reshape(1, Cstem).astype(jnp.float32)
    wfc = params["fc_w"].astype(jnp.bfloat16)
    bfc = params["fc_b"].reshape(1, nhid).astype(jnp.float32)
    # wb[h, c*ntpc + t] = bot_w[c, h, t]; fused head = [bottom | top]
    wb = jnp.transpose(params["bot_w"], (1, 0, 2)).reshape(nhid, nwords)
    wh = jnp.concatenate([wb, params["top_w"]], axis=1).astype(jnp.bfloat16)
    bh = jnp.concatenate([params["bot_b"].reshape(nwords),
                          params["top_b"]]).reshape(1, nwords + nclasses)
    bh = bh.astype(jnp.float32)

    # Shape-only constant selectors (constant-folded by XLA, DMA'd once).
    r_ids = jnp.arange(rows)
    pool_sel = ((r_ids[None, :] // (H * W)) == jnp.arange(Bp)[:, None])
    pool_sel = (pool_sel.astype(jnp.float32) / (H * W)).astype(jnp.bfloat16)
    seg = ((jnp.arange(nwords)[:, None] // ntpc)
           == jnp.arange(nclasses)[None, :]).astype(jnp.float32)  # (nwords, nclasses)
    seg_t = seg.T                                                 # (nclasses, nwords)

    # Everything is tiny -> whole-array VMEM residency, grid=() (one invocation).
    # TODO(synk): when the real MBConv backbone / larger B,H,W land, add a grid
    # over row tiles with (8,128)-aligned blocks and "parallel" semantics (v7x
    # has 2 TensorCores and only 64 MiB VMEM) and pad nwords to a multiple of
    # 128 for a lane-dense output slab, instead of full-array residency.
    vmem = pl.BlockSpec(memory_space=pltpu.MemorySpace.VMEM)
    out = pl.pallas_call(
        hier_effnet_kernel,
        out_shape=jax.ShapeDtypeStruct((Bp, nwords), jnp.float32),
        in_specs=[vmem] * 10,
        out_specs=vmem,
    )(xs, wc, bc, pool_sel, wfc, bfc, wh, bh, seg, seg_t)
    return out[:B]


# ---------------------------- pure-JAX reference ---------------------------- #

def reference_forward(x_nchw, params):
    x = jnp.transpose(x_nchw, (0, 2, 3, 1))
    y = jax.lax.conv_general_dilated(
        x, params["stem_w"], window_strides=(1, 1), padding="SAME",
        dimension_numbers=("NHWC", "HWIO", "NHWC"))
    y = y + params["stem_b"]
    y = y * jax.nn.sigmoid(y)
    pooled = jnp.mean(y, axis=(1, 2))
    feat = jax.nn.relu(pooled @ params["fc_w"] + params["fc_b"])
    top = jax.nn.softmax(feat @ params["top_w"] + params["top_b"], axis=-1)
    bot_logits = jnp.einsum("bh,cht->bct", feat, params["bot_w"]) + params["bot_b"]
    bot = jax.nn.softmax(bot_logits, axis=-1)
    word = top[:, :, None] * bot
    return word.reshape(x.shape[0], -1)


# ---------------------------------- main ------------------------------------ #

if __name__ == "__main__":
    B, Cin, H, W = 2, 3, 16, 16
    Cstem, nhid = 32, 128
    num_classes, ntokens_per_class = 32, 8
    nclasses = math.ceil(num_classes / ntokens_per_class)

    key = jax.random.PRNGKey(0)
    ks = jax.random.split(key, 9)
    params = dict(
        stem_w=0.1 * jax.random.normal(ks[0], (3, 3, Cin, Cstem), jnp.float32),
        stem_b=0.1 * jax.random.normal(ks[1], (Cstem,), jnp.float32),
        fc_w=0.1 * jax.random.normal(ks[2], (Cstem, nhid), jnp.float32),
        fc_b=0.1 * jax.random.normal(ks[3], (nhid,), jnp.float32),
        top_w=0.1 * jax.random.normal(ks[4], (nhid, nclasses), jnp.float32),
        top_b=0.1 * jax.random.normal(ks[5], (nclasses,), jnp.float32),
        bot_w=0.1 * jax.random.normal(ks[6], (nclasses, nhid, ntokens_per_class), jnp.float32),
        bot_b=0.1 * jax.random.normal(ks[7], (nclasses, ntokens_per_class), jnp.float32),
    )
    x = jax.random.normal(ks[8], (B, Cin, H, W), jnp.float32)

    fwd = jax.jit(hierarchical_efficientnet_forward)
    out = jax.block_until_ready(fwd(x, params))

    assert out.shape == (B, nclasses * ntokens_per_class)
    # Word probabilities: each row sums to 1 (product of the two softmax levels).
    assert bool(jnp.all(jnp.abs(jnp.sum(out, axis=-1) - 1.0) < 5e-3))
    # Tolerance allows for bf16 matmul-operand rounding vs the f32 reference.
    ref = reference_forward(x, params)
    assert bool(jnp.max(jnp.abs(out - ref)) < 1e-2)
    print("KERNEL_OK")
</pallas_src>

<mosaic_0001>
module attributes {stable_mosaic.version = 11 : i64} {
  func.func @hier_effnet_kernel(%arg0: memref<2048x27xbf16, #tpu.memory_space<vmem>>, %arg1: memref<27x32xbf16, #tpu.memory_space<vmem>>, %arg2: memref<1x32xf32, #tpu.memory_space<vmem>>, %arg3: memref<8x2048xbf16, #tpu.memory_space<vmem>>, %arg4: memref<32x128xbf16, #tpu.memory_space<vmem>>, %arg5: memref<1x128xf32, #tpu.memory_space<vmem>>, %arg6: memref<128x36xbf16, #tpu.memory_space<vmem>>, %arg7: memref<1x36xf32, #tpu.memory_space<vmem>>, %arg8: memref<32x4xf32, #tpu.memory_space<vmem>>, %arg9: memref<4x32xf32, #tpu.memory_space<vmem>>, %arg10: memref<8x32xf32, #tpu.memory_space<vmem>>) attributes {dimension_semantics = [], scalar_prefetch = 0 : i64, scratch_operands = 0 : i64, tpu.core_type = #tpu.core_type<tc>} {
    %c0 = arith.constant 0 : index
    %c0_0 = arith.constant 0 : index
    %0 = vector.load %arg0[%c0, %c0_0] : memref<2048x27xbf16, #tpu.memory_space<vmem>>, vector<2048x27xbf16>
    %c0_1 = arith.constant 0 : index
    %c0_2 = arith.constant 0 : index
    %1 = vector.load %arg1[%c0_1, %c0_2] : memref<27x32xbf16, #tpu.memory_space<vmem>>, vector<27x32xbf16>
    %cst = arith.constant dense<0.000000e+00> : vector<2048x32xf32>
    %2 = tpu.matmul %0, %1, %cst {dimension_numbers = #tpu.dot_dimension_numbers<[1], [0], [0], [1], [0, 0, 1, 1], [], []>} : vector<2048x27xbf16>, vector<27x32xbf16>, vector<2048x32xf32> -> vector<2048x32xf32>
    %c0_3 = arith.constant 0 : index
    %c0_4 = arith.constant 0 : index
    %3 = vector.load %arg2[%c0_3, %c0_4] : memref<1x32xf32, #tpu.memory_space<vmem>>, vector<1x32xf32>
    %4 = vector.broadcast %3 : vector<1x32xf32> to vector<2048x32xf32>
    %5 = arith.addf %2, %4 : vector<2048x32xf32>
    %cst_5 = arith.constant 5.000000e-01 : f32
    %6 = vector.broadcast %cst_5 : f32 to vector<2048x32xf32>
    %7 = arith.mulf %6, %5 : vector<2048x32xf32>
    %8 = math.tanh %7 : vector<2048x32xf32>
    %cst_6 = arith.constant 1.000000e+00 : f32
    %9 = vector.broadcast %cst_6 : f32 to vector<2048x32xf32>
    %10 = arith.addf %9, %8 : vector<2048x32xf32>
    %cst_7 = arith.constant 5.000000e-01 : f32
    %11 = vector.broadcast %cst_7 : f32 to vector<2048x32xf32>
    %12 = arith.mulf %11, %10 : vector<2048x32xf32>
    %13 = arith.mulf %5, %12 : vector<2048x32xf32>
    %c0_8 = arith.constant 0 : index
    %c0_9 = arith.constant 0 : index
    %14 = vector.load %arg3[%c0_8, %c0_9] : memref<8x2048xbf16, #tpu.memory_space<vmem>>, vector<8x2048xbf16>
    %15 = arith.truncf %13 : vector<2048x32xf32> to vector<2048x32xbf16>
    %cst_10 = arith.constant dense<0.000000e+00> : vector<8x32xf32>
    %16 = tpu.matmul %14, %15, %cst_10 {dimension_numbers = #tpu.dot_dimension_numbers<[1], [0], [0], [1], [0, 0, 1, 1], [], []>} : vector<8x2048xbf16>, vector<2048x32xbf16>, vector<8x32xf32> -> vector<8x32xf32>
    %17 = arith.truncf %16 : vector<8x32xf32> to vector<8x32xbf16>
    %c0_11 = arith.constant 0 : index
    %c0_12 = arith.constant 0 : index
    %18 = vector.load %arg4[%c0_11, %c0_12] : memref<32x128xbf16, #tpu.memory_space<vmem>>, vector<32x128xbf16>
    %cst_13 = arith.constant dense<0.000000e+00> : vector<8x128xf32>
    %19 = tpu.matmul %17, %18, %cst_13 {dimension_numbers = #tpu.dot_dimension_numbers<[1], [0], [0], [1], [0, 0, 1, 1], [], []>} : vector<8x32xbf16>, vector<32x128xbf16>, vector<8x128xf32> -> vector<8x128xf32>
    %c0_14 = arith.constant 0 : index
    %c0_15 = arith.constant 0 : index
    %20 = vector.load %arg5[%c0_14, %c0_15] : memref<1x128xf32, #tpu.memory_space<vmem>>, vector<1x128xf32>
    %21 = vector.broadcast %20 : vector<1x128xf32> to vector<8x128xf32>
    %22 = arith.addf %19, %21 : vector<8x128xf32>
    %cst_16 = arith.constant 0.000000e+00 : f32
    %23 = vector.broadcast %cst_16 : f32 to vector<8x128xf32>
    %24 = arith.maximumf %22, %23 : vector<8x128xf32>
    %25 = arith.truncf %24 : vector<8x128xf32> to vector<8x128xbf16>
    %c0_17 = arith.constant 0 : index
    %c0_18 = arith.constant 0 : index
    %26 = vector.load %arg6[%c0_17, %c0_18] : memref<128x36xbf16, #tpu.memory_space<vmem>>, vector<128x36xbf16>
    %cst_19 = arith.constant dense<0.000000e+00> : vector<8x36xf32>
    %27 = tpu.matmul %25, %26, %cst_19 {dimension_numbers = #tpu.dot_dimension_numbers<[1], [0], [0], [1], [0, 0, 1, 1], [], []>} : vector<8x128xbf16>, vector<128x36xbf16>, vector<8x36xf32> -> vector<8x36xf32>
    %c0_20 = arith.constant 0 : index
    %c0_21 = arith.constant 0 : index
    %28 = vector.load %arg7[%c0_20, %c0_21] : memref<1x36xf32, #tpu.memory_space<vmem>>, vector<1x36xf32>
    %29 = vector.broadcast %28 : vector<1x36xf32> to vector<8x36xf32>
    %30 = arith.addf %27, %29 : vector<8x36xf32>
    %31 = vector.extract_strided_slice %30 {offsets = [0, 0], sizes = [8, 32], strides = [1, 1]} : vector<8x36xf32> to vector<8x32xf32>
    %32 = vector.extract_strided_slice %30 {offsets = [0, 32], sizes = [8, 4], strides = [1, 1]} : vector<8x36xf32> to vector<8x4xf32>
    %cst_22 = arith.constant dense<0xFF800000> : vector<8xf32>
    %33 = vector.multi_reduction <maximumf>, %32, %cst_22 [1] : vector<8x4xf32> to vector<8xf32>
    %34 = vector.shape_cast %33 : vector<8xf32> to vector<8x1xf32>
    %35 = vector.broadcast %34 : vector<8x1xf32> to vector<8x4xf32>
    %36 = arith.subf %32, %35 : vector<8x4xf32>
    %37 = math.exp %36 : vector<8x4xf32>
    %cst_23 = arith.constant dense<0.000000e+00> : vector<8xf32>
    %38 = vector.multi_reduction <add>, %37, %cst_23 [1] : vector<8x4xf32> to vector<8xf32>
    %39 = vector.shape_cast %38 : vector<8xf32> to vector<8x1xf32>
    %40 = tpu.reciprocal %39 {approx = true} : vector<8x1xf32> -> vector<8x1xf32>
    %41 = arith.mulf %39, %40 : vector<8x1xf32>
    %cst_24 = arith.constant 2.000000e+00 : f32
    %42 = vector.broadcast %cst_24 : f32 to vector<8x1xf32>
    %43 = arith.subf %42, %41 : vector<8x1xf32>
    %44 = arith.mulf %40, %43 : vector<8x1xf32>
    %45 = vector.broadcast %44 : vector<8x1xf32> to vector<8x4xf32>
    %46 = arith.mulf %37, %45 : vector<8x4xf32>
    %cst_25 = arith.constant dense<0xFF800000> : vector<8xf32>
    %47 = vector.multi_reduction <maximumf>, %31, %cst_25 [1] : vector<8x32xf32> to vector<8xf32>
    %48 = vector.shape_cast %47 : vector<8xf32> to vector<8x1xf32>
    %49 = vector.broadcast %48 : vector<8x1xf32> to vector<8x32xf32>
    %50 = arith.subf %31, %49 : vector<8x32xf32>
    %51 = math.exp %50 : vector<8x32xf32>
    %c0_26 = arith.constant 0 : index
    %c0_27 = arith.constant 0 : index
    %52 = vector.load %arg8[%c0_26, %c0_27] : memref<32x4xf32, #tpu.memory_space<vmem>>, vector<32x4xf32>
    %cst_28 = arith.constant dense<0.000000e+00> : vector<8x4xf32>
    %53 = tpu.matmul %51, %52, %cst_28 {dimension_numbers = #tpu.dot_dimension_numbers<[1], [0], [0], [1], [0, 0, 1, 1], [], []>} : vector<8x32xf32>, vector<32x4xf32>, vector<8x4xf32> -> vector<8x4xf32>
    %cst_29 = arith.constant 1.000000e-30 : f32
    %54 = vector.broadcast %cst_29 : f32 to vector<8x4xf32>
    %55 = arith.maximumf %53, %54 : vector<8x4xf32>
    %56 = tpu.reciprocal %55 {approx = true} : vector<8x4xf32> -> vector<8x4xf32>
    %57 = arith.mulf %55, %56 : vector<8x4xf32>
    %cst_30 = arith.constant 2.000000e+00 : f32
    %58 = vector.broadcast %cst_30 : f32 to vector<8x4xf32>
    %59 = arith.subf %58, %57 : vector<8x4xf32>
    %60 = arith.mulf %56, %59 : vector<8x4xf32>
    %61 = arith.mulf %46, %60 : vector<8x4xf32>
    %c0_31 = arith.constant 0 : index
    %c0_32 = arith.constant 0 : index
    %62 = vector.load %arg9[%c0_31, %c0_32] : memref<4x32xf32, #tpu.memory_space<vmem>>, vector<4x32xf32>
    %cst_33 = arith.constant dense<0.000000e+00> : vector<8x32xf32>
    %63 = tpu.matmul %61, %62, %cst_33 {dimension_numbers = #tpu.dot_dimension_numbers<[1], [0], [0], [1], [0, 0, 1, 1], [], []>} : vector<8x4xf32>, vector<4x32xf32>, vector<8x32xf32> -> vector<8x32xf32>
    %64 = arith.mulf %51, %63 : vector<8x32xf32>
    %c0_34 = arith.constant 0 : index
    %c0_35 = arith.constant 0 : index
    %65 = vector.load %arg10[%c0_34, %c0_35] : memref<8x32xf32, #tpu.memory_space<vmem>>, vector<8x32xf32>
    tpu.vector_store %arg10[%c0_34, %c0_35], %64 {strides = array<i32>} : memref<8x32xf32, #tpu.memory_space<vmem>>, vector<8x32xf32>,
    return
  }
}

</mosaic_0001>

<llo_original>
// kernel: hierarchical_efficientnet_forward.1
$region0: #{hierarchical_efficientnet_forward.1}
  #allocation0 [shape = 'u32[]', space=smem, size = 0x4, offset = 0x4, fixed_abs, tag = 'smem constant byte address 0x4 - core index']
  #allocation1 [shape = 'u32[144,128]{1,0:T(1,128)}', space=vmem, size = 0x12000, scoped, tag = 'internal scratch']
  %s0 = inlined_call_operand.vmem [shape: bf16[2048,27], index: 0, kind: input, shape index: {}]
  %s1 = inlined_call_operand.vmem [shape: bf16[27,32], index: 1, kind: input, shape index: {}]
  %s2 = inlined_call_operand.vmem [shape: f32[1,32], index: 2, kind: input, shape index: {}]
  %s3 = inlined_call_operand.vmem [shape: bf16[8,2048], index: 3, kind: input, shape index: {}]
  %s4 = inlined_call_operand.vmem [shape: bf16[32,128], index: 4, kind: input, shape index: {}]
  %s5 = inlined_call_operand.vmem [shape: f32[1,128], index: 5, kind: input, shape index: {}]
  %s6 = inlined_call_operand.vmem [shape: bf16[128,36], index: 6, kind: input, shape index: {}]
  %s7 = inlined_call_operand.vmem [shape: f32[1,36], index: 7, kind: input, shape index: {}]
  %s8 = inlined_call_operand.vmem [shape: f32[32,4], index: 8, kind: input, shape index: {}]
  %s9 = inlined_call_operand.vmem [shape: f32[4,32], index: 9, kind: input, shape index: {}]
  %s10 = inlined_call_operand.vmem [shape: f32[8,32], index: 10, kind: output, shape index: {}]
  %s11 = sld [smem:[#allocation0]]
  $region50: #{hierarchical_efficientnet_forward.1} parent=0
    _
  %s13 = ssub.s32 1, %s11
  %s14 = scalar_select 0, %s13, %s11
  // Predicated region
  $region2: #{hierarchical_efficientnet_forward.1} parent=0 // pred_check
    _
  $region3: #{hierarchical_efficientnet_forward.1} parent=0 // pred_check_branch
    %16 = sbr.rel (0) target = $region5
  $region4: #{hierarchical_efficientnet_forward.1} parent=0 // pred_region
    _
  $region5: #{hierarchical_efficientnet_forward.1} parent=0 // pred_fallthru
    _
  // Predicated region
  $region6: #{hierarchical_efficientnet_forward.1} parent=0 // pred_check
    _
  $region7: #{hierarchical_efficientnet_forward.1} parent=0 // pred_check_branch
    %18 = sbr.rel (0) target = $region9
  $region8: #{hierarchical_efficientnet_forward.1} parent=0 // pred_region
    _
  $region9: #{hierarchical_efficientnet_forward.1} parent=0 // pred_fallthru
    _
  // Predicated region
  $region10: #{hierarchical_efficientnet_forward.1} parent=0 // pred_check
    _
  $region11: #{hierarchical_efficientnet_forward.1} parent=0 // pred_check_branch
    %20 = sbr.rel (0) target = $region13
  $region12: #{hierarchical_efficientnet_forward.1} parent=0 // pred_region
    _
  $region13: #{hierarchical_efficientnet_forward.1} parent=0 // pred_fallthru
    _
  // Predicated region
  $region14: #{hierarchical_efficientnet_forward.1} parent=0 // pred_check
    _
  $region15: #{hierarchical_efficientnet_forward.1} parent=0 // pred_check_branch
    %22 = sbr.rel (0) target = $region17
  $region16: #{hierarchical_efficientnet_forward.1} parent=0 // pred_region
    _
  $region17: #{hierarchical_efficientnet_forward.1} parent=0 // pred_fallthru
    _
  // Predicated region
  $region18: #{hierarchical_efficientnet_forward.1} parent=0 // pred_check
    _
  $region19: #{hierarchical_efficientnet_forward.1} parent=0 // pred_check_branch
    %24 = sbr.rel (0) target = $region21
  $region20: #{hierarchical_efficientnet_forward.1} parent=0 // pred_region
    _
  $region21: #{hierarchical_efficientnet_forward.1} parent=0 // pred_fallthru
    _
  // Predicated region
  $region22: #{hierarchical_efficientnet_forward.1} parent=0 // pred_check
    _
  $region23: #{hierarchical_efficientnet_forward.1} parent=0 // pred_check_branch
    %26 = sbr.rel (0) target = $region25
  $region24: #{hierarchical_efficientnet_forward.1} parent=0 // pred_region
    _
  $region25: #{hierarchical_efficientnet_forward.1} parent=0 // pred_fallthru
    _
  // Predicated region
  $region26: #{hierarchical_efficientnet_forward.1} parent=0 // pred_check
    _
  $region27: #{hierarchical_efficientnet_forward.1} parent=0 // pred_check_branch
    %28 = sbr.rel (0) target = $region29
  $region28: #{hierarchical_efficientnet_forward.1} parent=0 // pred_region
    _
  $region29: #{hierarchical_efficientnet_forward.1} parent=0 // pred_fallthru
    _
  // Predicated region
  $region30: #{hierarchical_efficientnet_forward.1} parent=0 // pred_check
    _
  $region31: #{hierarchical_efficientnet_forward.1} parent=0 // pred_check_branch
    %30 = sbr.rel (0) target = $region33
  $region32: #{hierarchical_efficientnet_forward.1} parent=0 // pred_region
    _
  $region33: #{hierarchical_efficientnet_forward.1} parent=0 // pred_fallthru
    _
  // Predicated region
  $region34: #{hierarchical_efficientnet_forward.1} parent=0 // pred_check
    _
  $region35: #{hierarchical_efficientnet_forward.1} parent=0 // pred_check_branch
    %32 = sbr.rel (0) target = $region37
  $region36: #{hierarchical_efficientnet_forward.1} parent=0 // pred_region
    _
  $region37: #{hierarchical_efficientnet_forward.1} parent=0 // pred_fallthru
    _
  // Predicated region
  $region38: #{hierarchical_efficientnet_forward.1} parent=0 // pred_check
    _
  $region39: #{hierarchical_efficientnet_forward.1} parent=0 // pred_check_branch
    %34 = sbr.rel (0) target = $region41
  $region40: #{hierarchical_efficientnet_forward.1} parent=0 // pred_region
    _
  $region41: #{hierarchical_efficientnet_forward.1} parent=0 // pred_fallthru
    _
  %v36 = vld [vmem:[%s0] sm:$0xf]
  %v37 = vld [vmem:[%s0 + $0x4] sm:$0xf]
  %v38 = vld [vmem:[%s0 + $0x8] sm:$0xf]
  %v39 = vld [vmem:[%s0 + $0xc] sm:$0xf]
  %v40 = vld [vmem:[%s0 + $0x10] sm:$0xf]
  %v41 = vld [vmem:[%s0 + $0x14] sm:$0xf]
  %v42 = vld [vmem:[%s0 + $0x18] sm:$0xf]
  %v43 = vld [vmem:[%s0 + $0x1c] sm:$0xf]
  %v44 = vld [vmem:[%s0 + $0x20] sm:$0xf]
  %v45 = vld [vmem:[%s0 + $0x24] sm:$0xf]
  %v46 = vld [vmem:[%s0 + $0x28] sm:$0xf]
  %v47 = vld [vmem:[%s0 + $0x2c] sm:$0xf]
  %v48 = vld [vmem:[%s0 + $0x30] sm:$0xf]
  %v49 = vld [vmem:[%s0 + $0x34] sm:$0xf]
  %v50 = vld [vmem:[%s0 + $0x38] sm:$0xf]
  %v51 = vld [vmem:[%s0 + $0x3c] sm:$0xf]
  %v52 = vld [vmem:[%s0 + $0x40] sm:$0xf]
  %v53 = vld [vmem:[%s0 + $0x44] sm:$0xf]
  %v54 = vld [vmem:[%s0 + $0x48] sm:$0xf]
  %v55 = vld [vmem:[%s0 + $0x4c] sm:$0xf]
  %v56 = vld [vmem:[%s0 + $0x50] sm:$0xf]
  %v57 = vld [vmem:[%s0 + $0x54] sm:$0xf]
  %v58 = vld [vmem:[%s0 + $0x58] sm:$0xf]
  %v59 = vld [vmem:[%s0 + $0x5c] sm:$0xf]
  %v60 = vld [vmem:[%s0 + $0x60] sm:$0xf]
  %v61 = vld [vmem:[%s0 + $0x64] sm:$0xf]
  %v62 = vld [vmem:[%s0 + $0x68] sm:$0xf]
  %v63 = vld [vmem:[%s0 + $0x6c] sm:$0xf]
  %v64 = vld [vmem:[%s0 + $0x70] sm:$0xf]
  %v65 = vld [vmem:[%s0 + $0x74] sm:$0xf]
  %v66 = vld [vmem:[%s0 + $0x78] sm:$0xf]
  %v67 = vld [vmem:[%s0 + $0x7c] sm:$0xf]
  %v68 = vld [vmem:[%s0 + $0x80] sm:$0xf]
  %v69 = vld [vmem:[%s0 + $0x84] sm:$0xf]
  %v70 = vld [vmem:[%s0 + $0x88] sm:$0xf]
  %v71 = vld [vmem:[%s0 + $0x8c] sm:$0xf]
  %v72 = vld [vmem:[%s0 + $0x90] sm:$0xf]
  %v73 = vld [vmem:[%s0 + $0x94] sm:$0xf]
  %v74 = vld [vmem:[%s0 + $0x98] sm:$0xf]
  %v75 = vld [vmem:[%s0 + $0x9c] sm:$0xf]
  %v76 = vld [vmem:[%s0 + $0xa0] sm:$0xf]
  %v77 = vld [vmem:[%s0 + $0xa4] sm:$0xf]
  %v78 = vld [vmem:[%s0 + $0xa8] sm:$0xf]
  %v79 = vld [vmem:[%s0 + $0xac] sm:$0xf]
  %v80 = vld [vmem:[%s0 + $0xb0] sm:$0xf]
  %v81 = vld [vmem:[%s0 + $0xb4] sm:$0xf]
  %v82 = vld [vmem:[%s0 + $0xb8] sm:$0xf]
  %v83 = vld [vmem:[%s0 + $0xbc] sm:$0xf]
  %v84 = vld [vmem:[%s0 + $0xc0] sm:$0xf]
  %v85 = vld [vmem:[%s0 + $0xc4] sm:$0xf]
  %v86 = vld [vmem:[%s0 + $0xc8] sm:$0xf]
  %v87 = vld [vmem:[%s0 + $0xcc] sm:$0xf]
  %v88 = vld [vmem:[%s0 + $0xd0] sm:$0xf]
  %v89 = vld [vmem:[%s0 + $0xd4] sm:$0xf]
  %v90 = vld [vmem:[%s0 + $0xd8] sm:$0xf]
  %v91 = vld [vmem:[%s0 + $0xdc] sm:$0xf]
  %v92 = vld [vmem:[%s0 + $0xe0] sm:$0xf]
  %v93 = vld [vmem:[%s0 + $0xe4] sm:$0xf]
  %v94 = vld [vmem:[%s0 + $0xe8] sm:$0xf]
  %v95 = vld [vmem:[%s0 + $0xec] sm:$0xf]
  %v96 = vld [vmem:[%s0 + $0xf0] sm:$0xf]
  %v97 = vld [vmem:[%s0 + $0xf4] sm:$0xf]
  %v98 = vld [vmem:[%s0 + $0xf8] sm:$0xf]
  %v99 = vld [vmem:[%s0 + $0xfc] sm:$0xf]
  %v100 = vld [vmem:[%s0 + $0x100] sm:$0xf]
  %v101 = vld [vmem:[%s0 + $0x104] sm:$0xf]
  %v102 = vld [vmem:[%s0 + $0x108] sm:$0xf]
  %v103 = vld [vmem:[%s0 + $0x10c] sm:$0xf]
  %v104 = vld [vmem:[%s0 + $0x110] sm:$0xf]
  %v105 = vld [vmem:[%s0 + $0x114] sm:$0xf]
  %v106 = vld [vmem:[%s0 + $0x118] sm:$0xf]
  %v107 = vld [vmem:[%s0 + $0x11c] sm:$0xf]
  %v108 = vld [vmem:[%s0 + $0x120] sm:$0xf]
  %v109 = vld [vmem:[%s0 + $0x124] sm:$0xf]
  %v110 = vld [vmem:[%s0 + $0x128] sm:$0xf]
  %v111 = vld [vmem:[%s0 + $0x12c] sm:$0xf]
  %v112 = vld [vmem:[%s0 + $0x130] sm:$0xf]
  %v113 = vld [vmem:[%s0 + $0x134] sm:$0xf]
  %v114 = vld [vmem:[%s0 + $0x138] sm:$0xf]
  %v115 = vld [vmem:[%s0 + $0x13c] sm:$0xf]
  %v116 = vld [vmem:[%s0 + $0x140] sm:$0xf]
  %v117 = vld [vmem:[%s0 + $0x144] sm:$0xf]
  %v118 = vld [vmem:[%s0 + $0x148] sm:$0xf]
  %v119 = vld [vmem:[%s0 + $0x14c] sm:$0xf]
  %v120 = vld [vmem:[%s0 + $0x150] sm:$0xf]
  %v121 = vld [vmem:[%s0 + $0x154] sm:$0xf]
  %v122 = vld [vmem:[%s0 + $0x158] sm:$0xf]
  %v123 = vld [vmem:[%s0 + $0x15c] sm:$0xf]
  %v124 = vld [vmem:[%s0 + $0x160] sm:$0xf]
  %v125 = vld [vmem:[%s0 + $0x164] sm:$0xf]
  %v126 = vld [vmem:[%s0 + $0x168] sm:$0xf]
  %v127 = vld [vmem:[%s0 + $0x16c] sm:$0xf]
  %v128 = vld [vmem:[%s0 + $0x170] sm:$0xf]
  %v129 = vld [vmem:[%s0 + $0x174] sm:$0xf]
  %v130 = vld [vmem:[%s0 + $0x178] sm:$0xf]
  %v131 = vld [vmem:[%s0 + $0x17c] sm:$0xf]
  %v132 = vld [vmem:[%s0 + $0x180] sm:$0xf]
  %v133 = vld [vmem:[%s0 + $0x184] sm:$0xf]
  %v134 = vld [vmem:[%s0 + $0x188] sm:$0xf]
  %v135 = vld [vmem:[%s0 + $0x18c] sm:$0xf]
  %v136 = vld [vmem:[%s0 + $0x190] sm:$0xf]
  %v137 = vld [vmem:[%s0 + $0x194] sm:$0xf]
  %v138 = vld [vmem:[%s0 + $0x198] sm:$0xf]
  %v139 = vld [vmem:[%s0 + $0x19c] sm:$0xf]
  %v140 = vld [vmem:[%s0 + $0x1a0] sm:$0xf]
  %v141 = vld [vmem:[%s0 + $0x1a4] sm:$0xf]
  %v142 = vld [vmem:[%s0 + $0x1a8] sm:$0xf]
  %v143 = vld [vmem:[%s0 + $0x1ac] sm:$0xf]
  %v144 = vld [vmem:[%s0 + $0x1b0] sm:$0xf]
  %v145 = vld [vmem:[%s0 + $0x1b4] sm:$0xf]
  %v146 = vld [vmem:[%s0 + $0x1b8] sm:$0xf]
  %v147 = vld [vmem:[%s0 + $0x1bc] sm:$0xf]
  %v148 = vld [vmem:[%s0 + $0x1c0] sm:$0xf]
  %v149 = vld [vmem:[%s0 + $0x1c4] sm:$0xf]
  %v150 = vld [vmem:[%s0 + $0x1c8] sm:$0xf]
  %v151 = vld [vmem:[%s0 + $0x1cc] sm:$0xf]
  %v152 = vld [vmem:[%s0 + $0x1d0] sm:$0xf]
  %v153 = vld [vmem:[%s0 + $0x1d4] sm:$0xf]
  %v154 = vld [vmem:[%s0 + $0x1d8] sm:$0xf]
  %v155 = vld [vmem:[%s0 + $0x1dc] sm:$0xf]
  %v156 = vld [vmem:[%s0 + $0x1e0] sm:$0xf]
  %v157 = vld [vmem:[%s0 + $0x1e4] sm:$0xf]
  %v158 = vld [vmem:[%s0 + $0x1e8] sm:$0xf]
  %v159 = vld [vmem:[%s0 + $0x1ec] sm:$0xf]
  %v160 = vld [vmem:[%s0 + $0x1f0] sm:$0xf]
  %v161 = vld [vmem:[%s0 + $0x1f4] sm:$0xf]
  %v162 = vld [vmem:[%s0 + $0x1f8] sm:$0xf]
  %v163 = vld [vmem:[%s0 + $0x1fc] sm:$0xf]
  %v164 = vld [vmem:[%s0 + $0x200] sm:$0xf]
  %v165 = vld [vmem:[%s0 + $0x204] sm:$0xf]
  %v166 = vld [vmem:[%s0 + $0x208] sm:$0xf]
  %v167 = vld [vmem:[%s0 + $0x20c] sm:$0xf]
  %v168 = vld [vmem:[%s0 + $0x210] sm:$0xf]
  %v169 = vld [vmem:[%s0 + $0x214] sm:$0xf]
  %v170 = vld [vmem:[%s0 + $0x218] sm:$0xf]
  %v171 = vld [vmem:[%s0 + $0x21c] sm:$0xf]
  %v172 = vld [vmem:[%s0 + $0x220] sm:$0xf]
  %v173 = vld [vmem:[%s0 + $0x224] sm:$0xf]
  %v174 = vld [vmem:[%s0 + $0x228] sm:$0xf]
  %v175 = vld [vmem:[%s0 + $0x22c] sm:$0xf]
  %v176 = vld [vmem:[%s0 + $0x230] sm:$0xf]
  %v177 = vld [vmem:[%s0 + $0x234] sm:$0xf]
  %v178 = vld [vmem:[%s0 + $0x238] sm:$0xf]
  %v179 = vld [vmem:[%s0 + $0x23c] sm:$0xf]
  %v180 = vld [vmem:[%s0 + $0x240] sm:$0xf]
  %v181 = vld [vmem:[%s0 + $0x244] sm:$0xf]
  %v182 = vld [vmem:[%s0 + $0x248] sm:$0xf]
  %v183 = vld [vmem:[%s0 + $0x24c] sm:$0xf]
  %v184 = vld [vmem:[%s0 + $0x250] sm:$0xf]
  %v185 = vld [vmem:[%s0 + $0x254] sm:$0xf]
  %v186 = vld [vmem:[%s0 + $0x258] sm:$0xf]
  %v187 = vld [vmem:[%s0 + $0x25c] sm:$0xf]
  %v188 = vld [vmem:[%s0 + $0x260] sm:$0xf]
  %v189 = vld [vmem:[%s0 + $0x264] sm:$0xf]
  %v190 = vld [vmem:[%s0 + $0x268] sm:$0xf]
  %v191 = vld [vmem:[%s0 + $0x26c] sm:$0xf]
  %v192 = vld [vmem:[%s0 + $0x270] sm:$0xf]
  %v193 = vld [vmem:[%s0 + $0x274] sm:$0xf]
  %v194 = vld [vmem:[%s0 + $0x278] sm:$0xf]
  %v195 = vld [vmem:[%s0 + $0x27c] sm:$0xf]
  %v196 = vld [vmem:[%s0 + $0x280] sm:$0xf]
  %v197 = vld [vmem:[%s0 + $0x284] sm:$0xf]
  %v198 = vld [vmem:[%s0 + $0x288] sm:$0xf]
  %v199 = vld [vmem:[%s0 + $0x28c] sm:$0xf]
  %v200 = vld [vmem:[%s0 + $0x290] sm:$0xf]
  %v201 = vld [vmem:[%s0 + $0x294] sm:$0xf]
  %v202 = vld [vmem:[%s0 + $0x298] sm:$0xf]
  %v203 = vld [vmem:[%s0 + $0x29c] sm:$0xf]
  %v204 = vld [vmem:[%s0 + $0x2a0] sm:$0xf]
  %v205 = vld [vmem:[%s0 + $0x2a4] sm:$0xf]
  %v206 = vld [vmem:[%s0 + $0x2a8] sm:$0xf]
  %v207 = vld [vmem:[%s0 + $0x2ac] sm:$0xf]
  %v208 = vld [vmem:[%s0 + $0x2b0] sm:$0xf]
  %v209 = vld [vmem:[%s0 + $0x2b4] sm:$0xf]
  %v210 = vld [vmem:[%s0 + $0x2b8] sm:$0xf]
  %v211 = vld [vmem:[%s0 + $0x2bc] sm:$0xf]
  %v212 = vld [vmem:[%s0 + $0x2c0] sm:$0xf]
  %v213 = vld [vmem:[%s0 + $0x2c4] sm:$0xf]
  %v214 = vld [vmem:[%s0 + $0x2c8] sm:$0xf]
  %v215 = vld [vmem:[%s0 + $0x2cc] sm:$0xf]
  %v216 = vld [vmem:[%s0 + $0x2d0] sm:$0xf]
  %v217 = vld [vmem:[%s0 + $0x2d4] sm:$0xf]
  %v218 = vld [vmem:[%s0 + $0x2d8] sm:$0xf]
  %v219 = vld [vmem:[%s0 + $0x2dc] sm:$0xf]
  %v220 = vld [vmem:[%s0 + $0x2e0] sm:$0xf]
  %v221 = vld [vmem:[%s0 + $0x2e4] sm:$0xf]
  %v222 = vld [vmem:[%s0 + $0x2e8] sm:$0xf]
  %v223 = vld [vmem:[%s0 + $0x2ec] sm:$0xf]
  %v224 = vld [vmem:[%s0 + $0x2f0] sm:$0xf]
  %v225 = vld [vmem:[%s0 + $0x2f4] sm:$0xf]
  %v226 = vld [vmem:[%s0 + $0x2f8] sm:$0xf]
  %v227 = vld [vmem:[%s0 + $0x2fc] sm:$0xf]
  %v228 = vld [vmem:[%s0 + $0x300] sm:$0xf]
  %v229 = vld [vmem:[%s0 + $0x304] sm:$0xf]
  %v230 = vld [vmem:[%s0 + $0x308] sm:$0xf]
  %v231 = vld [vmem:[%s0 + $0x30c] sm:$0xf]
  %v232 = vld [vmem:[%s0 + $0x310] sm:$0xf]
  %v233 = vld [vmem:[%s0 + $0x314] sm:$0xf]
  %v234 = vld [vmem:[%s0 + $0x318] sm:$0xf]
  %v235 = vld [vmem:[%s0 + $0x31c] sm:$0xf]
  %v236 = vld [vmem:[%s0 + $0x320] sm:$0xf]
  %v237 = vld [vmem:[%s0 + $0x324] sm:$0xf]
  %v238 = vld [vmem:[%s0 + $0x328] sm:$0xf]
  %v239 = vld [vmem:[%s0 + $0x32c] sm:$0xf]
  %v240 = vld [vmem:[%s0 + $0x330] sm:$0xf]
  %v241 = vld [vmem:[%s0 + $0x334] sm:$0xf]
  %v242 = vld [vmem:[%s0 + $0x338] sm:$0xf]
  %v243 = vld [vmem:[%s0 + $0x33c] sm:$0xf]
  %v244 = vld [vmem:[%s0 + $0x340] sm:$0xf]
  %v245 = vld [vmem:[%s0 + $0x344] sm:$0xf]
  %v246 = vld [vmem:[%s0 + $0x348] sm:$0xf]
  %v247 = vld [vmem:[%s0 + $0x34c] sm:$0xf]
  %v248 = vld [vmem:[%s0 + $0x350] sm:$0xf]
  %v249 = vld [vmem:[%s0 + $0x354] sm:$0xf]
  %v250 = vld [vmem:[%s0 + $0x358] sm:$0xf]
  %v251 = vld [vmem:[%s0 + $0x35c] sm:$0xf]
  %v252 = vld [vmem:[%s0 + $0x360] sm:$0xf]
  %v253 = vld [vmem:[%s0 + $0x364] sm:$0xf]
  %v254 = vld [vmem:[%s0 + $0x368] sm:$0xf]
  %v255 = vld [vmem:[%s0 + $0x36c] sm:$0xf]
  %v256 = vld [vmem:[%s0 + $0x370] sm:$0xf]
  %v257 = vld [vmem:[%s0 + $0x374] sm:$0xf]
  %v258 = vld [vmem:[%s0 + $0x378] sm:$0xf]
  %v259 = vld [vmem:[%s0 + $0x37c] sm:$0xf]
  %v260 = vld [vmem:[%s0 + $0x380] sm:$0xf]
  %v261 = vld [vmem:[%s0 + $0x384] sm:$0xf]
  %v262 = vld [vmem:[%s0 + $0x388] sm:$0xf]
  %v263 = vld [vmem:[%s0 + $0x38c] sm:$0xf]
  %v264 = vld [vmem:[%s0 + $0x390] sm:$0xf]
  %v265 = vld [vmem:[%s0 + $0x394] sm:$0xf]
  %v266 = vld [vmem:[%s0 + $0x398] sm:$0xf]
  %v267 = vld [vmem:[%s0 + $0x39c] sm:$0xf]
  %v268 = vld [vmem:[%s0 + $0x3a0] sm:$0xf]
  %v269 = vld [vmem:[%s0 + $0x3a4] sm:$0xf]
  %v270 = vld [vmem:[%s0 + $0x3a8] sm:$0xf]
  %v271 = vld [vmem:[%s0 + $0x3ac] sm:$0xf]
  %v272 = vld [vmem:[%s0 + $0x3b0] sm:$0xf]
  %v273 = vld [vmem:[%s0 + $0x3b4] sm:$0xf]
  %v274 = vld [vmem:[%s0 + $0x3b8] sm:$0xf]
  %v275 = vld [vmem:[%s0 + $0x3bc] sm:$0xf]
  %v276 = vld [vmem:[%s0 + $0x3c0] sm:$0xf]
  %v277 = vld [vmem:[%s0 + $0x3c4] sm:$0xf]
  %v278 = vld [vmem:[%s0 + $0x3c8] sm:$0xf]
  %v279 = vld [vmem:[%s0 + $0x3cc] sm:$0xf]
  %v280 = vld [vmem:[%s0 + $0x3d0] sm:$0xf]
  %v281 = vld [vmem:[%s0 + $0x3d4] sm:$0xf]
  %v282 = vld [vmem:[%s0 + $0x3d8] sm:$0xf]
  %v283 = vld [vmem:[%s0 + $0x3dc] sm:$0xf]
  %v284 = vld [vmem:[%s0 + $0x3e0] sm:$0xf]
  %v285 = vld [vmem:[%s0 + $0x3e4] sm:$0xf]
  %v286 = vld [vmem:[%s0 + $0x3e8] sm:$0xf]
  %v287 = vld [vmem:[%s0 + $0x3ec] sm:$0xf]
  %v288 = vld [vmem:[%s0 + $0x3f0] sm:$0xf]
  %v289 = vld [vmem:[%s0 + $0x3f4] sm:$0xf]
  %v290 = vld [vmem:[%s0 + $0x3f8] sm:$0xf]
  %v291 = vld [vmem:[%s0 + $0x3fc] sm:$0xf]
  %v292 = vld [vmem:[%s1] sm:$0xf]
  %v293 = vld [vmem:[%s1 + $0x4] sm:$0xf]
  %v294 = vld [vmem:[%s1 + $0x8] sm:$0xf]
  %v295 = vld [vmem:[%s1 + $0xc] sm:$0x3]
  %v296 = vld [vmem:[%s2] sm:$0x1]
  %v298 = vlaneseq
  %v299 = vshrl.u32 %v298, 7
  %v300 = vsub.s32 0, %v299
  %v301 = vrot.slane %v296, %v300
  %v559 = vunpack.c.l.b16 %v36
  %v560 = vunpack.c.l.b16 %v37
  %v561 = vunpack.c.l.b16 %v38
  %v562 = vunpack.c.l.b16 %v39
  %v563 = vunpack.c.l.b16 %v40
  %v564 = vunpack.c.l.b16 %v41
  %v565 = vunpack.c.l.b16 %v42
  %v566 = vunpack.c.l.b16 %v43
  %v567 = vunpack.c.l.b16 %v44
  %v568 = vunpack.c.l.b16 %v45
  %v569 = vunpack.c.l.b16 %v46
  %v570 = vunpack.c.l.b16 %v47
  %v571 = vunpack.c.l.b16 %v48
  %v572 = vunpack.c.l.b16 %v49
  %v573 = vunpack.c.l.b16 %v50
  %v574 = vunpack.c.l.b16 %v51
  %v575 = vunpack.c.l.b16 %v52
  %v576 = vunpack.c.l.b16 %v53
  %v577 = vunpack.c.l.b16 %v54
  %v578 = vunpack.c.l.b16 %v55
  %v579 = vunpack.c.l.b16 %v56
  %v580 = vunpack.c.l.b16 %v57
  %v581 = vunpack.c.l.b16 %v58
  %v582 = vunpack.c.l.b16 %v59
  %v583 = vunpack.c.l.b16 %v60
  %v584 = vunpack.c.l.b16 %v61
  %v585 = vunpack.c.l.b16 %v62
  %v586 = vunpack.c.l.b16 %v63
  %v587 = vunpack.c.l.b16 %v64
  %v588 = vunpack.c.l.b16 %v65
  %v589 = vunpack.c.l.b16 %v66
  %v590 = vunpack.c.l.b16 %v67
  %v591 = vunpack.c.l.b16 %v68
  %v592 = vunpack.c.l.b16 %v69
  %v593 = vunpack.c.l.b16 %v70
  %v594 = vunpack.c.l.b16 %v71
  %v595 = vunpack.c.l.b16 %v72
  %v596 = vunpack.c.l.b16 %v73
  %v597 = vunpack.c.l.b16 %v74
  %v598 = vunpack.c.l.b16 %v75
  %v599 = vunpack.c.l.b16 %v76
  %v600 = vunpack.c.l.b16 %v77
  %v601 = vunpack.c.l.b16 %v78
  %v602 = vunpack.c.l.b16 %v79
  %v603 = vunpack.c.l.b16 %v80
  %v604 = vunpack.c.l.b16 %v81
  %v605 = vunpack.c.l.b16 %v82
  %v606 = vunpack.c.l.b16 %v83
  %v607 = vunpack.c.l.b16 %v84
  %v608 = vunpack.c.l.b16 %v85
  %v609 = vunpack.c.l.b16 %v86
  %v610 = vunpack.c.l.b16 %v87
  %v611 = vunpack.c.l.b16 %v88
  %v612 = vunpack.c.l.b16 %v89
  %v613 = vunpack.c.l.b16 %v90
  %v614 = vunpack.c.l.b16 %v91
  %v615 = vunpack.c.l.b16 %v92
  %v616 = vunpack.c.l.b16 %v93
  %v617 = vunpack.c.l.b16 %v94
  %v618 = vunpack.c.l.b16 %v95
  %v619 = vunpack.c.l.b16 %v96
  %v620 = vunpack.c.l.b16 %v97
  %v621 = vunpack.c.l.b16 %v98
  %v622 = vunpack.c.l.b16 %v99
  %v623 = vunpack.c.l.b16 %v100
  %v624 = vunpack.c.l.b16 %v101
  %v625 = vunpack.c.l.b16 %v102
  %v626 = vunpack.c.l.b16 %v103
  %v627 = vunpack.c.l.b16 %v104
  %v628 = vunpack.c.l.b16 %v105
  %v629 = vunpack.c.l.b16 %v106
  %v630 = vunpack.c.l.b16 %v107
  %v631 = vunpack.c.l.b16 %v108
  %v632 = vunpack.c.l.b16 %v109
  %v633 = vunpack.c.l.b16 %v110
  %v634 = vunpack.c.l.b16 %v111
  %v635 = vunpack.c.l.b16 %v112
  %v636 = vunpack.c.l.b16 %v113
  %v637 = vunpack.c.l.b16 %v114
  %v638 = vunpack.c.l.b16 %v115
  %v639 = vunpack.c.l.b16 %v116
  %v640 = vunpack.c.l.b16 %v117
  %v641 = vunpack.c.l.b16 %v118
  %v642 = vunpack.c.l.b16 %v119
  %v643 = vunpack.c.l.b16 %v120
  %v644 = vunpack.c.l.b16 %v121
  %v645 = vunpack.c.l.b16 %v122
  %v646 = vunpack.c.l.b16 %v123
  %v647 = vunpack.c.l.b16 %v124
  %v648 = vunpack.c.l.b16 %v125
  %v649 = vunpack.c.l.b16 %v126
  %v650 = vunpack.c.l.b16 %v127
  %v651 = vunpack.c.l.b16 %v128
  %v652 = vunpack.c.l.b16 %v129
  %v653 = vunpack.c.l.b16 %v130
  %v654 = vunpack.c.l.b16 %v131
  %v655 = vunpack.c.l.b16 %v132
  %v656 = vunpack.c.l.b16 %v133
  %v657 = vunpack.c.l.b16 %v134
  %v658 = vunpack.c.l.b16 %v135
  %v659 = vunpack.c.l.b16 %v136
  %v660 = vunpack.c.l.b16 %v137
  %v661 = vunpack.c.l.b16 %v138
  %v662 = vunpack.c.l.b16 %v139
  %v663 = vunpack.c.l.b16 %v140
  %v664 = vunpack.c.l.b16 %v141
  %v665 = vunpack.c.l.b16 %v142
  %v666 = vunpack.c.l.b16 %v143
  %v667 = vunpack.c.l.b16 %v144
  %v668 = vunpack.c.l.b16 %v145
  %v669 = vunpack.c.l.b16 %v146
  %v670 = vunpack.c.l.b16 %v147
  %v671 = vunpack.c.l.b16 %v148
  %v672 = vunpack.c.l.b16 %v149
  %v673 = vunpack.c.l.b16 %v150
  %v674 = vunpack.c.l.b16 %v151
  %v675 = vunpack.c.l.b16 %v152
  %v676 = vunpack.c.l.b16 %v153
  %v677 = vunpack.c.l.b16 %v154
  %v678 = vunpack.c.l.b16 %v155
  %v679 = vunpack.c.l.b16 %v156
  %v680 = vunpack.c.l.b16 %v157
  %v681 = vunpack.c.l.b16 %v158
  %v682 = vunpack.c.l.b16 %v159
  %v683 = vunpack.c.l.b16 %v160
  %v684 = vunpack.c.l.b16 %v161
  %v685 = vunpack.c.l.b16 %v162
  %v686 = vunpack.c.l.b16 %v163
  %v687 = vunpack.c.l.b16 %v164
  %v688 = vunpack.c.l.b16 %v165
  %v689 = vunpack.c.l.b16 %v166
  %v690 = vunpack.c.l.b16 %v167
  %v691 = vunpack.c.l.b16 %v168
  %v692 = vunpack.c.l.b16 %v169
  %v693 = vunpack.c.l.b16 %v170
  %v694 = vunpack.c.l.b16 %v171
  %v695 = vunpack.c.l.b16 %v172
  %v696 = vunpack.c.l.b16 %v173
  %v697 = vunpack.c.l.b16 %v174
  %v698 = vunpack.c.l.b16 %v175
  %v699 = vunpack.c.l.b16 %v176
  %v700 = vunpack.c.l.b16 %v177
  %v701 = vunpack.c.l.b16 %v178
  %v702 = vunpack.c.l.b16 %v179
  %v703 = vunpack.c.l.b16 %v180
  %v704 = vunpack.c.l.b16 %v181
  %v705 = vunpack.c.l.b16 %v182
  %v706 = vunpack.c.l.b16 %v183
  %v707 = vunpack.c.l.b16 %v184
  %v708 = vunpack.c.l.b16 %v185
  %v709 = vunpack.c.l.b16 %v186
  %v710 = vunpack.c.l.b16 %v187
  %v711 = vunpack.c.l.b16 %v188
  %v712 = vunpack.c.l.b16 %v189
  %v713 = vunpack.c.l.b16 %v190
  %v714 = vunpack.c.l.b16 %v191
  %v715 = vunpack.c.l.b16 %v192
  %v716 = vunpack.c.l.b16 %v193
  %v717 = vunpack.c.l.b16 %v194
  %v718 = vunpack.c.l.b16 %v195
  %v719 = vunpack.c.l.b16 %v196
  %v720 = vunpack.c.l.b16 %v197
  %v721 = vunpack.c.l.b16 %v198
  %v722 = vunpack.c.l.b16 %v199
  %v723 = vunpack.c.l.b16 %v200
  %v724 = vunpack.c.l.b16 %v201
  %v725 = vunpack.c.l.b16 %v202
  %v726 = vunpack.c.l.b16 %v203
  %v727 = vunpack.c.l.b16 %v204
  %v728 = vunpack.c.l.b16 %v205
  %v729 = vunpack.c.l.b16 %v206
  %v730 = vunpack.c.l.b16 %v207
  %v731 = vunpack.c.l.b16 %v208
  %v732 = vunpack.c.l.b16 %v209
  %v733 = vunpack.c.l.b16 %v210
  %v734 = vunpack.c.l.b16 %v211
  %v735 = vunpack.c.l.b16 %v212
  %v736 = vunpack.c.l.b16 %v213
  %v737 = vunpack.c.l.b16 %v214
  %v738 = vunpack.c.l.b16 %v215
  %v739 = vunpack.c.l.b16 %v216
  %v740 = vunpack.c.l.b16 %v217
  %v741 = vunpack.c.l.b16 %v218
  %v742 = vunpack.c.l.b16 %v219
  %v743 = vunpack.c.l.b16 %v220
  %v744 = vunpack.c.l.b16 %v221
  %v745 = vunpack.c.l.b16 %v222
  %v746 = vunpack.c.l.b16 %v223
  %v747 = vunpack.c.l.b16 %v224
  %v748 = vunpack.c.l.b16 %v225
  %v749 = vunpack.c.l.b16 %v226
  %v750 = vunpack.c.l.b16 %v227
  %v751 = vunpack.c.l.b16 %v228
  %v752 = vunpack.c.l.b16 %v229
  %v753 = vunpack.c.l.b16 %v230
  %v754 = vunpack.c.l.b16 %v231
  %v755 = vunpack.c.l.b16 %v232
  %v756 = vunpack.c.l.b16 %v233
  %v757 = vunpack.c.l.b16 %v234
  %v758 = vunpack.c.l.b16 %v235
  %v759 = vunpack.c.l.b16 %v236
  %v760 = vunpack.c.l.b16 %v237
  %v761 = vunpack.c.l.b16 %v238
  %v762 = vunpack.c.l.b16 %v239
  %v763 = vunpack.c.l.b16 %v240
  %v764 = vunpack.c.l.b16 %v241
  %v765 = vunpack.c.l.b16 %v242
  %v766 = vunpack.c.l.b16 %v243
  %v767 = vunpack.c.l.b16 %v244
  %v768 = vunpack.c.l.b16 %v245
  %v769 = vunpack.c.l.b16 %v246
  %v770 = vunpack.c.l.b16 %v247
  %v771 = vunpack.c.l.b16 %v248
  %v772 = vunpack.c.l.b16 %v249
  %v773 = vunpack.c.l.b16 %v250
  %v774 = vunpack.c.l.b16 %v251
  %v775 = vunpack.c.l.b16 %v252
  %v776 = vunpack.c.l.b16 %v253
  %v777 = vunpack.c.l.b16 %v254
  %v778 = vunpack.c.l.b16 %v255
  %v779 = vunpack.c.l.b16 %v256
  %v780 = vunpack.c.l.b16 %v257
  %v781 = vunpack.c.l.b16 %v258
  %v782 = vunpack.c.l.b16 %v259
  %v783 = vunpack.c.l.b16 %v260
  %v784 = vunpack.c.l.b16 %v261
  %v785 = vunpack.c.l.b16 %v262
  %v786 = vunpack.c.l.b16 %v263
  %v787 = vunpack.c.l.b16 %v264
  %v788 = vunpack.c.l.b16 %v265
  %v789 = vunpack.c.l.b16 %v266
  %v790 = vunpack.c.l.b16 %v267
  %v791 = vunpack.c.l.b16 %v268
  %v792 = vunpack.c.l.b16 %v269
  %v793 = vunpack.c.l.b16 %v270
  %v794 = vunpack.c.l.b16 %v271
  %v795 = vunpack.c.l.b16 %v272
  %v796 = vunpack.c.l.b16 %v273
  %v797 = vunpack.c.l.b16 %v274
  %v798 = vunpack.c.l.b16 %v275
  %v799 = vunpack.c.l.b16 %v276
  %v800 = vunpack.c.l.b16 %v277
  %v801 = vunpack.c.l.b16 %v278
  %v802 = vunpack.c.l.b16 %v279
  %v803 = vunpack.c.l.b16 %v280
  %v804 = vunpack.c.l.b16 %v281
  %v805 = vunpack.c.l.b16 %v282
  %v806 = vunpack.c.l.b16 %v283
  %v807 = vunpack.c.l.b16 %v284
  %v808 = vunpack.c.l.b16 %v285
  %v809 = vunpack.c.l.b16 %v286
  %v810 = vunpack.c.l.b16 %v287
  %v811 = vunpack.c.l.b16 %v288
  %v812 = vunpack.c.l.b16 %v289
  %v813 = vunpack.c.l.b16 %v290
  %v814 = vunpack.c.l.b16 %v291
  %v815 = vpack.c.b16 %v560, %v559
  %v816 = vpack.c.b16 %v562, %v561
  %v817 = vpack.c.b16 %v564, %v563
  %v818 = vpack.c.b16 %v566, %v565
  %v819 = vpack.c.b16 %v568, %v567
  %v820 = vpack.c.b16 %v570, %v569
  %v821 = vpack.c.b16 %v572, %v571
  %v822 = vpack.c.b16 %v574, %v573
  %v823 = vpack.c.b16 %v576, %v575
  %v824 = vpack.c.b16 %v578, %v577
  %v825 = vpack.c.b16 %v580, %v579
  %v826 = vpack.c.b16 %v582, %v581
  %v827 = vpack.c.b16 %v584, %v583
  %v828 = vpack.c.b16 %v586, %v585
  %v829 = vpack.c.b16 %v588, %v587
  %v830 = vpack.c.b16 %v590, %v589
  %v831 = vpack.c.b16 %v592, %v591
  %v832 = vpack.c.b16 %v594, %v593
  %v833 = vpack.c.b16 %v596, %v595
  %v834 = vpack.c.b16 %v598, %v597
  %v835 = vpack.c.b16 %v600, %v599
  %v836 = vpack.c.b16 %v602, %v601
  %v837 = vpack.c.b16 %v604, %v603
  %v838 = vpack.c.b16 %v606, %v605
  %v839 = vpack.c.b16 %v608, %v607
  %v840 = vpack.c.b16 %v610, %v609
  %v841 = vpack.c.b16 %v612, %v611
  %v842 = vpack.c.b16 %v614, %v613
  %v843 = vpack.c.b16 %v616, %v615
  %v844 = vpack.c.b16 %v618, %v617
  %v845 = vpack.c.b16 %v620, %v619
  %v846 = vpack.c.b16 %v622, %v621
  %v847 = vpack.c.b16 %v624, %v623
  %v848 = vpack.c.b16 %v626, %v625
  %v849 = vpack.c.b16 %v628, %v627
  %v850 = vpack.c.b16 %v630, %v629
  %v851 = vpack.c.b16 %v632, %v631
  %v852 = vpack.c.b16 %v634, %v633
  %v853 = vpack.c.b16 %v636, %v635
  %v854 = vpack.c.b16 %v638, %v637
  %v855 = vpack.c.b16 %v640, %v639
  %v856 = vpack.c.b16 %v642, %v641
  %v857 = vpack.c.b16 %v644, %v643
  %v858 = vpack.c.b16 %v646, %v645
  %v859 = vpack.c.b16 %v648, %v647
  %v860 = vpack.c.b16 %v650, %v649
  %v861 = vpack.c.b16 %v652, %v651
  %v862 = vpack.c.b16 %v654, %v653
  %v863 = vpack.c.b16 %v656, %v655
  %v864 = vpack.c.b16 %v658, %v657
  %v865 = vpack.c.b16 %v660, %v659
  %v866 = vpack.c.b16 %v662, %v661
  %v867 = vpack.c.b16 %v664, %v663
  %v868 = vpack.c.b16 %v666, %v665
  %v869 = vpack.c.b16 %v668, %v667
  %v870 = vpack.c.b16 %v670, %v669
  %v871 = vpack.c.b16 %v672, %v671
  %v872 = vpack.c.b16 %v674, %v673
  %v873 = vpack.c.b16 %v676, %v675
  %v874 = vpack.c.b16 %v678, %v677
  %v875 = vpack.c.b16 %v680, %v679
  %v876 = vpack.c.b16 %v682, %v681
  %v877 = vpack.c.b16 %v684, %v683
  %v878 = vpack.c.b16 %v686, %v685
  %v879 = vpack.c.b16 %v688, %v687
  %v880 = vpack.c.b16 %v690, %v689
  %v881 = vpack.c.b16 %v692, %v691
  %v882 = vpack.c.b16 %v694, %v693
  %v883 = vpack.c.b16 %v696, %v695
  %v884 = vpack.c.b16 %v698, %v697
  %v885 = vpack.c.b16 %v700, %v699
  %v886 = vpack.c.b16 %v702, %v701
  %v887 = vpack.c.b16 %v704, %v703
  %v888 = vpack.c.b16 %v706, %v705
  %v889 = vpack.c.b16 %v708, %v707
  %v890 = vpack.c.b16 %v710, %v709
  %v891 = vpack.c.b16 %v712, %v711
  %v892 = vpack.c.b16 %v714, %v713
  %v893 = vpack.c.b16 %v716, %v715
  %v894 = vpack.c.b16 %v718, %v717
  %v895 = vpack.c.b16 %v720, %v719
  %v896 = vpack.c.b16 %v722, %v721
  %v897 = vpack.c.b16 %v724, %v723
  %v898 = vpack.c.b16 %v726, %v725
  %v899 = vpack.c.b16 %v728, %v727
  %v900 = vpack.c.b16 %v730, %v729
  %v901 = vpack.c.b16 %v732, %v731
  %v902 = vpack.c.b16 %v734, %v733
  %v903 = vpack.c.b16 %v736, %v735
  %v904 = vpack.c.b16 %v738, %v737
  %v905 = vpack.c.b16 %v740, %v739
  %v906 = vpack.c.b16 %v742, %v741
  %v907 = vpack.c.b16 %v744, %v743
  %v908 = vpack.c.b16 %v746, %v745
  %v909 = vpack.c.b16 %v748, %v747
  %v910 = vpack.c.b16 %v750, %v749
  %v911 = vpack.c.b16 %v752, %v751
  %v912 = vpack.c.b16 %v754, %v753
  %v913 = vpack.c.b16 %v756, %v755
  %v914 = vpack.c.b16 %v758, %v757
  %v915 = vpack.c.b16 %v760, %v759
  %v916 = vpack.c.b16 %v762, %v761
  %v917 = vpack.c.b16 %v764, %v763
  %v918 = vpack.c.b16 %v766, %v765
  %v919 = vpack.c.b16 %v768, %v767
  %v920 = vpack.c.b16 %v770, %v769
  %v921 = vpack.c.b16 %v772, %v771
  %v922 = vpack.c.b16 %v774, %v773
  %v923 = vpack.c.b16 %v776, %v775
  %v924 = vpack.c.b16 %v778, %v777
  %v925 = vpack.c.b16 %v780, %v779
  %v926 = vpack.c.b16 %v782, %v781
  %v927 = vpack.c.b16 %v784, %v783
  %v928 = vpack.c.b16 %v786, %v785
  %v929 = vpack.c.b16 %v788, %v787
  %v930 = vpack.c.b16 %v790, %v789
  %v931 = vpack.c.b16 %v792, %v791
  %v932 = vpack.c.b16 %v794, %v793
  %v933 = vpack.c.b16 %v796, %v795
  %v934 = vpack.c.b16 %v798, %v797
  %v935 = vpack.c.b16 %v800, %v799
  %v936 = vpack.c.b16 %v802, %v801
  %v937 = vpack.c.b16 %v804, %v803
  %v938 = vpack.c.b16 %v806, %v805
  %v939 = vpack.c.b16 %v808, %v807
  %v940 = vpack.c.b16 %v810, %v809
  %v941 = vpack.c.b16 %v812, %v811
  %v942 = vpack.c.b16 %v814, %v813
  %v947 = vunpack.c.l.b16 %v292
  %v948 = vunpack.c.l.b16 %v293
  %v949 = vunpack.c.l.b16 %v294
  %v950 = vunpack.c.l.b16 %v295
  %v951 = vpack.c.b16 %v948, %v947
  %v952 = vpack.c.b16 %v950, %v949
  %vm954 = vcmask 220160
  %v956 = vsel %vm954, %v815, 0
  %v959 = vsel %vm954, %v816, 0
  %v962 = vsel %vm954, %v817, 0
  %v965 = vsel %vm954, %v818, 0
  %v968 = vsel %vm954, %v819, 0
  %v971 = vsel %vm954, %v820, 0
  %v974 = vsel %vm954, %v821, 0
  %v977 = vsel %vm954, %v822, 0
  %v980 = vsel %vm954, %v823, 0
  %v983 = vsel %vm954, %v824, 0
  %v986 = vsel %vm954, %v825, 0
  %v989 = vsel %vm954, %v826, 0
  %v992 = vsel %vm954, %v827, 0
  %v995 = vsel %vm954, %v828, 0
  %v998 = vsel %vm954, %v829, 0
  %v1001 = vsel %vm954, %v830, 0
  %v1004 = vsel %vm954, %v831, 0
  %v1007 = vsel %vm954, %v832, 0
  %v1010 = vsel %vm954, %v833, 0
  %v1013 = vsel %vm954, %v834, 0
  %v1016 = vsel %vm954, %v835, 0
  %v1019 = vsel %vm954, %v836, 0
  %v1022 = vsel %vm954, %v837, 0
  %v1025 = vsel %vm954, %v838, 0
  %v1028 = vsel %vm954, %v839, 0
  %v1031 = vsel %vm954, %v840, 0
  %v1034 = vsel %vm954, %v841, 0
  %v1037 = vsel %vm954, %v842, 0
  %v1040 = vsel %vm954, %v843, 0
  %v1043 = vsel %vm954, %v844, 0
  %v1046 = vsel %vm954, %v845, 0
  %v1049 = vsel %vm954, %v846, 0
  %v1052 = vsel %vm954, %v847, 0
  %v1055 = vsel %vm954, %v848, 0
  %v1058 = vsel %vm954, %v849, 0
  %v1061 = vsel %vm954, %v850, 0
  %v1064 = vsel %vm954, %v851, 0
  %v1067 = vsel %vm954, %v852, 0
  %v1070 = vsel %vm954, %v853, 0
  %v1073 = vsel %vm954, %v854, 0
  %v1076 = vsel %vm954, %v855, 0
  %v1079 = vsel %vm954, %v856, 0
  %v1082 = vsel %vm954, %v857, 0
  %v1085 = vsel %vm954, %v858, 0
  %v1088 = vsel %vm954, %v859, 0
  %v1091 = vsel %vm954, %v860, 0
  %v1094 = vsel %vm954, %v861, 0
  %v1097 = vsel %vm954, %v862, 0
  %v1100 = vsel %vm954, %v863, 0
  %v1103 = vsel %vm954, %v864, 0
  %v1106 = vsel %vm954, %v865, 0
  %v1109 = vsel %vm954, %v866, 0
  %v1112 = vsel %vm954, %v867, 0
  %v1115 = vsel %vm954, %v868, 0
  %v1118 = vsel %vm954, %v869, 0
  %v1121 = vsel %vm954, %v870, 0
  %v1124 = vsel %vm954, %v871, 0
  %v1127 = vsel %vm954, %v872, 0
  %v1130 = vsel %vm954, %v873, 0
  %v1133 = vsel %vm954, %v874, 0
  %v1136 = vsel %vm954, %v875, 0
  %v1139 = vsel %vm954, %v876, 0
  %v1142 = vsel %vm954, %v877, 0
  %v1145 = vsel %vm954, %v878, 0
  %v1148 = vsel %vm954, %v879, 0
  %v1151 = vsel %vm954, %v880, 0
  %v1154 = vsel %vm954, %v881, 0
  %v1157 = vsel %vm954, %v882, 0
  %v1160 = vsel %vm954, %v883, 0
  %v1163 = vsel %vm954, %v884, 0
  %v1166 = vsel %vm954, %v885, 0
  %v1169 = vsel %vm954, %v886, 0
  %v1172 = vsel %vm954, %v887, 0
  %v1175 = vsel %vm954, %v888, 0
  %v1178 = vsel %vm954, %v889, 0
  %v1181 = vsel %vm954, %v890, 0
  %v1184 = vsel %vm954, %v891, 0
  %v1187 = vsel %vm954, %v892, 0
  %v1190 = vsel %vm954, %v893, 0
  %v1193 = vsel %vm954, %v894, 0
  %v1196 = vsel %vm954, %v895, 0
  %v1199 = vsel %vm954, %v896, 0
  %v1202 = vsel %vm954, %v897, 0
  %v1205 = vsel %vm954, %v898, 0
  %v1208 = vsel %vm954, %v899, 0
  %v1211 = vsel %vm954, %v900, 0
  %v1214 = vsel %vm954, %v901, 0
  %v1217 = vsel %vm954, %v902, 0
  %v1220 = vsel %vm954, %v903, 0
  %v1223 = vsel %vm954, %v904, 0
  %v1226 = vsel %vm954, %v905, 0
  %v1229 = vsel %vm954, %v906, 0
  %v1232 = vsel %vm954, %v907, 0
  %v1235 = vsel %vm954, %v908, 0
  %v1238 = vsel %vm954, %v909, 0
  %v1241 = vsel %vm954, %v910, 0
  %v1244 = vsel %vm954, %v911, 0
  %v1247 = vsel %vm954, %v912, 0
  %v1250 = vsel %vm954, %v913, 0
  %v1253 = vsel %vm954, %v914, 0
  %v1256 = vsel %vm954, %v915, 0
  %v1259 = vsel %vm954, %v916, 0
  %v1262 = vsel %vm954, %v917, 0
  %v1265 = vsel %vm954, %v918, 0
  %v1268 = vsel %vm954, %v919, 0
  %v1271 = vsel %vm954, %v920, 0
  %v1274 = vsel %vm954, %v921, 0
  %v1277 = vsel %vm954, %v922, 0
  %v1280 = vsel %vm954, %v923, 0
  %v1283 = vsel %vm954, %v924, 0
  %v1286 = vsel %vm954, %v925, 0
  %v1289 = vsel %vm954, %v926, 0
  %v1292 = vsel %vm954, %v927, 0
  %v1295 = vsel %vm954, %v928, 0
  %v1298 = vsel %vm954, %v929, 0
  %v1301 = vsel %vm954, %v930, 0
  %v1304 = vsel %vm954, %v931, 0
  %v1307 = vsel %vm954, %v932, 0
  %v1310 = vsel %vm954, %v933, 0
  %v1313 = vsel %vm954, %v934, 0
  %v1316 = vsel %vm954, %v935, 0
  %v1319 = vsel %vm954, %v936, 0
  %v1322 = vsel %vm954, %v937, 0
  %v1325 = vsel %vm954, %v938, 0
  %v1328 = vsel %vm954, %v939, 0
  %v1331 = vsel %vm954, %v940, 0
  %v1334 = vsel %vm954, %v941, 0
  %v1337 = vsel %vm954, %v942, 0
  %vm1339 = vcmask 1044480
  %vm1340 = vcmask 1045504
  %v1341 = vsel %vm1339, 4294967295, 65535
  %v1342 = vsel %vm1340, %v1341, 0
  %v1344 = vand.u32 %v952, %v1342
  %1346 = vmatprep.subr.bf16.mxu0 0
  %1347 = vmatpush1.bf16.msra.mxu0 %v951
  %1348 = vmatprep.subr.bf16.mxu0 0
  %1349 = vmatpush1.bf16.msra.mxu0 %v1344
  %1350 = vmatprep.subr.bf16.mxu0 0
  %1351 = vmatpush1.bf16.msra.mxu0 0
  %1352 = vmatprep.subr.bf16.mxu0 0
  %1353 = vmatpush1.bf16.msra.mxu0 0
  %1354 = vmatprep.subr.bf16.mxu0 0
  %1355 = vmatpush1.bf16.msra.mxu0 0
  %1356 = vmatprep.subr.bf16.mxu0 0
  %1357 = vmatpush1.bf16.msra.mxu0 0
  %1358 = vmatprep.subr.bf16.mxu0 0
  %1359 = vmatpush1.bf16.msra.mxu0 0
  %1360 = vmatprep.subr.bf16.mxu0 0
  %1361 = vmatpush1.bf16.msra.mxu0 0
  %1362 = vmatprep.subr.bf16.mxu0 0
  %1363 = vmatpush1.bf16.msra.mxu0 0
  %1364 = vmatprep.subr.bf16.mxu0 0
  %1365 = vmatpush1.bf16.msra.mxu0 0
  %1366 = vmatprep.subr.bf16.mxu0 0
  %1367 = vmatpush1.bf16.msra.mxu0 0
  %1368 = vmatprep.subr.bf16.mxu0 0
  %1369 = vmatpush1.bf16.msra.mxu0 0
  %1370 = vmatprep.subr.bf16.mxu0 0
  %1371 = vmatpush1.bf16.msra.mxu0 0
  %1372 = vmatprep.subr.bf16.mxu0 0
  %1373 = vmatpush1.bf16.msra.mxu0 0
  %1374 = vmatprep.subr.bf16.mxu0 0
  %1375 = vmatpush1.bf16.msra.mxu0 0
  %1376 = vmatprep.subr.bf16.mxu0 0
  %1377 = vmatpush1.bf16.msra.mxu0 0
  %1378 = vmatprep.mubr.bf16.mxu0 0
  %1379 = vmatmul.mubr.bf16.gmra.mrb[0].mxu0 %v956
  %v1380 = vpop.f32.mrb[0].mxu0
  %v1381 = vadd.f32 %v301, %v1380
  %v1382 = vpop.f32.mrb[0].mxu0
  %v1383 = vpop.f32.mrb[0].mxu0
  %v1384 = vadd.f32 %v301, %v1383
  %v1385 = vpop.f32.mrb[0].mxu0
  %1386 = vmatprep.mubr.bf16.mxu0 0
  %1387 = vmatmul.mubr.bf16.gmra.mrb[0].mxu0 %v959
  %v1388 = vpop.f32.mrb[0].mxu0
  %v1389 = vadd.f32 %v301, %v1388
  %v1390 = vpop.f32.mrb[0].mxu0
  %v1391 = vpop.f32.mrb[0].mxu0
  %v1392 = vadd.f32 %v301, %v1391
  %v1393 = vpop.f32.mrb[0].mxu0
  %1394 = vmatprep.mubr.bf16.mxu0 0
  %1395 = vmatmul.mubr.bf16.gmra.mrb[0].mxu0 %v962
  %v1396 = vpop.f32.mrb[0].mxu0
  %v1397 = vadd.f32 %v301, %v1396
  %v1398 = vpop.f32.mrb[0].mxu0
  %v1399 = vpop.f32.mrb[0].mxu0
  %v1400 = vadd.f32 %v301, %v1399
  %v1401 = vpop.f32.mrb[0].mxu0
  %1402 = vmatprep.mubr.bf16.mxu0 0
  %1403 = vmatmul.mubr.bf16.gmra.mrb[0].mxu0 %v965
  %v1404 = vpop.f32.mrb[0].mxu0
  %v1405 = vadd.f32 %v301, %v1404
  %v1406 = vpop.f32.mrb[0].mxu0
  %v1407 = vpop.f32.mrb[0].mxu0
  %v1408 = vadd.f32 %v301, %v1407
  %v1409 = vpop.f32.mrb[0].mxu0
  %1410 = vmatprep.mubr.bf16.mxu0 0
  %1411 = vmatmul.mubr.bf16.gmra.mrb[0].mxu0 %v968
  %v1412 = vpop.f32.mrb[0].mxu0
  %v1413 = vadd.f32 %v301, %v1412
  %v1414 = vpop.f32.mrb[0].mxu0
  %v1415 = vpop.f32.mrb[0].mxu0
  %v1416 = vadd.f32 %v301, %v1415
  %v1417 = vpop.f32.mrb[0].mxu0
  %1418 = vmatprep.mubr.bf16.mxu0 0
  %1419 = vmatmul.mubr.bf16.gmra.mrb[0].mxu0 %v971
  %v1420 = vpop.f32.mrb[0].mxu0
  %v1421 = vadd.f32 %v301, %v1420
  %v1422 = vpop.f32.mrb[0].mxu0
  %v1423 = vpop.f32.mrb[0].mxu0
  %v1424 = vadd.f32 %v301, %v1423
  %v1425 = vpop.f32.mrb[0].mxu0
  %1426 = vmatprep.mubr.bf16.mxu0 0
  %1427 = vmatmul.mubr.bf16.gmra.mrb[0].mxu0 %v974
  %v1428 = vpop.f32.mrb[0].mxu0
  %v1429 = vadd.f32 %v301, %v1428
  %v1430 = vpop.f32.mrb[0].mxu0
  %v1431 = vpop.f32.mrb[0].mxu0
  %v1432 = vadd.f32 %v301, %v1431
  %v1433 = vpop.f32.mrb[0].mxu0
  %1434 = vmatprep.mubr.bf16.mxu0 0
  %1435 = vmatmul.mubr.bf16.gmra.mrb[0].mxu0 %v977
  %v1436 = vpop.f32.mrb[0].mxu0
  %v1437 = vadd.f32 %v301, %v1436
  %v1438 = vpop.f32.mrb[0].mxu0
  %v1439 = vpop.f32.mrb[0].mxu0
  %v1440 = vadd.f32 %v301, %v1439
  %v1441 = vpop.f32.mrb[0].mxu0
  %1442 = vmatprep.mubr.bf16.mxu0 0
  %1443 = vmatmul.mubr.bf16.gmra.mrb[0].mxu0 %v980
  %v1444 = vpop.f32.mrb[0].mxu0
  %v1445 = vadd.f32 %v301, %v1444
  %v1446 = vpop.f32.mrb[0].mxu0
  %v1447 = vpop.f32.mrb[0].mxu0
  %v1448 = vadd.f32 %v301, %v1447
  %v1449 = vpop.f32.mrb[0].mxu0
  %1450 = vmatprep.mubr.bf16.mxu0 0
  %1451 = vmatmul.mubr.bf16.gmra.mrb[0].mxu0 %v983
  %v1452 = vpop.f32.mrb[0].mxu0
  %v1453 = vadd.f32 %v301, %v1452
  %v1454 = vpop.f32.mrb[0].mxu0
  %v1455 = vpop.f32.mrb[0].mxu0
  %v1456 = vadd.f32 %v301, %v1455
  %v1457 = vpop.f32.mrb[0].mxu0
  %1458 = vmatprep.mubr.bf16.mxu0 0
  %1459 = vmatmul.mubr.bf16.gmra.mrb[0].mxu0 %v986
  %v1460 = vpop.f32.mrb[0].mxu0
  %v1461 = vadd.f32 %v301, %v1460
  %v1462 = vpop.f32.mrb[0].mxu0
  %v1463 = vpop.f32.mrb[0].mxu0
  %v1464 = vadd.f32 %v301, %v1463
  %v1465 = vpop.f32.mrb[0].mxu0
  %1466 = vmatprep.mubr.bf16.mxu0 0
  %1467 = vmatmul.mubr.bf16.gmra.mrb[0].mxu0 %v989
  %v1468 = vpop.f32.mrb[0].mxu0
  %v1469 = vadd.f32 %v301, %v1468
  %v1470 = vpop.f32.mrb[0].mxu0
  %v1471 = vpop.f32.mrb[0].mxu0
  %v1472 = vadd.f32 %v301, %v1471
  %v1473 = vpop.f32.mrb[0].mxu0
  %1474 = vmatprep.mubr.bf16.mxu0 0
  %1475 = vmatmul.mubr.bf16.gmra.mrb[0].mxu0 %v992
  %v1476 = vpop.f32.mrb[0].mxu0
  %v1477 = vadd.f32 %v301, %v1476
  %v1478 = vpop.f32.mrb[0].mxu0
  %v1479 = vpop.f32.mrb[0].mxu0
  %v1480 = vadd.f32 %v301, %v1479
  %v1481 = vpop.f32.mrb[0].mxu0
  %1482 = vmatprep.mubr.bf16.mxu0 0
  %1483 = vmatmul.mubr.bf16.gmra.mrb[0].mxu0 %v995
  %v1484 = vpop.f32.mrb[0].mxu0
  %v1485 = vadd.f32 %v301, %v1484
  %v1486 = vpop.f32.mrb[0].mxu0
  %v1487 = vpop.f32.mrb[0].mxu0
  %v1488 = vadd.f32 %v301, %v1487
  %v1489 = vpop.f32.mrb[0].mxu0
  %1490 = vmatprep.mubr.bf16.mxu0 0
  %1491 = vmatmul.mubr.bf16.gmra.mrb[0].mxu0 %v998
  %v1492 = vpop.f32.mrb[0].mxu0
  %v1493 = vadd.f32 %v301, %v1492
  %v1494 = vpop.f32.mrb[0].mxu0
  %v1495 = vpop.f32.mrb[0].mxu0
  %v1496 = vadd.f32 %v301, %v1495
  %v1497 = vpop.f32.mrb[0].mxu0
  %1498 = vmatprep.mubr.bf16.mxu0 0
  %1499 = vmatmul.mubr.bf16.gmra.mrb[0].mxu0 %v1001
  %v1500 = vpop.f32.mrb[0].mxu0
  %v1501 = vadd.f32 %v301, %v1500
  %v1502 = vpop.f32.mrb[0].mxu0
  %v1503 = vpop.f32.mrb[0].mxu0
  %v1504 = vadd.f32 %v301, %v1503
  %v1505 = vpop.f32.mrb[0].mxu0
  %1506 = vmatprep.mubr.bf16.mxu0 0
  %1507 = vmatmul.mubr.bf16.gmra.mrb[0].mxu0 %v1004
  %v1508 = vpop.f32.mrb[0].mxu0
  %v1509 = vadd.f32 %v301, %v1508
  %v1510 = vpop.f32.mrb[0].mxu0
  %v1511 = vpop.f32.mrb[0].mxu0
  %v1512 = vadd.f32 %v301, %v1511
  %v1513 = vpop.f32.mrb[0].mxu0
  %1514 = vmatprep.mubr.bf16.mxu0 0
  %1515 = vmatmul.mubr.bf16.gmra.mrb[0].mxu0 %v1007
  %v1516 = vpop.f32.mrb[0].mxu0
  %v1517 = vadd.f32 %v301, %v1516
  %v1518 = vpop.f32.mrb[0].mxu0
  %v1519 = vpop.f32.mrb[0].mxu0
  %v1520 = vadd.f32 %v301, %v1519
  %v1521 = vpop.f32.mrb[0].mxu0
  %1522 = vmatprep.mubr.bf16.mxu0 0
  %1523 = vmatmul.mubr.bf16.gmra.mrb[0].mxu0 %v1010
  %v1524 = vpop.f32.mrb[0].mxu0
  %v1525 = vadd.f32 %v301, %v1524
  %v1526 = vpop.f32.mrb[0].mxu0
  %v1527 = vpop.f32.mrb[0].mxu0
  %v1528 = vadd.f32 %v301, %v1527
  %v1529 = vpop.f32.mrb[0].mxu0
  %1530 = vmatprep.mubr.bf16.mxu0 0
  %1531 = vmatmul.mubr.bf16.gmra.mrb[0].mxu0 %v1013
  %v1532 = vpop.f32.mrb[0].mxu0
  %v1533 = vadd.f32 %v301, %v1532
  %v1534 = vpop.f32.mrb[0].mxu0
  %v1535 = vpop.f32.mrb[0].mxu0
  %v1536 = vadd.f32 %v301, %v1535
  %v1537 = vpop.f32.mrb[0].mxu0
  %1538 = vmatprep.mubr.bf16.mxu0 0
  %1539 = vmatmul.mubr.bf16.gmra.mrb[0].mxu0 %v1016
  %v1540 = vpop.f32.mrb[0].mxu0
  %v1541 = vadd.f32 %v301, %v1540
  %v1542 = vpop.f32.mrb[0].mxu0
  %v1543 = vpop.f32.mrb[0].mxu0
  %v1544 = vadd.f32 %v301, %v1543
  %v1545 = vpop.f32.mrb[0].mxu0
  %1546 = vmatprep.mubr.bf16.mxu0 0
  %1547 = vmatmul.mubr.bf16.gmra.mrb[0].mxu0 %v1019
  %v1548 = vpop.f32.mrb[0].mxu0
  %v1549 = vadd.f32 %v301, %v1548
  %v1550 = vpop.f32.mrb[0].mxu0
  %v1551 = vpop.f32.mrb[0].mxu0
  %v1552 = vadd.f32 %v301, %v1551
  %v1553 = vpop.f32.mrb[0].mxu0
  %1554 = vmatprep.mubr.bf16.mxu0 0
  %1555 = vmatmul.mubr.bf16.gmra.mrb[0].mxu0 %v1022
  %v1556 = vpop.f32.mrb[0].mxu0
  %v1557 = vadd.f32 %v301, %v1556
  %v1558 = vpop.f32.mrb[0].mxu0
  %v1559 = vpop.f32.mrb[0].mxu0
  %v1560 = vadd.f32 %v301, %v1559
  %v1561 = vpop.f32.mrb[0].mxu0
  %1562 = vmatprep.mubr.bf16.mxu0 0
  %1563 = vmatmul.mubr.bf16.gmra.mrb[0].mxu0 %v1025
  %v1564 = vpop.f32.mrb[0].mxu0
  %v1565 = vadd.f32 %v301, %v1564
  %v1566 = vpop.f32.mrb[0].mxu0
  %v1567 = vpop.f32.mrb[0].mxu0
  %v1568 = vadd.f32 %v301, %v1567
  %v1569 = vpop.f32.mrb[0].mxu0
  %1570 = vmatprep.mubr.bf16.mxu0 0
  %1571 = vmatmul.mubr.bf16.gmra.mrb[0].mxu0 %v1028
  %v1572 = vpop.f32.mrb[0].mxu0
  %v1573 = vadd.f32 %v301, %v1572
  %v1574 = vpop.f32.mrb[0].mxu0
  %v1575 = vpop.f32.mrb[0].mxu0
  %v1576 = vadd.f32 %v301, %v1575
  %v1577 = vpop.f32.mrb[0].mxu0
  %1578 = vmatprep.mubr.bf16.mxu0 0
  %1579 = vmatmul.mubr.bf16.gmra.mrb[0].mxu0 %v1031
  %v1580 = vpop.f32.mrb[0].mxu0
  %v1581 = vadd.f32 %v301, %v1580
  %v1582 = vpop.f32.mrb[0].mxu0
  %v1583 = vpop.f32.mrb[0].mxu0
  %v1584 = vadd.f32 %v301, %v1583
  %v1585 = vpop.f32.mrb[0].mxu0
  %1586 = vmatprep.mubr.bf16.mxu0 0
  %1587 = vmatmul.mubr.bf16.gmra.mrb[0].mxu0 %v1034
  %v1588 = vpop.f32.mrb[0].mxu0
  %v1589 = vadd.f32 %v301, %v1588
  %v1590 = vpop.f32.mrb[0].mxu0
  %v1591 = vpop.f32.mrb[0].mxu0
  %v1592 = vadd.f32 %v301, %v1591
  %v1593 = vpop.f32.mrb[0].mxu0
  %1594 = vmatprep.mubr.bf16.mxu0 0
  %1595 = vmatmul.mubr.bf16.gmra.mrb[0].mxu0 %v1037
  %v1596 = vpop.f32.mrb[0].mxu0
  %v1597 = vadd.f32 %v301, %v1596
  %v1598 = vpop.f32.mrb[0].mxu0
  %v1599 = vpop.f32.mrb[0].mxu0
  %v1600 = vadd.f32 %v301, %v1599
  %v1601 = vpop.f32.mrb[0].mxu0
  %1602 = vmatprep.mubr.bf16.mxu0 0
  %1603 = vmatmul.mubr.bf16.gmra.mrb[0].mxu0 %v1040
  %v1604 = vpop.f32.mrb[0].mxu0
  %v1605 = vadd.f32 %v301, %v1604
  %v1606 = vpop.f32.mrb[0].mxu0
  %v1607 = vpop.f32.mrb[0].mxu0
  %v1608 = vadd.f32 %v301, %v1607
  %v1609 = vpop.f32.mrb[0].mxu0
  %1610 = vmatprep.mubr.bf16.mxu0 0
  %1611 = vmatmul.mubr.bf16.gmra.mrb[0].mxu0 %v1043
  %v1612 = vpop.f32.mrb[0].mxu0
  %v1613 = vadd.f32 %v301, %v1612
  %v1614 = vpop.f32.mrb[0].mxu0
  %v1615 = vpop.f32.mrb[0].mxu0
  %v1616 = vadd.f32 %v301, %v1615
  %v1617 = vpop.f32.mrb[0].mxu0
  %1618 = vmatprep.mubr.bf16.mxu0 0
  %1619 = vmatmul.mubr.bf16.gmra.mrb[0].mxu0 %v1046
  %v1620 = vpop.f32.mrb[0].mxu0
  %v1621 = vadd.f32 %v301, %v1620
  %v1622 = vpop.f32.mrb[0].mxu0
  %v1623 = vpop.f32.mrb[0].mxu0
  %v1624 = vadd.f32 %v301, %v1623
  %v1625 = vpop.f32.mrb[0].mxu0
  %1626 = vmatprep.mubr.bf16.mxu0 0
  %1627 = vmatmul.mubr.bf16.gmra.mrb[0].mxu0 %v1049
  %v1628 = vpop.f32.mrb[0].mxu0
  %v1629 = vadd.f32 %v301, %v1628
  %v1630 = vpop.f32.mrb[0].mxu0
  %v1631 = vpop.f32.mrb[0].mxu0
  %v1632 = vadd.f32 %v301, %v1631
  %v1633 = vpop.f32.mrb[0].mxu0
  %1634 = vmatprep.mubr.bf16.mxu0 0
  %1635 = vmatmul.mubr.bf16.gmra.mrb[0].mxu0 %v1052
  %v1636 = vpop.f32.mrb[0].mxu0
  %v1637 = vadd.f32 %v301, %v1636
  %v1638 = vpop.f32.mrb[0].mxu0
  %v1639 = vpop.f32.mrb[0].mxu0
  %v1640 = vadd.f32 %v301, %v1639
  %v1641 = vpop.f32.mrb[0].mxu0
  %1642 = vmatprep.mubr.bf16.mxu0 0
  %1643 = vmatmul.mubr.bf16.gmra.mrb[0].mxu0 %v1055
  %v1644 = vpop.f32.mrb[0].mxu0
  %v1645 = vadd.f32 %v301, %v1644
  %v1646 = vpop.f32.mrb[0].mxu0
  %v1647 = vpop.f32.mrb[0].mxu0
  %v1648 = vadd.f32 %v301, %v1647
  %v1649 = vpop.f32.mrb[0].mxu0
  %1650 = vmatprep.mubr.bf16.mxu0 0
  %1651 = vmatmul.mubr.bf16.gmra.mrb[0].mxu0 %v1058
  %v1652 = vpop.f32.mrb[0].mxu0
  %v1653 = vadd.f32 %v301, %v1652
  %v1654 = vpop.f32.mrb[0].mxu0
  %v1655 = vpop.f32.mrb[0].mxu0
  %v1656 = vadd.f32 %v301, %v1655
  %v1657 = vpop.f32.mrb[0].mxu0
  %1658 = vmatprep.mubr.bf16.mxu0 0
  %1659 = vmatmul.mubr.bf16.gmra.mrb[0].mxu0 %v1061
  %v1660 = vpop.f32.mrb[0].mxu0
  %v1661 = vadd.f32 %v301, %v1660
  %v1662 = vpop.f32.mrb[0].mxu0
  %v1663 = vpop.f32.mrb[0].mxu0
  %v1664 = vadd.f32 %v301, %v1663
  %v1665 = vpop.f32.mrb[0].mxu0
  %1666 = vmatprep.mubr.bf16.mxu0 0
  %1667 = vmatmul.mubr.bf16.gmra.mrb[0].mxu0 %v1064
  %v1668 = vpop.f32.mrb[0].mxu0
  %v1669 = vadd.f32 %v301, %v1668
  %v1670 = vpop.f32.mrb[0].mxu0
  %v1671 = vpop.f32.mrb[0].mxu0
  %v1672 = vadd.f32 %v301, %v1671
  %v1673 = vpop.f32.mrb[0].mxu0
  %1674 = vmatprep.mubr.bf16.mxu0 0
  %1675 = vmatmul.mubr.bf16.gmra.mrb[0].mxu0 %v1067
  %v1676 = vpop.f32.mrb[0].mxu0
  %v1677 = vadd.f32 %v301, %v1676
  %v1678 = vpop.f32.mrb[0].mxu0
  %v1679 = vpop.f32.mrb[0].mxu0
  %v1680 = vadd.f32 %v301, %v1679
  %v1681 = vpop.f32.mrb[0].mxu0
  %1682 = vmatprep.mubr.bf16.mxu0 0
  %1683 = vmatmul.mubr.bf16.gmra.mrb[0].mxu0 %v1070
  %v1684 = vpop.f32.mrb[0].mxu0
  %v1685 = vadd.f32 %v301, %v1684
  %v1686 = vpop.f32.mrb[0].mxu0
  %v1687 = vpop.f32.mrb[0].mxu0
  %v1688 = vadd.f32 %v301, %v1687
  %v1689 = vpop.f32.mrb[0].mxu0
  %1690 = vmatprep.mubr.bf16.mxu0 0
  %1691 = vmatmul.mubr.bf16.gmra.mrb[0].mxu0 %v1073
  %v1692 = vpop.f32.mrb[0].mxu0
  %v1693 = vadd.f32 %v301, %v1692
  %v1694 = vpop.f32.mrb[0].mxu0
  %v1695 = vpop.f32.mrb[0].mxu0
  %v1696 = vadd.f32 %v301, %v1695
  %v1697 = vpop.f32.mrb[0].mxu0
  %1698 = vmatprep.mubr.bf16.mxu0 0
  %1699 = vmatmul.mubr.bf16.gmra.mrb[0].mxu0 %v1076
  %v1700 = vpop.f32.mrb[0].mxu0
  %v1701 = vadd.f32 %v301, %v1700
  %v1702 = vpop.f32.mrb[0].mxu0
  %v1703 = vpop.f32.mrb[0].mxu0
  %v1704 = vadd.f32 %v301, %v1703
  %v1705 = vpop.f32.mrb[0].mxu0
  %1706 = vmatprep.mubr.bf16.mxu0 0
  %1707 = vmatmul.mubr.bf16.gmra.mrb[0].mxu0 %v1079
  %v1708 = vpop.f32.mrb[0].mxu0
  %v1709 = vadd.f32 %v301, %v1708
  %v1710 = vpop.f32.mrb[0].mxu0
  %v1711 = vpop.f32.mrb[0].mxu0
  %v1712 = vadd.f32 %v301, %v1711
  %v1713 = vpop.f32.mrb[0].mxu0
  %1714 = vmatprep.mubr.bf16.mxu0 0
  %1715 = vmatmul.mubr.bf16.gmra.mrb[0].mxu0 %v1082
  %v1716 = vpop.f32.mrb[0].mxu0
  %v1717 = vadd.f32 %v301, %v1716
  %v1718 = vpop.f32.mrb[0].mxu0
  %v1719 = vpop.f32.mrb[0].mxu0
  %v1720 = vadd.f32 %v301, %v1719
  %v1721 = vpop.f32.mrb[0].mxu0
  %1722 = vmatprep.mubr.bf16.mxu0 0
  %1723 = vmatmul.mubr.bf16.gmra.mrb[0].mxu0 %v1085
  %v1724 = vpop.f32.mrb[0].mxu0
  %v1725 = vadd.f32 %v301, %v1724
  %v1726 = vpop.f32.mrb[0].mxu0
  %v1727 = vpop.f32.mrb[0].mxu0
  %v1728 = vadd.f32 %v301, %v1727
  %v1729 = vpop.f32.mrb[0].mxu0
  %1730 = vmatprep.mubr.bf16.mxu0 0
  %1731 = vmatmul.mubr.bf16.gmra.mrb[0].mxu0 %v1088
  %v1732 = vpop.f32.mrb[0].mxu0
  %v1733 = vadd.f32 %v301, %v1732
  %v1734 = vpop.f32.mrb[0].mxu0
  %v1735 = vpop.f32.mrb[0].mxu0
  %v1736 = vadd.f32 %v301, %v1735
  %v1737 = vpop.f32.mrb[0].mxu0
  %1738 = vmatprep.mubr.bf16.mxu0 0
  %1739 = vmatmul.mubr.bf16.gmra.mrb[0].mxu0 %v1091
  %v1740 = vpop.f32.mrb[0].mxu0
  %v1741 = vadd.f32 %v301, %v1740
  %v1742 = vpop.f32.mrb[0].mxu0
  %v1743 = vpop.f32.mrb[0].mxu0
  %v1744 = vadd.f32 %v301, %v1743
  %v1745 = vpop.f32.mrb[0].mxu0
  %1746 = vmatprep.mubr.bf16.mxu0 0
  %1747 = vmatmul.mubr.bf16.gmra.mrb[0].mxu0 %v1094
  %v1748 = vpop.f32.mrb[0].mxu0
  %v1749 = vadd.f32 %v301, %v1748
  %v1750 = vpop.f32.mrb[0].mxu0
  %v1751 = vpop.f32.mrb[0].mxu0
  %v1752 = vadd.f32 %v301, %v1751
  %v1753 = vpop.f32.mrb[0].mxu0
  %1754 = vmatprep.mubr.bf16.mxu0 0
  %1755 = vmatmul.mubr.bf16.gmra.mrb[0].mxu0 %v1097
  %v1756 = vpop.f32.mrb[0].mxu0
  %v1757 = vadd.f32 %v301, %v1756
  %v1758 = vpop.f32.mrb[0].mxu0
  %v1759 = vpop.f32.mrb[0].mxu0
  %v1760 = vadd.f32 %v301, %v1759
  %v1761 = vpop.f32.mrb[0].mxu0
  %1762 = vmatprep.mubr.bf16.mxu0 0
  %1763 = vmatmul.mubr.bf16.gmra.mrb[0].mxu0 %v1100
  %v1764 = vpop.f32.mrb[0].mxu0
  %v1765 = vadd.f32 %v301, %v1764
  %v1766 = vpop.f32.mrb[0].mxu0
  %v1767 = vpop.f32.mrb[0].mxu0
  %v1768 = vadd.f32 %v301, %v1767
  %v1769 = vpop.f32.mrb[0].mxu0
  %1770 = vmatprep.mubr.bf16.mxu0 0
  %1771 = vmatmul.mubr.bf16.gmra.mrb[0].mxu0 %v1103
  %v1772 = vpop.f32.mrb[0].mxu0
  %v1773 = vadd.f32 %v301, %v1772
  %v1774 = vpop.f32.mrb[0].mxu0
  %v1775 = vpop.f32.mrb[0].mxu0
  %v1776 = vadd.f32 %v301, %v1775
  %v1777 = vpop.f32.mrb[0].mxu0
  %1778 = vmatprep.mubr.bf16.mxu0 0
  %1779 = vmatmul.mubr.bf16.gmra.mrb[0].mxu0 %v1106
  %v1780 = vpop.f32.mrb[0].mxu0
  %v1781 = vadd.f32 %v301, %v1780
  %v1782 = vpop.f32.mrb[0].mxu0
  %v1783 = vpop.f32.mrb[0].mxu0
  %v1784 = vadd.f32 %v301, %v1783
  %v1785 = vpop.f32.mrb[0].mxu0
  %1786 = vmatprep.mubr.bf16.mxu0 0
  %1787 = vmatmul.mubr.bf16.gmra.mrb[0].mxu0 %v1109
  %v1788 = vpop.f32.mrb[0].mxu0
  %v1789 = vadd.f32 %v301, %v1788
  %v1790 = vpop.f32.mrb[0].mxu0
  %v1791 = vpop.f32.mrb[0].mxu0
  %v1792 = vadd.f32 %v301, %v1791
  %v1793 = vpop.f32.mrb[0].mxu0
  %1794 = vmatprep.mubr.bf16.mxu0 0
  %1795 = vmatmul.mubr.bf16.gmra.mrb[0].mxu0 %v1112
  %v1796 = vpop.f32.mrb[0].mxu0
  %v1797 = vadd.f32 %v301, %v1796
  %v1798 = vpop.f32.mrb[0].mxu0
  %v1799 = vpop.f32.mrb[0].mxu0
  %v1800 = vadd.f32 %v301, %v1799
  %v1801 = vpop.f32.mrb[0].mxu0
  %1802 = vmatprep.mubr.bf16.mxu0 0
  %1803 = vmatmul.mubr.bf16.gmra.mrb[0].mxu0 %v1115
  %v1804 = vpop.f32.mrb[0].mxu0
  %v1805 = vadd.f32 %v301, %v1804
  %v1806 = vpop.f32.mrb[0].mxu0
  %v1807 = vpop.f32.mrb[0].mxu0
  %v1808 = vadd.f32 %v301, %v1807
  %v1809 = vpop.f32.mrb[0].mxu0
  %1810 = vmatprep.mubr.bf16.mxu0 0
  %1811 = vmatmul.mubr.bf16.gmra.mrb[0].mxu0 %v1118
  %v1812 = vpop.f32.mrb[0].mxu0
  %v1813 = vadd.f32 %v301, %v1812
  %v1814 = vpop.f32.mrb[0].mxu0
  %v1815 = vpop.f32.mrb[0].mxu0
  %v1816 = vadd.f32 %v301, %v1815
  %v1817 = vpop.f32.mrb[0].mxu0
  %1818 = vmatprep.mubr.bf16.mxu0 0
  %1819 = vmatmul.mubr.bf16.gmra.mrb[0].mxu0 %v1121
  %v1820 = vpop.f32.mrb[0].mxu0
  %v1821 = vadd.f32 %v301, %v1820
  %v1822 = vpop.f32.mrb[0].mxu0
  %v1823 = vpop.f32.mrb[0].mxu0
  %v1824 = vadd.f32 %v301, %v1823
  %v1825 = vpop.f32.mrb[0].mxu0
  %1826 = vmatprep.mubr.bf16.mxu0 0
  %1827 = vmatmul.mubr.bf16.gmra.mrb[0].mxu0 %v1124
  %v1828 = vpop.f32.mrb[0].mxu0
  %v1829 = vadd.f32 %v301, %v1828
  %v1830 = vpop.f32.mrb[0].mxu0
  %v1831 = vpop.f32.mrb[0].mxu0
  %v1832 = vadd.f32 %v301, %v1831
  %v1833 = vpop.f32.mrb[0].mxu0
  %1834 = vmatprep.mubr.bf16.mxu0 0
  %1835 = vmatmul.mubr.bf16.gmra.mrb[0].mxu0 %v1127
  %v1836 = vpop.f32.mrb[0].mxu0
  %v1837 = vadd.f32 %v301, %v1836
  %v1838 = vpop.f32.mrb[0].mxu0
  %v1839 = vpop.f32.mrb[0].mxu0
  %v1840 = vadd.f32 %v301, %v1839
  %v1841 = vpop.f32.mrb[0].mxu0
  %1842 = vmatprep.mubr.bf16.mxu0 0
  %1843 = vmatmul.mubr.bf16.gmra.mrb[0].mxu0 %v1130
  %v1844 = vpop.f32.mrb[0].mxu0
  %v1845 = vadd.f32 %v301, %v1844
  %v1846 = vpop.f32.mrb[0].mxu0
  %v1847 = vpop.f32.mrb[0].mxu0
  %v1848 = vadd.f32 %v301, %v1847
  %v1849 = vpop.f32.mrb[0].mxu0
  %1850 = vmatprep.mubr.bf16.mxu0 0
  %1851 = vmatmul.mubr.bf16.gmra.mrb[0].mxu0 %v1133
  %v1852 = vpop.f32.mrb[0].mxu0
  %v1853 = vadd.f32 %v301, %v1852
  %v1854 = vpop.f32.mrb[0].mxu0
  %v1855 = vpop.f32.mrb[0].mxu0
  %v1856 = vadd.f32 %v301, %v1855
  %v1857 = vpop.f32.mrb[0].mxu0
  %1858 = vmatprep.mubr.bf16.mxu0 0
  %1859 = vmatmul.mubr.bf16.gmra.mrb[0].mxu0 %v1136
  %v1860 = vpop.f32.mrb[0].mxu0
  %v1861 = vadd.f32 %v301, %v1860
  %v1862 = vpop.f32.mrb[0].mxu0
  %v1863 = vpop.f32.mrb[0].mxu0
  %v1864 = vadd.f32 %v301, %v1863
  %v1865 = vpop.f32.mrb[0].mxu0
  %1866 = vmatprep.mubr.bf16.mxu0 0
  %1867 = vmatmul.mubr.bf16.gmra.mrb[0].mxu0 %v1139
  %v1868 = vpop.f32.mrb[0].mxu0
  %v1869 = vadd.f32 %v301, %v1868
  %v1870 = vpop.f32.mrb[0].mxu0
  %v1871 = vpop.f32.mrb[0].mxu0
  %v1872 = vadd.f32 %v301, %v1871
  %v1873 = vpop.f32.mrb[0].mxu0
  %1874 = vmatprep.mubr.bf16.mxu0 0
  %1875 = vmatmul.mubr.bf16.gmra.mrb[0].mxu0 %v1142
  %v1876 = vpop.f32.mrb[0].mxu0
  %v1877 = vadd.f32 %v301, %v1876
  %v1878 = vpop.f32.mrb[0].mxu0
  %v1879 = vpop.f32.mrb[0].mxu0
  %v1880 = vadd.f32 %v301, %v1879
  %v1881 = vpop.f32.mrb[0].mxu0
  %1882 = vmatprep.mubr.bf16.mxu0 0
  %1883 = vmatmul.mubr.bf16.gmra.mrb[0].mxu0 %v1145
  %v1884 = vpop.f32.mrb[0].mxu0
  %v1885 = vadd.f32 %v301, %v1884
  %v1886 = vpop.f32.mrb[0].mxu0
  %v1887 = vpop.f32.mrb[0].mxu0
  %v1888 = vadd.f32 %v301, %v1887
  %v1889 = vpop.f32.mrb[0].mxu0
  %1890 = vmatprep.mubr.bf16.mxu0 0
  %1891 = vmatmul.mubr.bf16.gmra.mrb[0].mxu0 %v1148
  %v1892 = vpop.f32.mrb[0].mxu0
  %v1893 = vadd.f32 %v301, %v1892
  %v1894 = vpop.f32.mrb[0].mxu0
  %v1895 = vpop.f32.mrb[0].mxu0
  %v1896 = vadd.f32 %v301, %v1895
  %v1897 = vpop.f32.mrb[0].mxu0
  %1898 = vmatprep.mubr.bf16.mxu0 0
  %1899 = vmatmul.mubr.bf16.gmra.mrb[0].mxu0 %v1151
  %v1900 = vpop.f32.mrb[0].mxu0
  %v1901 = vadd.f32 %v301, %v1900
  %v1902 = vpop.f32.mrb[0].mxu0
  %v1903 = vpop.f32.mrb[0].mxu0
  %v1904 = vadd.f32 %v301, %v1903
  %v1905 = vpop.f32.mrb[0].mxu0
  %1906 = vmatprep.mubr.bf16.mxu0 0
  %1907 = vmatmul.mubr.bf16.gmra.mrb[0].mxu0 %v1154
  %v1908 = vpop.f32.mrb[0].mxu0
  %v1909 = vadd.f32 %v301, %v1908
  %v1910 = vpop.f32.mrb[0].mxu0
  %v1911 = vpop.f32.mrb[0].mxu0
  %v1912 = vadd.f32 %v301, %v1911
  %v1913 = vpop.f32.mrb[0].mxu0
  %1914 = vmatprep.mubr.bf16.mxu0 0
  %1915 = vmatmul.mubr.bf16.gmra.mrb[0].mxu0 %v1157
  %v1916 = vpop.f32.mrb[0].mxu0
  %v1917 = vadd.f32 %v301, %v1916
  %v1918 = vpop.f32.mrb[0].mxu0
  %v1919 = vpop.f32.mrb[0].mxu0
  %v1920 = vadd.f32 %v301, %v1919
  %v1921 = vpop.f32.mrb[0].mxu0
  %1922 = vmatprep.mubr.bf16.mxu0 0
  %1923 = vmatmul.mubr.bf16.gmra.mrb[0].mxu0 %v1160
  %v1924 = vpop.f32.mrb[0].mxu0
  %v1925 = vadd.f32 %v301, %v1924
  %v1926 = vpop.f32.mrb[0].mxu0
  %v1927 = vpop.f32.mrb[0].mxu0
  %v1928 = vadd.f32 %v301, %v1927
  %v1929 = vpop.f32.mrb[0].mxu0
  %1930 = vmatprep.mubr.bf16.mxu0 0
  %1931 = vmatmul.mubr.bf16.gmra.mrb[0].mxu0 %v1163
  %v1932 = vpop.f32.mrb[0].mxu0
  %v1933 = vadd.f32 %v301, %v1932
  %v1934 = vpop.f32.mrb[0].mxu0
  %v1935 = vpop.f32.mrb[0].mxu0
  %v1936 = vadd.f32 %v301, %v1935
  %v1937 = vpop.f32.mrb[0].mxu0
  %1938 = vmatprep.mubr.bf16.mxu0 0
  %1939 = vmatmul.mubr.bf16.gmra.mrb[0].mxu0 %v1166
  %v1940 = vpop.f32.mrb[0].mxu0
  %v1941 = vadd.f32 %v301, %v1940
  %v1942 = vpop.f32.mrb[0].mxu0
  %v1943 = vpop.f32.mrb[0].mxu0
  %v1944 = vadd.f32 %v301, %v1943
  %v1945 = vpop.f32.mrb[0].mxu0
  %1946 = vmatprep.mubr.bf16.mxu0 0
  %1947 = vmatmul.mubr.bf16.gmra.mrb[0].mxu0 %v1169
  %v1948 = vpop.f32.mrb[0].mxu0
  %v1949 = vadd.f32 %v301, %v1948
  %v1950 = vpop.f32.mrb[0].mxu0
  %v1951 = vpop.f32.mrb[0].mxu0
  %v1952 = vadd.f32 %v301, %v1951
  %v1953 = vpop.f32.mrb[0].mxu0
  %1954 = vmatprep.mubr.bf16.mxu0 0
  %1955 = vmatmul.mubr.bf16.gmra.mrb[0].mxu0 %v1172
  %v1956 = vpop.f32.mrb[0].mxu0
  %v1957 = vadd.f32 %v301, %v1956
  %v1958 = vpop.f32.mrb[0].mxu0
  %v1959 = vpop.f32.mrb[0].mxu0
  %v1960 = vadd.f32 %v301, %v1959
  %v1961 = vpop.f32.mrb[0].mxu0
  %1962 = vmatprep.mubr.bf16.mxu0 0
  %1963 = vmatmul.mubr.bf16.gmra.mrb[0].mxu0 %v1175
  %v1964 = vpop.f32.mrb[0].mxu0
  %v1965 = vadd.f32 %v301, %v1964
  %v1966 = vpop.f32.mrb[0].mxu0
  %v1967 = vpop.f32.mrb[0].mxu0
  %v1968 = vadd.f32 %v301, %v1967
  %v1969 = vpop.f32.mrb[0].mxu0
  %1970 = vmatprep.mubr.bf16.mxu0 0
  %1971 = vmatmul.mubr.bf16.gmra.mrb[0].mxu0 %v1178
  %v1972 = vpop.f32.mrb[0].mxu0
  %v1973 = vadd.f32 %v301, %v1972
  %v1974 = vpop.f32.mrb[0].mxu0
  %v1975 = vpop.f32.mrb[0].mxu0
  %v1976 = vadd.f32 %v301, %v1975
  %v1977 = vpop.f32.mrb[0].mxu0
  %1978 = vmatprep.mubr.bf16.mxu0 0
  %1979 = vmatmul.mubr.bf16.gmra.mrb[0].mxu0 %v1181
  %v1980 = vpop.f32.mrb[0].mxu0
  %v1981 = vadd.f32 %v301, %v1980
  %v1982 = vpop.f32.mrb[0].mxu0
  %v1983 = vpop.f32.mrb[0].mxu0
  %v1984 = vadd.f32 %v301, %v1983
  %v1985 = vpop.f32.mrb[0].mxu0
  %1986 = vmatprep.mubr.bf16.mxu0 0
  %1987 = vmatmul.mubr.bf16.gmra.mrb[0].mxu0 %v1184
  %v1988 = vpop.f32.mrb[0].mxu0
  %v1989 = vadd.f32 %v301, %v1988
  %v1990 = vpop.f32.mrb[0].mxu0
  %v1991 = vpop.f32.mrb[0].mxu0
  %v1992 = vadd.f32 %v301, %v1991
  %v1993 = vpop.f32.mrb[0].mxu0
  %1994 = vmatprep.mubr.bf16.mxu0 0
  %1995 = vmatmul.mubr.bf16.gmra.mrb[0].mxu0 %v1187
  %v1996 = vpop.f32.mrb[0].mxu0
  %v1997 = vadd.f32 %v301, %v1996
  %v1998 = vpop.f32.mrb[0].mxu0
  %v1999 = vpop.f32.mrb[0].mxu0
  %v2000 = vadd.f32 %v301, %v1999
  %v2001 = vpop.f32.mrb[0].mxu0
  %2002 = vmatprep.mubr.bf16.mxu0 0
  %2003 = vmatmul.mubr.bf16.gmra.mrb[0].mxu0 %v1190
  %v2004 = vpop.f32.mrb[0].mxu0
  %v2005 = vadd.f32 %v301, %v2004
  %v2006 = vpop.f32.mrb[0].mxu0
  %v2007 = vpop.f32.mrb[0].mxu0
  %v2008 = vadd.f32 %v301, %v2007
  %v2009 = vpop.f32.mrb[0].mxu0
  %2010 = vmatprep.mubr.bf16.mxu0 0
  %2011 = vmatmul.mubr.bf16.gmra.mrb[0].mxu0 %v1193
  %v2012 = vpop.f32.mrb[0].mxu0
  %v2013 = vadd.f32 %v301, %v2012
  %v2014 = vpop.f32.mrb[0].mxu0
  %v2015 = vpop.f32.mrb[0].mxu0
  %v2016 = vadd.f32 %v301, %v2015
  %v2017 = vpop.f32.mrb[0].mxu0
  %2018 = vmatprep.mubr.bf16.mxu0 0
  %2019 = vmatmul.mubr.bf16.gmra.mrb[0].mxu0 %v1196
  %v2020 = vpop.f32.mrb[0].mxu0
  %v2021 = vadd.f32 %v301, %v2020
  %v2022 = vpop.f32.mrb[0].mxu0
  %v2023 = vpop.f32.mrb[0].mxu0
  %v2024 = vadd.f32 %v301, %v2023
  %v2025 = vpop.f32.mrb[0].mxu0
  %2026 = vmatprep.mubr.bf16.mxu0 0
  %2027 = vmatmul.mubr.bf16.gmra.mrb[0].mxu0 %v1199
  %v2028 = vpop.f32.mrb[0].mxu0
  %v2029 = vadd.f32 %v301, %v2028
  %v2030 = vpop.f32.mrb[0].mxu0
  %v2031 = vpop.f32.mrb[0].mxu0
  %v2032 = vadd.f32 %v301, %v2031
  %v2033 = vpop.f32.mrb[0].mxu0
  %2034 = vmatprep.mubr.bf16.mxu0 0
  %2035 = vmatmul.mubr.bf16.gmra.mrb[0].mxu0 %v1202
  %v2036 = vpop.f32.mrb[0].mxu0
  %v2037 = vadd.f32 %v301, %v2036
  %v2038 = vpop.f32.mrb[0].mxu0
  %v2039 = vpop.f32.mrb[0].mxu0
  %v2040 = vadd.f32 %v301, %v2039
  %v2041 = vpop.f32.mrb[0].mxu0
  %2042 = vmatprep.mubr.bf16.mxu0 0
  %2043 = vmatmul.mubr.bf16.gmra.mrb[0].mxu0 %v1205
  %v2044 = vpop.f32.mrb[0].mxu0
  %v2045 = vadd.f32 %v301, %v2044
  %v2046 = vpop.f32.mrb[0].mxu0
  %v2047 = vpop.f32.mrb[0].mxu0
  %v2048 = vadd.f32 %v301, %v2047
  %v2049 = vpop.f32.mrb[0].mxu0
  %2050 = vmatprep.mubr.bf16.mxu0 0
  %2051 = vmatmul.mubr.bf16.gmra.mrb[0].mxu0 %v1208
  %v2052 = vpop.f32.mrb[0].mxu0
  %v2053 = vadd.f32 %v301, %v2052
  %v2054 = vpop.f32.mrb[0].mxu0
  %v2055 = vpop.f32.mrb[0].mxu0
  %v2056 = vadd.f32 %v301, %v2055
  %v2057 = vpop.f32.mrb[0].mxu0
  %2058 = vmatprep.mubr.bf16.mxu0 0
  %2059 = vmatmul.mubr.bf16.gmra.mrb[0].mxu0 %v1211
  %v2060 = vpop.f32.mrb[0].mxu0
  %v2061 = vadd.f32 %v301, %v2060
  %v2062 = vpop.f32.mrb[0].mxu0
  %v2063 = vpop.f32.mrb[0].mxu0
  %v2064 = vadd.f32 %v301, %v2063
  %v2065 = vpop.f32.mrb[0].mxu0
  %2066 = vmatprep.mubr.bf16.mxu0 0
  %2067 = vmatmul.mubr.bf16.gmra.mrb[0].mxu0 %v1214
  %v2068 = vpop.f32.mrb[0].mxu0
  %v2069 = vadd.f32 %v301, %v2068
  %v2070 = vpop.f32.mrb[0].mxu0
  %v2071 = vpop.f32.mrb[0].mxu0
  %v2072 = vadd.f32 %v301, %v2071
  %v2073 = vpop.f32.mrb[0].mxu0
  %2074 = vmatprep.mubr.bf16.mxu0 0
  %2075 = vmatmul.mubr.bf16.gmra.mrb[0].mxu0 %v1217
  %v2076 = vpop.f32.mrb[0].mxu0
  %v2077 = vadd.f32 %v301, %v2076
  %v2078 = vpop.f32.mrb[0].mxu0
  %v2079 = vpop.f32.mrb[0].mxu0
  %v2080 = vadd.f32 %v301, %v2079
  %v2081 = vpop.f32.mrb[0].mxu0
  %2082 = vmatprep.mubr.bf16.mxu0 0
  %2083 = vmatmul.mubr.bf16.gmra.mrb[0].mxu0 %v1220
  %v2084 = vpop.f32.mrb[0].mxu0
  %v2085 = vadd.f32 %v301, %v2084
  %v2086 = vpop.f32.mrb[0].mxu0
  %v2087 = vpop.f32.mrb[0].mxu0
  %v2088 = vadd.f32 %v301, %v2087
  %v2089 = vpop.f32.mrb[0].mxu0
  %2090 = vmatprep.mubr.bf16.mxu0 0
  %2091 = vmatmul.mubr.bf16.gmra.mrb[0].mxu0 %v1223
  %v2092 = vpop.f32.mrb[0].mxu0
  %v2093 = vadd.f32 %v301, %v2092
  %v2094 = vpop.f32.mrb[0].mxu0
  %v2095 = vpop.f32.mrb[0].mxu0
  %v2096 = vadd.f32 %v301, %v2095
  %v2097 = vpop.f32.mrb[0].mxu0
  %2098 = vmatprep.mubr.bf16.mxu0 0
  %2099 = vmatmul.mubr.bf16.gmra.mrb[0].mxu0 %v1226
  %v2100 = vpop.f32.mrb[0].mxu0
  %v2101 = vadd.f32 %v301, %v2100
  %v2102 = vpop.f32.mrb[0].mxu0
  %v2103 = vpop.f32.mrb[0].mxu0
  %v2104 = vadd.f32 %v301, %v2103
  %v2105 = vpop.f32.mrb[0].mxu0
  %2106 = vmatprep.mubr.bf16.mxu0 0
  %2107 = vmatmul.mubr.bf16.gmra.mrb[0].mxu0 %v1229
  %v2108 = vpop.f32.mrb[0].mxu0
  %v2109 = vadd.f32 %v301, %v2108
  %v2110 = vpop.f32.mrb[0].mxu0
  %v2111 = vpop.f32.mrb[0].mxu0
  %v2112 = vadd.f32 %v301, %v2111
  %v2113 = vpop.f32.mrb[0].mxu0
  %2114 = vmatprep.mubr.bf16.mxu0 0
  %2115 = vmatmul.mubr.bf16.gmra.mrb[0].mxu0 %v1232
  %v2116 = vpop.f32.mrb[0].mxu0
  %v2117 = vadd.f32 %v301, %v2116
  %v2118 = vpop.f32.mrb[0].mxu0
  %v2119 = vpop.f32.mrb[0].mxu0
  %v2120 = vadd.f32 %v301, %v2119
  %v2121 = vpop.f32.mrb[0].mxu0
  %2122 = vmatprep.mubr.bf16.mxu0 0
  %2123 = vmatmul.mubr.bf16.gmra.mrb[0].mxu0 %v1235
  %v2124 = vpop.f32.mrb[0].mxu0
  %v2125 = vadd.f32 %v301, %v2124
  %v2126 = vpop.f32.mrb[0].mxu0
  %v2127 = vpop.f32.mrb[0].mxu0
  %v2128 = vadd.f32 %v301, %v2127
  %v2129 = vpop.f32.mrb[0].mxu0
  %2130 = vmatprep.mubr.bf16.mxu0 0
  %2131 = vmatmul.mubr.bf16.gmra.mrb[0].mxu0 %v1238
  %v2132 = vpop.f32.mrb[0].mxu0
  %v2133 = vadd.f32 %v301, %v2132
  %v2134 = vpop.f32.mrb[0].mxu0
  %v2135 = vpop.f32.mrb[0].mxu0
  %v2136 = vadd.f32 %v301, %v2135
  %v2137 = vpop.f32.mrb[0].mxu0
  %2138 = vmatprep.mubr.bf16.mxu0 0
  %2139 = vmatmul.mubr.bf16.gmra.mrb[0].mxu0 %v1241
  %v2140 = vpop.f32.mrb[0].mxu0
  %v2141 = vadd.f32 %v301, %v2140
  %v2142 = vpop.f32.mrb[0].mxu0
  %v2143 = vpop.f32.mrb[0].mxu0
  %v2144 = vadd.f32 %v301, %v2143
  %v2145 = vpop.f32.mrb[0].mxu0
  %2146 = vmatprep.mubr.bf16.mxu0 0
  %2147 = vmatmul.mubr.bf16.gmra.mrb[0].mxu0 %v1244
  %v2148 = vpop.f32.mrb[0].mxu0
  %v2149 = vadd.f32 %v301, %v2148
  %v2150 = vpop.f32.mrb[0].mxu0
  %v2151 = vpop.f32.mrb[0].mxu0
  %v2152 = vadd.f32 %v301, %v2151
  %v2153 = vpop.f32.mrb[0].mxu0
  %2154 = vmatprep.mubr.bf16.mxu0 0
  %2155 = vmatmul.mubr.bf16.gmra.mrb[0].mxu0 %v1247
  %v2156 = vpop.f32.mrb[0].mxu0
  %v2157 = vadd.f32 %v301, %v2156
  %v2158 = vpop.f32.mrb[0].mxu0
  %v2159 = vpop.f32.mrb[0].mxu0
  %v2160 = vadd.f32 %v301, %v2159
  %v2161 = vpop.f32.mrb[0].mxu0
  %2162 = vmatprep.mubr.bf16.mxu0 0
  %2163 = vmatmul.mubr.bf16.gmra.mrb[0].mxu0 %v1250
  %v2164 = vpop.f32.mrb[0].mxu0
  %v2165 = vadd.f32 %v301, %v2164
  %v2166 = vpop.f32.mrb[0].mxu0
  %v2167 = vpop.f32.mrb[0].mxu0
  %v2168 = vadd.f32 %v301, %v2167
  %v2169 = vpop.f32.mrb[0].mxu0
  %2170 = vmatprep.mubr.bf16.mxu0 0
  %2171 = vmatmul.mubr.bf16.gmra.mrb[0].mxu0 %v1253
  %v2172 = vpop.f32.mrb[0].mxu0
  %v2173 = vadd.f32 %v301, %v2172
  %v2174 = vpop.f32.mrb[0].mxu0
  %v2175 = vpop.f32.mrb[0].mxu0
  %v2176 = vadd.f32 %v301, %v2175
  %v2177 = vpop.f32.mrb[0].mxu0
  %2178 = vmatprep.mubr.bf16.mxu0 0
  %2179 = vmatmul.mubr.bf16.gmra.mrb[0].mxu0 %v1256
  %v2180 = vpop.f32.mrb[0].mxu0
  %v2181 = vadd.f32 %v301, %v2180
  %v2182 = vpop.f32.mrb[0].mxu0
  %v2183 = vpop.f32.mrb[0].mxu0
  %v2184 = vadd.f32 %v301, %v2183
  %v2185 = vpop.f32.mrb[0].mxu0
  %2186 = vmatprep.mubr.bf16.mxu0 0
  %2187 = vmatmul.mubr.bf16.gmra.mrb[0].mxu0 %v1259
  %v2188 = vpop.f32.mrb[0].mxu0
  %v2189 = vadd.f32 %v301, %v2188
  %v2190 = vpop.f32.mrb[0].mxu0
  %v2191 = vpop.f32.mrb[0].mxu0
  %v2192 = vadd.f32 %v301, %v2191
  %v2193 = vpop.f32.mrb[0].mxu0
  %2194 = vmatprep.mubr.bf16.mxu0 0
  %2195 = vmatmul.mubr.bf16.gmra.mrb[0].mxu0 %v1262
  %v2196 = vpop.f32.mrb[0].mxu0
  %v2197 = vadd.f32 %v301, %v2196
  %v2198 = vpop.f32.mrb[0].mxu0
  %v2199 = vpop.f32.mrb[0].mxu0
  %v2200 = vadd.f32 %v301, %v2199
  %v2201 = vpop.f32.mrb[0].mxu0
  %2202 = vmatprep.mubr.bf16.mxu0 0
  %2203 = vmatmul.mubr.bf16.gmra.mrb[0].mxu0 %v1265
  %v2204 = vpop.f32.mrb[0].mxu0
  %v2205 = vadd.f32 %v301, %v2204
  %v2206 = vpop.f32.mrb[0].mxu0
  %v2207 = vpop.f32.mrb[0].mxu0
  %v2208 = vadd.f32 %v301, %v2207
  %v2209 = vpop.f32.mrb[0].mxu0
  %2210 = vmatprep.mubr.bf16.mxu0 0
  %2211 = vmatmul.mubr.bf16.gmra.mrb[0].mxu0 %v1268
  %v2212 = vpop.f32.mrb[0].mxu0
  %v2213 = vadd.f32 %v301, %v2212
  %v2214 = vpop.f32.mrb[0].mxu0
  %v2215 = vpop.f32.mrb[0].mxu0
  %v2216 = vadd.f32 %v301, %v2215
  %v2217 = vpop.f32.mrb[0].mxu0
  %2218 = vmatprep.mubr.bf16.mxu0 0
  %2219 = vmatmul.mubr.bf16.gmra.mrb[0].mxu0 %v1271
  %v2220 = vpop.f32.mrb[0].mxu0
  %v2221 = vadd.f32 %v301, %v2220
  %v2222 = vpop.f32.mrb[0].mxu0
  %v2223 = vpop.f32.mrb[0].mxu0
  %v2224 = vadd.f32 %v301, %v2223
  %v2225 = vpop.f32.mrb[0].mxu0
  %2226 = vmatprep.mubr.bf16.mxu0 0
  %2227 = vmatmul.mubr.bf16.gmra.mrb[0].mxu0 %v1274
  %v2228 = vpop.f32.mrb[0].mxu0
  %v2229 = vadd.f32 %v301, %v2228
  %v2230 = vpop.f32.mrb[0].mxu0
  %v2231 = vpop.f32.mrb[0].mxu0
  %v2232 = vadd.f32 %v301, %v2231
  %v2233 = vpop.f32.mrb[0].mxu0
  %2234 = vmatprep.mubr.bf16.mxu0 0
  %2235 = vmatmul.mubr.bf16.gmra.mrb[0].mxu0 %v1277
  %v2236 = vpop.f32.mrb[0].mxu0
  %v2237 = vadd.f32 %v301, %v2236
  %v2238 = vpop.f32.mrb[0].mxu0
  %v2239 = vpop.f32.mrb[0].mxu0
  %v2240 = vadd.f32 %v301, %v2239
  %v2241 = vpop.f32.mrb[0].mxu0
  %2242 = vmatprep.mubr.bf16.mxu0 0
  %2243 = vmatmul.mubr.bf16.gmra.mrb[0].mxu0 %v1280
  %v2244 = vpop.f32.mrb[0].mxu0
  %v2245 = vadd.f32 %v301, %v2244
  %v2246 = vpop.f32.mrb[0].mxu0
  %v2247 = vpop.f32.mrb[0].mxu0
  %v2248 = vadd.f32 %v301, %v2247
  %v2249 = vpop.f32.mrb[0].mxu0
  %2250 = vmatprep.mubr.bf16.mxu0 0
  %2251 = vmatmul.mubr.bf16.gmra.mrb[0].mxu0 %v1283
  %v2252 = vpop.f32.mrb[0].mxu0
  %v2253 = vadd.f32 %v301, %v2252
  %v2254 = vpop.f32.mrb[0].mxu0
  %v2255 = vpop.f32.mrb[0].mxu0
  %v2256 = vadd.f32 %v301, %v2255
  %v2257 = vpop.f32.mrb[0].mxu0
  %2258 = vmatprep.mubr.bf16.mxu0 0
  %2259 = vmatmul.mubr.bf16.gmra.mrb[0].mxu0 %v1286
  %v2260 = vpop.f32.mrb[0].mxu0
  %v2261 = vadd.f32 %v301, %v2260
  %v2262 = vpop.f32.mrb[0].mxu0
  %v2263 = vpop.f32.mrb[0].mxu0
  %v2264 = vadd.f32 %v301, %v2263
  %v2265 = vpop.f32.mrb[0].mxu0
  %2266 = vmatprep.mubr.bf16.mxu0 0
  %2267 = vmatmul.mubr.bf16.gmra.mrb[0].mxu0 %v1289
  %v2268 = vpop.f32.mrb[0].mxu0
  %v2269 = vadd.f32 %v301, %v2268
  %v2270 = vpop.f32.mrb[0].mxu0
  %v2271 = vpop.f32.mrb[0].mxu0
  %v2272 = vadd.f32 %v301, %v2271
  %v2273 = vpop.f32.mrb[0].mxu0
  %2274 = vmatprep.mubr.bf16.mxu0 0
  %2275 = vmatmul.mubr.bf16.gmra.mrb[0].mxu0 %v1292
  %v2276 = vpop.f32.mrb[0].mxu0
  %v2277 = vadd.f32 %v301, %v2276
  %v2278 = vpop.f32.mrb[0].mxu0
  %v2279 = vpop.f32.mrb[0].mxu0
  %v2280 = vadd.f32 %v301, %v2279
  %v2281 = vpop.f32.mrb[0].mxu0
  %2282 = vmatprep.mubr.bf16.mxu0 0
  %2283 = vmatmul.mubr.bf16.gmra.mrb[0].mxu0 %v1295
  %v2284 = vpop.f32.mrb[0].mxu0
  %v2285 = vadd.f32 %v301, %v2284
  %v2286 = vpop.f32.mrb[0].mxu0
  %v2287 = vpop.f32.mrb[0].mxu0
  %v2288 = vadd.f32 %v301, %v2287
  %v2289 = vpop.f32.mrb[0].mxu0
  %2290 = vmatprep.mubr.bf16.mxu0 0
  %2291 = vmatmul.mubr.bf16.gmra.mrb[0].mxu0 %v1298
  %v2292 = vpop.f32.mrb[0].mxu0
  %v2293 = vadd.f32 %v301, %v2292
  %v2294 = vpop.f32.mrb[0].mxu0
  %v2295 = vpop.f32.mrb[0].mxu0
  %v2296 = vadd.f32 %v301, %v2295
  %v2297 = vpop.f32.mrb[0].mxu0
  %2298 = vmatprep.mubr.bf16.mxu0 0
  %2299 = vmatmul.mubr.bf16.gmra.mrb[0].mxu0 %v1301
  %v2300 = vpop.f32.mrb[0].mxu0
  %v2301 = vadd.f32 %v301, %v2300
  %v2302 = vpop.f32.mrb[0].mxu0
  %v2303 = vpop.f32.mrb[0].mxu0
  %v2304 = vadd.f32 %v301, %v2303
  %v2305 = vpop.f32.mrb[0].mxu0
  %2306 = vmatprep.mubr.bf16.mxu0 0
  %2307 = vmatmul.mubr.bf16.gmra.mrb[0].mxu0 %v1304
  %v2308 = vpop.f32.mrb[0].mxu0
  %v2309 = vadd.f32 %v301, %v2308
  %v2310 = vpop.f32.mrb[0].mxu0
  %v2311 = vpop.f32.mrb[0].mxu0
  %v2312 = vadd.f32 %v301, %v2311
  %v2313 = vpop.f32.mrb[0].mxu0
  %2314 = vmatprep.mubr.bf16.mxu0 0
  %2315 = vmatmul.mubr.bf16.gmra.mrb[0].mxu0 %v1307
  %v2316 = vpop.f32.mrb[0].mxu0
  %v2317 = vadd.f32 %v301, %v2316
  %v2318 = vpop.f32.mrb[0].mxu0
  %v2319 = vpop.f32.mrb[0].mxu0
  %v2320 = vadd.f32 %v301, %v2319
  %v2321 = vpop.f32.mrb[0].mxu0
  %2322 = vmatprep.mubr.bf16.mxu0 0
  %2323 = vmatmul.mubr.bf16.gmra.mrb[0].mxu0 %v1310
  %v2324 = vpop.f32.mrb[0].mxu0
  %v2325 = vadd.f32 %v301, %v2324
  %v2326 = vpop.f32.mrb[0].mxu0
  %v2327 = vpop.f32.mrb[0].mxu0
  %v2328 = vadd.f32 %v301, %v2327
  %v2329 = vpop.f32.mrb[0].mxu0
  %2330 = vmatprep.mubr.bf16.mxu0 0
  %2331 = vmatmul.mubr.bf16.gmra.mrb[0].mxu0 %v1313
  %v2332 = vpop.f32.mrb[0].mxu0
  %v2333 = vadd.f32 %v301, %v2332
  %v2334 = vpop.f32.mrb[0].mxu0
  %v2335 = vpop.f32.mrb[0].mxu0
  %v2336 = vadd.f32 %v301, %v2335
  %v2337 = vpop.f32.mrb[0].mxu0
  %2338 = vmatprep.mubr.bf16.mxu0 0
  %2339 = vmatmul.mubr.bf16.gmra.mrb[0].mxu0 %v1316
  %v2340 = vpop.f32.mrb[0].mxu0
  %v2341 = vadd.f32 %v301, %v2340
  %v2342 = vpop.f32.mrb[0].mxu0
  %v2343 = vpop.f32.mrb[0].mxu0
  %v2344 = vadd.f32 %v301, %v2343
  %v2345 = vpop.f32.mrb[0].mxu0
  %2346 = vmatprep.mubr.bf16.mxu0 0
  %2347 = vmatmul.mubr.bf16.gmra.mrb[0].mxu0 %v1319
  %v2348 = vpop.f32.mrb[0].mxu0
  %v2349 = vadd.f32 %v301, %v2348
  %v2350 = vpop.f32.mrb[0].mxu0
  %v2351 = vpop.f32.mrb[0].mxu0
  %v2352 = vadd.f32 %v301, %v2351
  %v2353 = vpop.f32.mrb[0].mxu0
  %2354 = vmatprep.mubr.bf16.mxu0 0
  %2355 = vmatmul.mubr.bf16.gmra.mrb[0].mxu0 %v1322
  %v2356 = vpop.f32.mrb[0].mxu0
  %v2357 = vadd.f32 %v301, %v2356
  %v2358 = vpop.f32.mrb[0].mxu0
  %v2359 = vpop.f32.mrb[0].mxu0
  %v2360 = vadd.f32 %v301, %v2359
  %v2361 = vpop.f32.mrb[0].mxu0
  %2362 = vmatprep.mubr.bf16.mxu0 0
  %2363 = vmatmul.mubr.bf16.gmra.mrb[0].mxu0 %v1325
  %v2364 = vpop.f32.mrb[0].mxu0
  %v2365 = vadd.f32 %v301, %v2364
  %v2366 = vpop.f32.mrb[0].mxu0
  %v2367 = vpop.f32.mrb[0].mxu0
  %v2368 = vadd.f32 %v301, %v2367
  %v2369 = vpop.f32.mrb[0].mxu0
  %2370 = vmatprep.mubr.bf16.mxu0 0
  %2371 = vmatmul.mubr.bf16.gmra.mrb[0].mxu0 %v1328
  %v2372 = vpop.f32.mrb[0].mxu0
  %v2373 = vadd.f32 %v301, %v2372
  %v2374 = vpop.f32.mrb[0].mxu0
  %v2375 = vpop.f32.mrb[0].mxu0
  %v2376 = vadd.f32 %v301, %v2375
  %v2377 = vpop.f32.mrb[0].mxu0
  %2378 = vmatprep.mubr.bf16.mxu0 0
  %2379 = vmatmul.mubr.bf16.gmra.mrb[0].mxu0 %v1331
  %v2380 = vpop.f32.mrb[0].mxu0
  %v2381 = vadd.f32 %v301, %v2380
  %v2382 = vpop.f32.mrb[0].mxu0
  %v2383 = vpop.f32.mrb[0].mxu0
  %v2384 = vadd.f32 %v301, %v2383
  %v2385 = vpop.f32.mrb[0].mxu0
  %2386 = vmatprep.mubr.bf16.mxu0 0
  %2387 = vmatmul.mubr.bf16.gmra.mrb[0].mxu0 %v1334
  %v2388 = vpop.f32.mrb[0].mxu0
  %v2389 = vadd.f32 %v301, %v2388
  %v2390 = vpop.f32.mrb[0].mxu0
  %v2391 = vpop.f32.mrb[0].mxu0
  %v2392 = vadd.f32 %v301, %v2391
  %v2393 = vpop.f32.mrb[0].mxu0
  %2394 = vmatprep.mubr.bf16.mxu0 0
  %2395 = vmatmul.mubr.bf16.gmra.mrb[0].mxu0 %v1337
  %v2396 = vpop.f32.mrb[0].mxu0
  %v2397 = vadd.f32 %v301, %v2396
  %v2398 = vpop.f32.mrb[0].mxu0
  %v2399 = vpop.f32.mrb[0].mxu0
  %v2400 = vadd.f32 %v301, %v2399
  %v2401 = vpop.f32.mrb[0].mxu0
  %2402 = vdwg.mxu0
  %v2403 = vmul.f32 %v1381, 0.5
  %v2404 = vmul.f32 %v1384, 0.5
  %v2405 = vmul.f32 %v1389, 0.5
  %v2406 = vmul.f32 %v1392, 0.5
  %v2407 = vmul.f32 %v1397, 0.5
  %v2408 = vmul.f32 %v1400, 0.5
  %v2409 = vmul.f32 %v1405, 0.5
  %v2410 = vmul.f32 %v1408, 0.5
  %v2411 = vmul.f32 %v1413, 0.5
  %v2412 = vmul.f32 %v1416, 0.5
  %v2413 = vmul.f32 %v1421, 0.5
  %v2414 = vmul.f32 %v1424, 0.5
  %v2415 = vmul.f32 %v1429, 0.5
  %v2416 = vmul.f32 %v1432, 0.5
  %v2417 = vmul.f32 %v1437, 0.5
  %v2418 = vmul.f32 %v1440, 0.5
  %v2419 = vmul.f32 %v1445, 0.5
  %v2420 = vmul.f32 %v1448, 0.5
  %v2421 = vmul.f32 %v1453, 0.5
  %v2422 = vmul.f32 %v1456, 0.5
  %v2423 = vmul.f32 %v1461, 0.5
  %v2424 = vmul.f32 %v1464, 0.5
  %v2425 = vmul.f32 %v1469, 0.5
  %v2426 = vmul.f32 %v1472, 0.5
  %v2427 = vmul.f32 %v1477, 0.5
  %v2428 = vmul.f32 %v1480, 0.5
  %v2429 = vmul.f32 %v1485, 0.5
  %v2430 = vmul.f32 %v1488, 0.5
  %v2431 = vmul.f32 %v1493, 0.5
  %v2432 = vmul.f32 %v1496, 0.5
  %v2433 = vmul.f32 %v1501, 0.5
  %v2434 = vmul.f32 %v1504, 0.5
  %v2435 = vmul.f32 %v1509, 0.5
  %v2436 = vmul.f32 %v1512, 0.5
  %v2437 = vmul.f32 %v1517, 0.5
  %v2438 = vmul.f32 %v1520, 0.5
  %v2439 = vmul.f32 %v1525, 0.5
  %v2440 = vmul.f32 %v1528, 0.5
  %v2441 = vmul.f32 %v1533, 0.5
  %v2442 = vmul.f32 %v1536, 0.5
  %v2443 = vmul.f32 %v1541, 0.5
  %v2444 = vmul.f32 %v1544, 0.5
  %v2445 = vmul.f32 %v1549, 0.5
  %v2446 = vmul.f32 %v1552, 0.5
  %v2447 = vmul.f32 %v1557, 0.5
  %v2448 = vmul.f32 %v1560, 0.5
  %v2449 = vmul.f32 %v1565, 0.5
  %v2450 = vmul.f32 %v1568, 0.5
  %v2451 = vmul.f32 %v1573, 0.5
  %v2452 = vmul.f32 %v1576, 0.5
  %v2453 = vmul.f32 %v1581, 0.5
  %v2454 = vmul.f32 %v1584, 0.5
  %v2455 = vmul.f32 %v1589, 0.5
  %v2456 = vmul.f32 %v1592, 0.5
  %v2457 = vmul.f32 %v1597, 0.5
  %v2458 = vmul.f32 %v1600, 0.5
  %v2459 = vmul.f32 %v1605, 0.5
  %v2460 = vmul.f32 %v1608, 0.5
  %v2461 = vmul.f32 %v1613, 0.5
  %v2462 = vmul.f32 %v1616, 0.5
  %v2463 = vmul.f32 %v1621, 0.5
  %v2464 = vmul.f32 %v1624, 0.5
  %v2465 = vmul.f32 %v1629, 0.5
  %v2466 = vmul.f32 %v1632, 0.5
  %v2467 = vmul.f32 %v1637, 0.5
  %v2468 = vmul.f32 %v1640, 0.5
  %v2469 = vmul.f32 %v1645, 0.5
  %v2470 = vmul.f32 %v1648, 0.5
  %v2471 = vmul.f32 %v1653, 0.5
  %v2472 = vmul.f32 %v1656, 0.5
  %v2473 = vmul.f32 %v1661, 0.5
  %v2474 = vmul.f32 %v1664, 0.5
  %v2475 = vmul.f32 %v1669, 0.5
  %v2476 = vmul.f32 %v1672, 0.5
  %v2477 = vmul.f32 %v1677, 0.5
  %v2478 = vmul.f32 %v1680, 0.5
  %v2479 = vmul.f32 %v1685, 0.5
  %v2480 = vmul.f32 %v1688, 0.5
  %v2481 = vmul.f32 %v1693, 0.5
  %v2482 = vmul.f32 %v1696, 0.5
  %v2483 = vmul.f32 %v1701, 0.5
  %v2484 = vmul.f32 %v1704, 0.5
  %v2485 = vmul.f32 %v1709, 0.5
  %v2486 = vmul.f32 %v1712, 0.5
  %v2487 = vmul.f32 %v1717, 0.5
  %v2488 = vmul.f32 %v1720, 0.5
  %v2489 = vmul.f32 %v1725, 0.5
  %v2490 = vmul.f32 %v1728, 0.5
  %v2491 = vmul.f32 %v1733, 0.5
  %v2492 = vmul.f32 %v1736, 0.5
  %v2493 = vmul.f32 %v1741, 0.5
  %v2494 = vmul.f32 %v1744, 0.5
  %v2495 = vmul.f32 %v1749, 0.5
  %v2496 = vmul.f32 %v1752, 0.5
  %v2497 = vmul.f32 %v1757, 0.5
  %v2498 = vmul.f32 %v1760, 0.5
  %v2499 = vmul.f32 %v1765, 0.5
  %v2500 = vmul.f32 %v1768, 0.5
  %v2501 = vmul.f32 %v1773, 0.5
  %v2502 = vmul.f32 %v1776, 0.5
  %v2503 = vmul.f32 %v1781, 0.5
  %v2504 = vmul.f32 %v1784, 0.5
  %v2505 = vmul.f32 %v1789, 0.5
  %v2506 = vmul.f32 %v1792, 0.5
  %v2507 = vmul.f32 %v1797, 0.5
  %v2508 = vmul.f32 %v1800, 0.5
  %v2509 = vmul.f32 %v1805, 0.5
  %v2510 = vmul.f32 %v1808, 0.5
  %v2511 = vmul.f32 %v1813, 0.5
  %v2512 = vmul.f32 %v1816, 0.5
  %v2513 = vmul.f32 %v1821, 0.5
  %v2514 = vmul.f32 %v1824, 0.5
  %v2515 = vmul.f32 %v1829, 0.5
  %v2516 = vmul.f32 %v1832, 0.5
  %v2517 = vmul.f32 %v1837, 0.5
  %v2518 = vmul.f32 %v1840, 0.5
  %v2519 = vmul.f32 %v1845, 0.5
  %v2520 = vmul.f32 %v1848, 0.5
  %v2521 = vmul.f32 %v1853, 0.5
  %v2522 = vmul.f32 %v1856, 0.5
  %v2523 = vmul.f32 %v1861, 0.5
  %v2524 = vmul.f32 %v1864, 0.5
  %v2525 = vmul.f32 %v1869, 0.5
  %v2526 = vmul.f32 %v1872, 0.5
  %v2527 = vmul.f32 %v1877, 0.5
  %v2528 = vmul.f32 %v1880, 0.5
  %v2529 = vmul.f32 %v1885, 0.5
  %v2530 = vmul.f32 %v1888, 0.5
  %v2531 = vmul.f32 %v1893, 0.5
  %v2532 = vmul.f32 %v1896, 0.5
  %v2533 = vmul.f32 %v1901, 0.5
  %v2534 = vmul.f32 %v1904, 0.5
  %v2535 = vmul.f32 %v1909, 0.5
  %v2536 = vmul.f32 %v1912, 0.5
  %v2537 = vmul.f32 %v1917, 0.5
  %v2538 = vmul.f32 %v1920, 0.5
  %v2539 = vmul.f32 %v1925, 0.5
  %v2540 = vmul.f32 %v1928, 0.5
  %v2541 = vmul.f32 %v1933, 0.5
  %v2542 = vmul.f32 %v1936, 0.5
  %v2543 = vmul.f32 %v1941, 0.5
  %v2544 = vmul.f32 %v1944, 0.5
  %v2545 = vmul.f32 %v1949, 0.5
  %v2546 = vmul.f32 %v1952, 0.5
  %v2547 = vmul.f32 %v1957, 0.5
  %v2548 = vmul.f32 %v1960, 0.5
  %v2549 = vmul.f32 %v1965, 0.5
  %v2550 = vmul.f32 %v1968, 0.5
  %v2551 = vmul.f32 %v1973, 0.5
  %v2552 = vmul.f32 %v1976, 0.5
  %v2553 = vmul.f32 %v1981, 0.5
  %v2554 = vmul.f32 %v1984, 0.5
  %v2555 = vmul.f32 %v1989, 0.5
  %v2556 = vmul.f32 %v1992, 0.5
  %v2557 = vmul.f32 %v1997, 0.5
  %v2558 = vmul.f32 %v2000, 0.5
  %v2559 = vmul.f32 %v2005, 0.5
  %v2560 = vmul.f32 %v2008, 0.5
  %v2561 = vmul.f32 %v2013, 0.5
  %v2562 = vmul.f32 %v2016, 0.5
  %v2563 = vmul.f32 %v2021, 0.5
  %v2564 = vmul.f32 %v2024, 0.5
  %v2565 = vmul.f32 %v2029, 0.5
  %v2566 = vmul.f32 %v2032, 0.5
  %v2567 = vmul.f32 %v2037, 0.5
  %v2568 = vmul.f32 %v2040, 0.5
  %v2569 = vmul.f32 %v2045, 0.5
  %v2570 = vmul.f32 %v2048, 0.5
  %v2571 = vmul.f32 %v2053, 0.5
  %v2572 = vmul.f32 %v2056, 0.5
  %v2573 = vmul.f32 %v2061, 0.5
  %v2574 = vmul.f32 %v2064, 0.5
  %v2575 = vmul.f32 %v2069, 0.5
  %v2576 = vmul.f32 %v2072, 0.5
  %v2577 = vmul.f32 %v2077, 0.5
  %v2578 = vmul.f32 %v2080, 0.5
  %v2579 = vmul.f32 %v2085, 0.5
  %v2580 = vmul.f32 %v2088, 0.5
  %v2581 = vmul.f32 %v2093, 0.5
  %v2582 = vmul.f32 %v2096, 0.5
  %v2583 = vmul.f32 %v2101, 0.5
  %v2584 = vmul.f32 %v2104, 0.5
  %v2585 = vmul.f32 %v2109, 0.5
  %v2586 = vmul.f32 %v2112, 0.5
  %v2587 = vmul.f32 %v2117, 0.5
  %v2588 = vmul.f32 %v2120, 0.5
  %v2589 = vmul.f32 %v2125, 0.5
  %v2590 = vmul.f32 %v2128, 0.5
  %v2591 = vmul.f32 %v2133, 0.5
  %v2592 = vmul.f32 %v2136, 0.5
  %v2593 = vmul.f32 %v2141, 0.5
  %v2594 = vmul.f32 %v2144, 0.5
  %v2595 = vmul.f32 %v2149, 0.5
  %v2596 = vmul.f32 %v2152, 0.5
  %v2597 = vmul.f32 %v2157, 0.5
  %v2598 = vmul.f32 %v2160, 0.5
  %v2599 = vmul.f32 %v2165, 0.5
  %v2600 = vmul.f32 %v2168, 0.5
  %v2601 = vmul.f32 %v2173, 0.5
  %v2602 = vmul.f32 %v2176, 0.5
  %v2603 = vmul.f32 %v2181, 0.5
  %v2604 = vmul.f32 %v2184, 0.5
  %v2605 = vmul.f32 %v2189, 0.5
  %v2606 = vmul.f32 %v2192, 0.5
  %v2607 = vmul.f32 %v2197, 0.5
  %v2608 = vmul.f32 %v2200, 0.5
  %v2609 = vmul.f32 %v2205, 0.5
  %v2610 = vmul.f32 %v2208, 0.5
  %v2611 = vmul.f32 %v2213, 0.5
  %v2612 = vmul.f32 %v2216, 0.5
  %v2613 = vmul.f32 %v2221, 0.5
  %v2614 = vmul.f32 %v2224, 0.5
  %v2615 = vmul.f32 %v2229, 0.5
  %v2616 = vmul.f32 %v2232, 0.5
  %v2617 = vmul.f32 %v2237, 0.5
  %v2618 = vmul.f32 %v2240, 0.5
  %v2619 = vmul.f32 %v2245, 0.5
  %v2620 = vmul.f32 %v2248, 0.5
  %v2621 = vmul.f32 %v2253, 0.5
  %v2622 = vmul.f32 %v2256, 0.5
  %v2623 = vmul.f32 %v2261, 0.5
  %v2624 = vmul.f32 %v2264, 0.5
  %v2625 = vmul.f32 %v2269, 0.5
  %v2626 = vmul.f32 %v2272, 0.5
  %v2627 = vmul.f32 %v2277, 0.5
  %v2628 = vmul.f32 %v2280, 0.5
  %v2629 = vmul.f32 %v2285, 0.5
  %v2630 = vmul.f32 %v2288, 0.5
  %v2631 = vmul.f32 %v2293, 0.5
  %v2632 = vmul.f32 %v2296, 0.5
  %v2633 = vmul.f32 %v2301, 0.5
  %v2634 = vmul.f32 %v2304, 0.5
  %v2635 = vmul.f32 %v2309, 0.5
  %v2636 = vmul.f32 %v2312, 0.5
  %v2637 = vmul.f32 %v2317, 0.5
  %v2638 = vmul.f32 %v2320, 0.5
  %v2639 = vmul.f32 %v2325, 0.5
  %v2640 = vmul.f32 %v2328, 0.5
  %v2641 = vmul.f32 %v2333, 0.5
  %v2642 = vmul.f32 %v2336, 0.5
  %v2643 = vmul.f32 %v2341, 0.5
  %v2644 = vmul.f32 %v2344, 0.5
  %v2645 = vmul.f32 %v2349, 0.5
  %v2646 = vmul.f32 %v2352, 0.5
  %v2647 = vmul.f32 %v2357, 0.5
  %v2648 = vmul.f32 %v2360, 0.5
  %v2649 = vmul.f32 %v2365, 0.5
  %v2650 = vmul.f32 %v2368, 0.5
  %v2651 = vmul.f32 %v2373, 0.5
  %v2652 = vmul.f32 %v2376, 0.5
  %v2653 = vmul.f32 %v2381, 0.5
  %v2654 = vmul.f32 %v2384, 0.5
  %v2655 = vmul.f32 %v2389, 0.5
  %v2656 = vmul.f32 %v2392, 0.5
  %v2657 = vmul.f32 %v2397, 0.5
  %v2658 = vmul.f32 %v2400, 0.5
  %v2659 = vtanh.pop %v2403
  %v2660 = vtanh.pop %v2404
  %v2661 = vtanh.pop %v2405
  %v2662 = vtanh.pop %v2406
  %v2663 = vtanh.pop %v2407
  %v2664 = vtanh.pop %v2408
  %v2665 = vtanh.pop %v2409
  %v2666 = vtanh.pop %v2410
  %v2667 = vtanh.pop %v2411
  %v2668 = vtanh.pop %v2412
  %v2669 = vtanh.pop %v2413
  %v2670 = vtanh.pop %v2414
  %v2671 = vtanh.pop %v2415
  %v2672 = vtanh.pop %v2416
  %v2673 = vtanh.pop %v2417
  %v2674 = vtanh.pop %v2418
  %v2675 = vtanh.pop %v2419
  %v2676 = vtanh.pop %v2420
  %v2677 = vtanh.pop %v2421
  %v2678 = vtanh.pop %v2422
  %v2679 = vtanh.pop %v2423
  %v2680 = vtanh.pop %v2424
  %v2681 = vtanh.pop %v2425
  %v2682 = vtanh.pop %v2426
  %v2683 = vtanh.pop %v2427
  %v2684 = vtanh.pop %v2428
  %v2685 = vtanh.pop %v2429
  %v2686 = vtanh.pop %v2430
  %v2687 = vtanh.pop %v2431
  %v2688 = vtanh.pop %v2432
  %v2689 = vtanh.pop %v2433
  %v2690 = vtanh.pop %v2434
  %v2691 = vtanh.pop %v2435
  %v2692 = vtanh.pop %v2436
  %v2693 = vtanh.pop %v2437
  %v2694 = vtanh.pop %v2438
  %v2695 = vtanh.pop %v2439
  %v2696 = vtanh.pop %v2440
  %v2697 = vtanh.pop %v2441
  %v2698 = vtanh.pop %v2442
  %v2699 = vtanh.pop %v2443
  %v2700 = vtanh.pop %v2444
  %v2701 = vtanh.pop %v2445
  %v2702 = vtanh.pop %v2446
  %v2703 = vtanh.pop %v2447
  %v2704 = vtanh.pop %v2448
  %v2705 = vtanh.pop %v2449
  %v2706 = vtanh.pop %v2450
  %v2707 = vtanh.pop %v2451
  %v2708 = vtanh.pop %v2452
  %v2709 = vtanh.pop %v2453
  %v2710 = vtanh.pop %v2454
  %v2711 = vtanh.pop %v2455
  %v2712 = vtanh.pop %v2456
  %v2713 = vtanh.pop %v2457
  %v2714 = vtanh.pop %v2458
  %v2715 = vtanh.pop %v2459
  %v2716 = vtanh.pop %v2460
  %v2717 = vtanh.pop %v2461
  %v2718 = vtanh.pop %v2462
  %v2719 = vtanh.pop %v2463
  %v2720 = vtanh.pop %v2464
  %v2721 = vtanh.pop %v2465
  %v2722 = vtanh.pop %v2466
  %v2723 = vtanh.pop %v2467
  %v2724 = vtanh.pop %v2468
  %v2725 = vtanh.pop %v2469
  %v2726 = vtanh.pop %v2470
  %v2727 = vtanh.pop %v2471
  %v2728 = vtanh.pop %v2472
  %v2729 = vtanh.pop %v2473
  %v2730 = vtanh.pop %v2474
  %v2731 = vtanh.pop %v2475
  %v2732 = vtanh.pop %v2476
  %v2733 = vtanh.pop %v2477
  %v2734 = vtanh.pop %v2478
  %v2735 = vtanh.pop %v2479
  %v2736 = vtanh.pop %v2480
  %v2737 = vtanh.pop %v2481
  %v2738 = vtanh.pop %v2482
  %v2739 = vtanh.pop %v2483
  %v2740 = vtanh.pop %v2484
  %v2741 = vtanh.pop %v2485
  %v2742 = vtanh.pop %v2486
  %v2743 = vtanh.pop %v2487
  %v2744 = vtanh.pop %v2488
  %v2745 = vtanh.pop %v2489
  %v2746 = vtanh.pop %v2490
  %v2747 = vtanh.pop %v2491
  %v2748 = vtanh.pop %v2492
  %v2749 = vtanh.pop %v2493
  %v2750 = vtanh.pop %v2494
  %v2751 = vtanh.pop %v2495
  %v2752 = vtanh.pop %v2496
  %v2753 = vtanh.pop %v2497
  %v2754 = vtanh.pop %v2498
  %v2755 = vtanh.pop %v2499
  %v2756 = vtanh.pop %v2500
  %v2757 = vtanh.pop %v2501
  %v2758 = vtanh.pop %v2502
  %v2759 = vtanh.pop %v2503
  %v2760 = vtanh.pop %v2504
  %v2761 = vtanh.pop %v2505
  %v2762 = vtanh.pop %v2506
  %v2763 = vtanh.pop %v2507
  %v2764 = vtanh.pop %v2508
  %v2765 = vtanh.pop %v2509
  %v2766 = vtanh.pop %v2510
  %v2767 = vtanh.pop %v2511
  %v2768 = vtanh.pop %v2512
  %v2769 = vtanh.pop %v2513
  %v2770 = vtanh.pop %v2514
  %v2771 = vtanh.pop %v2515
  %v2772 = vtanh.pop %v2516
  %v2773 = vtanh.pop %v2517
  %v2774 = vtanh.pop %v2518
  %v2775 = vtanh.pop %v2519
  %v2776 = vtanh.pop %v2520
  %v2777 = vtanh.pop %v2521
  %v2778 = vtanh.pop %v2522
  %v2779 = vtanh.pop %v2523
  %v2780 = vtanh.pop %v2524
  %v2781 = vtanh.pop %v2525
  %v2782 = vtanh.pop %v2526
  %v2783 = vtanh.pop %v2527
  %v2784 = vtanh.pop %v2528
  %v2785 = vtanh.pop %v2529
  %v2786 = vtanh.pop %v2530
  %v2787 = vtanh.pop %v2531
  %v2788 = vtanh.pop %v2532
  %v2789 = vtanh.pop %v2533
  %v2790 = vtanh.pop %v2534
  %v2791 = vtanh.pop %v2535
  %v2792 = vtanh.pop %v2536
  %v2793 = vtanh.pop %v2537
  %v2794 = vtanh.pop %v2538
  %v2795 = vtanh.pop %v2539
  %v2796 = vtanh.pop %v2540
  %v2797 = vtanh.pop %v2541
  %v2798 = vtanh.pop %v2542
  %v2799 = vtanh.pop %v2543
  %v2800 = vtanh.pop %v2544
  %v2801 = vtanh.pop %v2545
  %v2802 = vtanh.pop %v2546
  %v2803 = vtanh.pop %v2547
  %v2804 = vtanh.pop %v2548
  %v2805 = vtanh.pop %v2549
  %v2806 = vtanh.pop %v2550
  %v2807 = vtanh.pop %v2551
  %v2808 = vtanh.pop %v2552
  %v2809 = vtanh.pop %v2553
  %v2810 = vtanh.pop %v2554
  %v2811 = vtanh.pop %v2555
  %v2812 = vtanh.pop %v2556
  %v2813 = vtanh.pop %v2557
  %v2814 = vtanh.pop %v2558
  %v2815 = vtanh.pop %v2559
  %v2816 = vtanh.pop %v2560
  %v2817 = vtanh.pop %v2561
  %v2818 = vtanh.pop %v2562
  %v2819 = vtanh.pop %v2563
  %v2820 = vtanh.pop %v2564
  %v2821 = vtanh.pop %v2565
  %v2822 = vtanh.pop %v2566
  %v2823 = vtanh.pop %v2567
  %v2824 = vtanh.pop %v2568
  %v2825 = vtanh.pop %v2569
  %v2826 = vtanh.pop %v2570
  %v2827 = vtanh.pop %v2571
  %v2828 = vtanh.pop %v2572
  %v2829 = vtanh.pop %v2573
  %v2830 = vtanh.pop %v2574
  %v2831 = vtanh.pop %v2575
  %v2832 = vtanh.pop %v2576
  %v2833 = vtanh.pop %v2577
  %v2834 = vtanh.pop %v2578
  %v2835 = vtanh.pop %v2579
  %v2836 = vtanh.pop %v2580
  %v2837 = vtanh.pop %v2581
  %v2838 = vtanh.pop %v2582
  %v2839 = vtanh.pop %v2583
  %v2840 = vtanh.pop %v2584
  %v2841 = vtanh.pop %v2585
  %v2842 = vtanh.pop %v2586
  %v2843 = vtanh.pop %v2587
  %v2844 = vtanh.pop %v2588
  %v2845 = vtanh.pop %v2589
  %v2846 = vtanh.pop %v2590
  %v2847 = vtanh.pop %v2591
  %v2848 = vtanh.pop %v2592
  %v2849 = vtanh.pop %v2593
  %v2850 = vtanh.pop %v2594
  %v2851 = vtanh.pop %v2595
  %v2852 = vtanh.pop %v2596
  %v2853 = vtanh.pop %v2597
  %v2854 = vtanh.pop %v2598
  %v2855 = vtanh.pop %v2599
  %v2856 = vtanh.pop %v2600
  %v2857 = vtanh.pop %v2601
  %v2858 = vtanh.pop %v2602
  %v2859 = vtanh.pop %v2603
  %v2860 = vtanh.pop %v2604
  %v2861 = vtanh.pop %v2605
  %v2862 = vtanh.pop %v2606
  %v2863 = vtanh.pop %v2607
  %v2864 = vtanh.pop %v2608
  %v2865 = vtanh.pop %v2609
  %v2866 = vtanh.pop %v2610
  %v2867 = vtanh.pop %v2611
  %v2868 = vtanh.pop %v2612
  %v2869 = vtanh.pop %v2613
  %v2870 = vtanh.pop %v2614
  %v2871 = vtanh.pop %v2615
  %v2872 = vtanh.pop %v2616
  %v2873 = vtanh.pop %v2617
  %v2874 = vtanh.pop %v2618
  %v2875 = vtanh.pop %v2619
  %v2876 = vtanh.pop %v2620
  %v2877 = vtanh.pop %v2621
  %v2878 = vtanh.pop %v2622
  %v2879 = vtanh.pop %v2623
  %v2880 = vtanh.pop %v2624
  %v2881 = vtanh.pop %v2625
  %v2882 = vtanh.pop %v2626
  %v2883 = vtanh.pop %v2627
  %v2884 = vtanh.pop %v2628
  %v2885 = vtanh.pop %v2629
  %v2886 = vtanh.pop %v2630
  %v2887 = vtanh.pop %v2631
  %v2888 = vtanh.pop %v2632
  %v2889 = vtanh.pop %v2633
  %v2890 = vtanh.pop %v2634
  %v2891 = vtanh.pop %v2635
  %v2892 = vtanh.pop %v2636
  %v2893 = vtanh.pop %v2637
  %v2894 = vtanh.pop %v2638
  %v2895 = vtanh.pop %v2639
  %v2896 = vtanh.pop %v2640
  %v2897 = vtanh.pop %v2641
  %v2898 = vtanh.pop %v2642
  %v2899 = vtanh.pop %v2643
  %v2900 = vtanh.pop %v2644
  %v2901 = vtanh.pop %v2645
  %v2902 = vtanh.pop %v2646
  %v2903 = vtanh.pop %v2647
  %v2904 = vtanh.pop %v2648
  %v2905 = vtanh.pop %v2649
  %v2906 = vtanh.pop %v2650
  %v2907 = vtanh.pop %v2651
  %v2908 = vtanh.pop %v2652
  %v2909 = vtanh.pop %v2653
  %v2910 = vtanh.pop %v2654
  %v2911 = vtanh.pop %v2655
  %v2912 = vtanh.pop %v2656
  %v2913 = vtanh.pop %v2657
  %v2914 = vtanh.pop %v2658
  %v2915 = vadd.f32 %v2659, 1.0
  %v2916 = vadd.f32 %v2660, 1.0
  %v2917 = vadd.f32 %v2661, 1.0
  %v2918 = vadd.f32 %v2662, 1.0
  %v2919 = vadd.f32 %v2663, 1.0
  %v2920 = vadd.f32 %v2664, 1.0
  %v2921 = vadd.f32 %v2665, 1.0
  %v2922 = vadd.f32 %v2666, 1.0
  %v2923 = vadd.f32 %v2667, 1.0
  %v2924 = vadd.f32 %v2668, 1.0
  %v2925 = vadd.f32 %v2669, 1.0
  %v2926 = vadd.f32 %v2670, 1.0
  %v2927 = vadd.f32 %v2671, 1.0
  %v2928 = vadd.f32 %v2672, 1.0
  %v2929 = vadd.f32 %v2673, 1.0
  %v2930 = vadd.f32 %v2674, 1.0
  %v2931 = vadd.f32 %v2675, 1.0
  %v2932 = vadd.f32 %v2676, 1.0
  %v2933 = vadd.f32 %v2677, 1.0
  %v2934 = vadd.f32 %v2678, 1.0
  %v2935 = vadd.f32 %v2679, 1.0
  %v2936 = vadd.f32 %v2680, 1.0
  %v2937 = vadd.f32 %v2681, 1.0
  %v2938 = vadd.f32 %v2682, 1.0
  %v2939 = vadd.f32 %v2683, 1.0
  %v2940 = vadd.f32 %v2684, 1.0
  %v2941 = vadd.f32 %v2685, 1.0
  %v2942 = vadd.f32 %v2686, 1.0
  %v2943 = vadd.f32 %v2687, 1.0
  %v2944 = vadd.f32 %v2688, 1.0
  %v2945 = vadd.f32 %v2689, 1.0
  %v2946 = vadd.f32 %v2690, 1.0
  %v2947 = vadd.f32 %v2691, 1.0
  %v2948 = vadd.f32 %v2692, 1.0
  %v2949 = vadd.f32 %v2693, 1.0
  %v2950 = vadd.f32 %v2694, 1.0
  %v2951 = vadd.f32 %v2695, 1.0
  %v2952 = vadd.f32 %v2696, 1.0
  %v2953 = vadd.f32 %v2697, 1.0
  %v2954 = vadd.f32 %v2698, 1.0
  %v2955 = vadd.f32 %v2699, 1.0
  %v2956 = vadd.f32 %v2700, 1.0
  %v2957 = vadd.f32 %v2701, 1.0
  %v2958 = vadd.f32 %v2702, 1.0
  %v2959 = vadd.f32 %v2703, 1.0
  %v2960 = vadd.f32 %v2704, 1.0
  %v2961 = vadd.f32 %v2705, 1.0
  %v2962 = vadd.f32 %v2706, 1.0
  %v2963 = vadd.f32 %v2707, 1.0
  %v2964 = vadd.f32 %v2708, 1.0
  %v2965 = vadd.f32 %v2709, 1.0
  %v2966 = vadd.f32 %v2710, 1.0
  %v2967 = vadd.f32 %v2711, 1.0
  %v2968 = vadd.f32 %v2712, 1.0
  %v2969 = vadd.f32 %v2713, 1.0
  %v2970 = vadd.f32 %v2714, 1.0
  %v2971 = vadd.f32 %v2715, 1.0
  %v2972 = vadd.f32 %v2716, 1.0
  %v2973 = vadd.f32 %v2717, 1.0
  %v2974 = vadd.f32 %v2718, 1.0
  %v2975 = vadd.f32 %v2719, 1.0
  %v2976 = vadd.f32 %v2720, 1.0
  %v2977 = vadd.f32 %v2721, 1.0
  %v2978 = vadd.f32 %v2722, 1.0
  %v2979 = vadd.f32 %v2723, 1.0
  %v2980 = vadd.f32 %v2724, 1.0
  %v2981 = vadd.f32 %v2725, 1.0
  %v2982 = vadd.f32 %v2726, 1.0
  %v2983 = vadd.f32 %v2727, 1.0
  %v2984 = vadd.f32 %v2728, 1.0
  %v2985 = vadd.f32 %v2729, 1.0
  %v2986 = vadd.f32 %v2730, 1.0
  %v2987 = vadd.f32 %v2731, 1.0
  %v2988 = vadd.f32 %v2732, 1.0
  %v2989 = vadd.f32 %v2733, 1.0
  %v2990 = vadd.f32 %v2734, 1.0
  %v2991 = vadd.f32 %v2735, 1.0
  %v2992 = vadd.f32 %v2736, 1.0
  %v2993 = vadd.f32 %v2737, 1.0
  %v2994 = vadd.f32 %v2738, 1.0
  %v2995 = vadd.f32 %v2739, 1.0
  %v2996 = vadd.f32 %v2740, 1.0
  %v2997 = vadd.f32 %v2741, 1.0
  %v2998 = vadd.f32 %v2742, 1.0
  %v2999 = vadd.f32 %v2743, 1.0
  %v3000 = vadd.f32 %v2744, 1.0
  %v3001 = vadd.f32 %v2745, 1.0
  %v3002 = vadd.f32 %v2746, 1.0
  %v3003 = vadd.f32 %v2747, 1.0
  %v3004 = vadd.f32 %v2748, 1.0
  %v3005 = vadd.f32 %v2749, 1.0
  %v3006 = vadd.f32 %v2750, 1.0
  %v3007 = vadd.f32 %v2751, 1.0
  %v3008 = vadd.f32 %v2752, 1.0
  %v3009 = vadd.f32 %v2753, 1.0
  %v3010 = vadd.f32 %v2754, 1.0
  %v3011 = vadd.f32 %v2755, 1.0
  %v3012 = vadd.f32 %v2756, 1.0
  %v3013 = vadd.f32 %v2757, 1.0
  %v3014 = vadd.f32 %v2758, 1.0
  %v3015 = vadd.f32 %v2759, 1.0
  %v3016 = vadd.f32 %v2760, 1.0
  %v3017 = vadd.f32 %v2761, 1.0
  %v3018 = vadd.f32 %v2762, 1.0
  %v3019 = vadd.f32 %v2763, 1.0
  %v3020 = vadd.f32 %v2764, 1.0
  %v3021 = vadd.f32 %v2765, 1.0
  %v3022 = vadd.f32 %v2766, 1.0
  %v3023 = vadd.f32 %v2767, 1.0
  %v3024 = vadd.f32 %v2768, 1.0
  %v3025 = vadd.f32 %v2769, 1.0
  %v3026 = vadd.f32 %v2770, 1.0
  %v3027 = vadd.f32 %v2771, 1.0
  %v3028 = vadd.f32 %v2772, 1.0
  %v3029 = vadd.f32 %v2773, 1.0
  %v3030 = vadd.f32 %v2774, 1.0
  %v3031 = vadd.f32 %v2775, 1.0
  %v3032 = vadd.f32 %v2776, 1.0
  %v3033 = vadd.f32 %v2777, 1.0
  %v3034 = vadd.f32 %v2778, 1.0
  %v3035 = vadd.f32 %v2779, 1.0
  %v3036 = vadd.f32 %v2780, 1.0
  %v3037 = vadd.f32 %v2781, 1.0
  %v3038 = vadd.f32 %v2782, 1.0
  %v3039 = vadd.f32 %v2783, 1.0
  %v3040 = vadd.f32 %v2784, 1.0
  %v3041 = vadd.f32 %v2785, 1.0
  %v3042 = vadd.f32 %v2786, 1.0
  %v3043 = vadd.f32 %v2787, 1.0
  %v3044 = vadd.f32 %v2788, 1.0
  %v3045 = vadd.f32 %v2789, 1.0
  %v3046 = vadd.f32 %v2790, 1.0
  %v3047 = vadd.f32 %v2791, 1.0
  %v3048 = vadd.f32 %v2792, 1.0
  %v3049 = vadd.f32 %v2793, 1.0
  %v3050 = vadd.f32 %v2794, 1.0
  %v3051 = vadd.f32 %v2795, 1.0
  %v3052 = vadd.f32 %v2796, 1.0
  %v3053 = vadd.f32 %v2797, 1.0
  %v3054 = vadd.f32 %v2798, 1.0
  %v3055 = vadd.f32 %v2799, 1.0
  %v3056 = vadd.f32 %v2800, 1.0
  %v3057 = vadd.f32 %v2801, 1.0
  %v3058 = vadd.f32 %v2802, 1.0
  %v3059 = vadd.f32 %v2803, 1.0
  %v3060 = vadd.f32 %v2804, 1.0
  %v3061 = vadd.f32 %v2805, 1.0
  %v3062 = vadd.f32 %v2806, 1.0
  %v3063 = vadd.f32 %v2807, 1.0
  %v3064 = vadd.f32 %v2808, 1.0
  %v3065 = vadd.f32 %v2809, 1.0
  %v3066 = vadd.f32 %v2810, 1.0
  %v3067 = vadd.f32 %v2811, 1.0
  %v3068 = vadd.f32 %v2812, 1.0
  %v3069 = vadd.f32 %v2813, 1.0
  %v3070 = vadd.f32 %v2814, 1.0
  %v3071 = vadd.f32 %v2815, 1.0
  %v3072 = vadd.f32 %v2816, 1.0
  %v3073 = vadd.f32 %v2817, 1.0
  %v3074 = vadd.f32 %v2818, 1.0
  %v3075 = vadd.f32 %v2819, 1.0
  %v3076 = vadd.f32 %v2820, 1.0
  %v3077 = vadd.f32 %v2821, 1.0
  %v3078 = vadd.f32 %v2822, 1.0
  %v3079 = vadd.f32 %v2823, 1.0
  %v3080 = vadd.f32 %v2824, 1.0
  %v3081 = vadd.f32 %v2825, 1.0
  %v3082 = vadd.f32 %v2826, 1.0
  %v3083 = vadd.f32 %v2827, 1.0
  %v3084 = vadd.f32 %v2828, 1.0
  %v3085 = vadd.f32 %v2829, 1.0
  %v3086 = vadd.f32 %v2830, 1.0
  %v3087 = vadd.f32 %v2831, 1.0
  %v3088 = vadd.f32 %v2832, 1.0
  %v3089 = vadd.f32 %v2833, 1.0
  %v3090 = vadd.f32 %v2834, 1.0
  %v3091 = vadd.f32 %v2835, 1.0
  %v3092 = vadd.f32 %v2836, 1.0
  %v3093 = vadd.f32 %v2837, 1.0
  %v3094 = vadd.f32 %v2838, 1.0
  %v3095 = vadd.f32 %v2839, 1.0
  %v3096 = vadd.f32 %v2840, 1.0
  %v3097 = vadd.f32 %v2841, 1.0
  %v3098 = vadd.f32 %v2842, 1.0
  %v3099 = vadd.f32 %v2843, 1.0
  %v3100 = vadd.f32 %v2844, 1.0
  %v3101 = vadd.f32 %v2845, 1.0
  %v3102 = vadd.f32 %v2846, 1.0
  %v3103 = vadd.f32 %v2847, 1.0
  %v3104 = vadd.f32 %v2848, 1.0
  %v3105 = vadd.f32 %v2849, 1.0
  %v3106 = vadd.f32 %v2850, 1.0
  %v3107 = vadd.f32 %v2851, 1.0
  %v3108 = vadd.f32 %v2852, 1.0
  %v3109 = vadd.f32 %v2853, 1.0
  %v3110 = vadd.f32 %v2854, 1.0
  %v3111 = vadd.f32 %v2855, 1.0
  %v3112 = vadd.f32 %v2856, 1.0
  %v3113 = vadd.f32 %v2857, 1.0
  %v3114 = vadd.f32 %v2858, 1.0
  %v3115 = vadd.f32 %v2859, 1.0
  %v3116 = vadd.f32 %v2860, 1.0
  %v3117 = vadd.f32 %v2861, 1.0
  %v3118 = vadd.f32 %v2862, 1.0
  %v3119 = vadd.f32 %v2863, 1.0
  %v3120 = vadd.f32 %v2864, 1.0
  %v3121 = vadd.f32 %v2865, 1.0
  %v3122 = vadd.f32 %v2866, 1.0
  %v3123 = vadd.f32 %v2867, 1.0
  %v3124 = vadd.f32 %v2868, 1.0
  %v3125 = vadd.f32 %v2869, 1.0
  %v3126 = vadd.f32 %v2870, 1.0
  %v3127 = vadd.f32 %v2871, 1.0
  %v3128 = vadd.f32 %v2872, 1.0
  %v3129 = vadd.f32 %v2873, 1.0
  %v3130 = vadd.f32 %v2874, 1.0
  %v3131 = vadd.f32 %v2875, 1.0
  %v3132 = vadd.f32 %v2876, 1.0
  %v3133 = vadd.f32 %v2877, 1.0
  %v3134 = vadd.f32 %v2878, 1.0
  %v3135 = vadd.f32 %v2879, 1.0
  %v3136 = vadd.f32 %v2880, 1.0
  %v3137 = vadd.f32 %v2881, 1.0
  %v3138 = vadd.f32 %v2882, 1.0
  %v3139 = vadd.f32 %v2883, 1.0
  %v3140 = vadd.f32 %v2884, 1.0
  %v3141 = vadd.f32 %v2885, 1.0
  %v3142 = vadd.f32 %v2886, 1.0
  %v3143 = vadd.f32 %v2887, 1.0
  %v3144 = vadd.f32 %v2888, 1.0
  %v3145 = vadd.f32 %v2889, 1.0
  %v3146 = vadd.f32 %v2890, 1.0
  %v3147 = vadd.f32 %v2891, 1.0
  %v3148 = vadd.f32 %v2892, 1.0
  %v3149 = vadd.f32 %v2893, 1.0
  %v3150 = vadd.f32 %v2894, 1.0
  %v3151 = vadd.f32 %v2895, 1.0
  %v3152 = vadd.f32 %v2896, 1.0
  %v3153 = vadd.f32 %v2897, 1.0
  %v3154 = vadd.f32 %v2898, 1.0
  %v3155 = vadd.f32 %v2899, 1.0
  %v3156 = vadd.f32 %v2900, 1.0
  %v3157 = vadd.f32 %v2901, 1.0
  %v3158 = vadd.f32 %v2902, 1.0
  %v3159 = vadd.f32 %v2903, 1.0
  %v3160 = vadd.f32 %v2904, 1.0
  %v3161 = vadd.f32 %v2905, 1.0
  %v3162 = vadd.f32 %v2906, 1.0
  %v3163 = vadd.f32 %v2907, 1.0
  %v3164 = vadd.f32 %v2908, 1.0
  %v3165 = vadd.f32 %v2909, 1.0
  %v3166 = vadd.f32 %v2910, 1.0
  %v3167 = vadd.f32 %v2911, 1.0
  %v3168 = vadd.f32 %v2912, 1.0
  %v3169 = vadd.f32 %v2913, 1.0
  %v3170 = vadd.f32 %v2914, 1.0
  %v3171 = vmul.f32 %v2915, 0.5
  %v3172 = vmul.f32 %v2916, 0.5
  %v3173 = vmul.f32 %v2917, 0.5
  %v3174 = vmul.f32 %v2918, 0.5
  %v3175 = vmul.f32 %v2919, 0.5
  %v3176 = vmul.f32 %v2920, 0.5
  %v3177 = vmul.f32 %v2921, 0.5
  %v3178 = vmul.f32 %v2922, 0.5
  %v3179 = vmul.f32 %v2923, 0.5
  %v3180 = vmul.f32 %v2924, 0.5
  %v3181 = vmul.f32 %v2925, 0.5
  %v3182 = vmul.f32 %v2926, 0.5
  %v3183 = vmul.f32 %v2927, 0.5
  %v3184 = vmul.f32 %v2928, 0.5
  %v3185 = vmul.f32 %v2929, 0.5
  %v3186 = vmul.f32 %v2930, 0.5
  %v3187 = vmul.f32 %v2931, 0.5
  %v3188 = vmul.f32 %v2932, 0.5
  %v3189 = vmul.f32 %v2933, 0.5
  %v3190 = vmul.f32 %v2934, 0.5
  %v3191 = vmul.f32 %v2935, 0.5
  %v3192 = vmul.f32 %v2936, 0.5
  %v3193 = vmul.f32 %v2937, 0.5
  %v3194 = vmul.f32 %v2938, 0.5
  %v3195 = vmul.f32 %v2939, 0.5
  %v3196 = vmul.f32 %v2940, 0.5
  %v3197 = vmul.f32 %v2941, 0.5
  %v3198 = vmul.f32 %v2942, 0.5
  %v3199 = vmul.f32 %v2943, 0.5
  %v3200 = vmul.f32 %v2944, 0.5
  %v3201 = vmul.f32 %v2945, 0.5
  %v3202 = vmul.f32 %v2946, 0.5
  %v3203 = vmul.f32 %v2947, 0.5
  %v3204 = vmul.f32 %v2948, 0.5
  %v3205 = vmul.f32 %v2949, 0.5
  %v3206 = vmul.f32 %v2950, 0.5
  %v3207 = vmul.f32 %v2951, 0.5
  %v3208 = vmul.f32 %v2952, 0.5
  %v3209 = vmul.f32 %v2953, 0.5
  %v3210 = vmul.f32 %v2954, 0.5
  %v3211 = vmul.f32 %v2955, 0.5
  %v3212 = vmul.f32 %v2956, 0.5
  %v3213 = vmul.f32 %v2957, 0.5
  %v3214 = vmul.f32 %v2958, 0.5
  %v3215 = vmul.f32 %v2959, 0.5
  %v3216 = vmul.f32 %v2960, 0.5
  %v3217 = vmul.f32 %v2961, 0.5
  %v3218 = vmul.f32 %v2962, 0.5
  %v3219 = vmul.f32 %v2963, 0.5
  %v3220 = vmul.f32 %v2964, 0.5
  %v3221 = vmul.f32 %v2965, 0.5
  %v3222 = vmul.f32 %v2966, 0.5
  %v3223 = vmul.f32 %v2967, 0.5
  %v3224 = vmul.f32 %v2968, 0.5
  %v3225 = vmul.f32 %v2969, 0.5
  %v3226 = vmul.f32 %v2970, 0.5
  %v3227 = vmul.f32 %v2971, 0.5
  %v3228 = vmul.f32 %v2972, 0.5
  %v3229 = vmul.f32 %v2973, 0.5
  %v3230 = vmul.f32 %v2974, 0.5
  %v3231 = vmul.f32 %v2975, 0.5
  %v3232 = vmul.f32 %v2976, 0.5
  %v3233 = vmul.f32 %v2977, 0.5
  %v3234 = vmul.f32 %v2978, 0.5
  %v3235 = vmul.f32 %v2979, 0.5
  %v3236 = vmul.f32 %v2980, 0.5
  %v3237 = vmul.f32 %v2981, 0.5
  %v3238 = vmul.f32 %v2982, 0.5
  %v3239 = vmul.f32 %v2983, 0.5
  %v3240 = vmul.f32 %v2984, 0.5
  %v3241 = vmul.f32 %v2985, 0.5
  %v3242 = vmul.f32 %v2986, 0.5
  %v3243 = vmul.f32 %v2987, 0.5
  %v3244 = vmul.f32 %v2988, 0.5
  %v3245 = vmul.f32 %v2989, 0.5
  %v3246 = vmul.f32 %v2990, 0.5
  %v3247 = vmul.f32 %v2991, 0.5
  %v3248 = vmul.f32 %v2992, 0.5
  %v3249 = vmul.f32 %v2993, 0.5
  %v3250 = vmul.f32 %v2994, 0.5
  %v3251 = vmul.f32 %v2995, 0.5
  %v3252 = vmul.f32 %v2996, 0.5
  %v3253 = vmul.f32 %v2997, 0.5
  %v3254 = vmul.f32 %v2998, 0.5
  %v3255 = vmul.f32 %v2999, 0.5
  %v3256 = vmul.f32 %v3000, 0.5
  %v3257 = vmul.f32 %v3001, 0.5
  %v3258 = vmul.f32 %v3002, 0.5
  %v3259 = vmul.f32 %v3003, 0.5
  %v3260 = vmul.f32 %v3004, 0.5
  %v3261 = vmul.f32 %v3005, 0.5
  %v3262 = vmul.f32 %v3006, 0.5
  %v3263 = vmul.f32 %v3007, 0.5
  %v3264 = vmul.f32 %v3008, 0.5
  %v3265 = vmul.f32 %v3009, 0.5
  %v3266 = vmul.f32 %v3010, 0.5
  %v3267 = vmul.f32 %v3011, 0.5
  %v3268 = vmul.f32 %v3012, 0.5
  %v3269 = vmul.f32 %v3013, 0.5
  %v3270 = vmul.f32 %v3014, 0.5
  %v3271 = vmul.f32 %v3015, 0.5
  %v3272 = vmul.f32 %v3016, 0.5
  %v3273 = vmul.f32 %v3017, 0.5
  %v3274 = vmul.f32 %v3018, 0.5
  %v3275 = vmul.f32 %v3019, 0.5
  %v3276 = vmul.f32 %v3020, 0.5
  %v3277 = vmul.f32 %v3021, 0.5
  %v3278 = vmul.f32 %v3022, 0.5
  %v3279 = vmul.f32 %v3023, 0.5
  %v3280 = vmul.f32 %v3024, 0.5
  %v3281 = vmul.f32 %v3025, 0.5
  %v3282 = vmul.f32 %v3026, 0.5
  %v3283 = vmul.f32 %v3027, 0.5
  %v3284 = vmul.f32 %v3028, 0.5
  %v3285 = vmul.f32 %v3029, 0.5
  %v3286 = vmul.f32 %v3030, 0.5
  %v3287 = vmul.f32 %v3031, 0.5
  %v3288 = vmul.f32 %v3032, 0.5
  %v3289 = vmul.f32 %v3033, 0.5
  %v3290 = vmul.f32 %v3034, 0.5
  %v3291 = vmul.f32 %v3035, 0.5
  %v3292 = vmul.f32 %v3036, 0.5
  %v3293 = vmul.f32 %v3037, 0.5
  %v3294 = vmul.f32 %v3038, 0.5
  %v3295 = vmul.f32 %v3039, 0.5
  %v3296 = vmul.f32 %v3040, 0.5
  %v3297 = vmul.f32 %v3041, 0.5
  %v3298 = vmul.f32 %v3042, 0.5
  %v3299 = vmul.f32 %v3043, 0.5
  %v3300 = vmul.f32 %v3044, 0.5
  %v3301 = vmul.f32 %v3045, 0.5
  %v3302 = vmul.f32 %v3046, 0.5
  %v3303 = vmul.f32 %v3047, 0.5
  %v3304 = vmul.f32 %v3048, 0.5
  %v3305 = vmul.f32 %v3049, 0.5
  %v3306 = vmul.f32 %v3050, 0.5
  %v3307 = vmul.f32 %v3051, 0.5
  %v3308 = vmul.f32 %v3052, 0.5
  %v3309 = vmul.f32 %v3053, 0.5
  %v3310 = vmul.f32 %v3054, 0.5
  %v3311 = vmul.f32 %v3055, 0.5
  %v3312 = vmul.f32 %v3056, 0.5
  %v3313 = vmul.f32 %v3057, 0.5
  %v3314 = vmul.f32 %v3058, 0.5
  %v3315 = vmul.f32 %v3059, 0.5
  %v3316 = vmul.f32 %v3060, 0.5
  %v3317 = vmul.f32 %v3061, 0.5
  %v3318 = vmul.f32 %v3062, 0.5
  %v3319 = vmul.f32 %v3063, 0.5
  %v3320 = vmul.f32 %v3064, 0.5
  %v3321 = vmul.f32 %v3065, 0.5
  %v3322 = vmul.f32 %v3066, 0.5
  %v3323 = vmul.f32 %v3067, 0.5
  %v3324 = vmul.f32 %v3068, 0.5
  %v3325 = vmul.f32 %v3069, 0.5
  %v3326 = vmul.f32 %v3070, 0.5
  %v3327 = vmul.f32 %v3071, 0.5
  %v3328 = vmul.f32 %v3072, 0.5
  %v3329 = vmul.f32 %v3073, 0.5
  %v3330 = vmul.f32 %v3074, 0.5
  %v3331 = vmul.f32 %v3075, 0.5
  %v3332 = vmul.f32 %v3076, 0.5
  %v3333 = vmul.f32 %v3077, 0.5
  %v3334 = vmul.f32 %v3078, 0.5
  %v3335 = vmul.f32 %v3079, 0.5
  %v3336 = vmul.f32 %v3080, 0.5
  %v3337 = vmul.f32 %v3081, 0.5
  %v3338 = vmul.f32 %v3082, 0.5
  %v3339 = vmul.f32 %v3083, 0.5
  %v3340 = vmul.f32 %v3084, 0.5
  %v3341 = vmul.f32 %v3085, 0.5
  %v3342 = vmul.f32 %v3086, 0.5
  %v3343 = vmul.f32 %v3087, 0.5
  %v3344 = vmul.f32 %v3088, 0.5
  %v3345 = vmul.f32 %v3089, 0.5
  %v3346 = vmul.f32 %v3090, 0.5
  %v3347 = vmul.f32 %v3091, 0.5
  %v3348 = vmul.f32 %v3092, 0.5
  %v3349 = vmul.f32 %v3093, 0.5
  %v3350 = vmul.f32 %v3094, 0.5
  %v3351 = vmul.f32 %v3095, 0.5
  %v3352 = vmul.f32 %v3096, 0.5
  %v3353 = vmul.f32 %v3097, 0.5
  %v3354 = vmul.f32 %v3098, 0.5
  %v3355 = vmul.f32 %v3099, 0.5
  %v3356 = vmul.f32 %v3100, 0.5
  %v3357 = vmul.f32 %v3101, 0.5
  %v3358 = vmul.f32 %v3102, 0.5
  %v3359 = vmul.f32 %v3103, 0.5
  %v3360 = vmul.f32 %v3104, 0.5
  %v3361 = vmul.f32 %v3105, 0.5
  %v3362 = vmul.f32 %v3106, 0.5
  %v3363 = vmul.f32 %v3107, 0.5
  %v3364 = vmul.f32 %v3108, 0.5
  %v3365 = vmul.f32 %v3109, 0.5
  %v3366 = vmul.f32 %v3110, 0.5
  %v3367 = vmul.f32 %v3111, 0.5
  %v3368 = vmul.f32 %v3112, 0.5
  %v3369 = vmul.f32 %v3113, 0.5
  %v3370 = vmul.f32 %v3114, 0.5
  %v3371 = vmul.f32 %v3115, 0.5
  %v3372 = vmul.f32 %v3116, 0.5
  %v3373 = vmul.f32 %v3117, 0.5
  %v3374 = vmul.f32 %v3118, 0.5
  %v3375 = vmul.f32 %v3119, 0.5
  %v3376 = vmul.f32 %v3120, 0.5
  %v3377 = vmul.f32 %v3121, 0.5
  %v3378 = vmul.f32 %v3122, 0.5
  %v3379 = vmul.f32 %v3123, 0.5
  %v3380 = vmul.f32 %v3124, 0.5
  %v3381 = vmul.f32 %v3125, 0.5
  %v3382 = vmul.f32 %v3126, 0.5
  %v3383 = vmul.f32 %v3127, 0.5
  %v3384 = vmul.f32 %v3128, 0.5
  %v3385 = vmul.f32 %v3129, 0.5
  %v3386 = vmul.f32 %v3130, 0.5
  %v3387 = vmul.f32 %v3131, 0.5
  %v3388 = vmul.f32 %v3132, 0.5
  %v3389 = vmul.f32 %v3133, 0.5
  %v3390 = vmul.f32 %v3134, 0.5
  %v3391 = vmul.f32 %v3135, 0.5
  %v3392 = vmul.f32 %v3136, 0.5
  %v3393 = vmul.f32 %v3137, 0.5
  %v3394 = vmul.f32 %v3138, 0.5
  %v3395 = vmul.f32 %v3139, 0.5
  %v3396 = vmul.f32 %v3140, 0.5
  %v3397 = vmul.f32 %v3141, 0.5
  %v3398 = vmul.f32 %v3142, 0.5
  %v3399 = vmul.f32 %v3143, 0.5
  %v3400 = vmul.f32 %v3144, 0.5
  %v3401 = vmul.f32 %v3145, 0.5
  %v3402 = vmul.f32 %v3146, 0.5
  %v3403 = vmul.f32 %v3147, 0.5
  %v3404 = vmul.f32 %v3148, 0.5
  %v3405 = vmul.f32 %v3149, 0.5
  %v3406 = vmul.f32 %v3150, 0.5
  %v3407 = vmul.f32 %v3151, 0.5
  %v3408 = vmul.f32 %v3152, 0.5
  %v3409 = vmul.f32 %v3153, 0.5
  %v3410 = vmul.f32 %v3154, 0.5
  %v3411 = vmul.f32 %v3155, 0.5
  %v3412 = vmul.f32 %v3156, 0.5
  %v3413 = vmul.f32 %v3157, 0.5
  %v3414 = vmul.f32 %v3158, 0.5
  %v3415 = vmul.f32 %v3159, 0.5
  %v3416 = vmul.f32 %v3160, 0.5
  %v3417 = vmul.f32 %v3161, 0.5
  %v3418 = vmul.f32 %v3162, 0.5
  %v3419 = vmul.f32 %v3163, 0.5
  %v3420 = vmul.f32 %v3164, 0.5
  %v3421 = vmul.f32 %v3165, 0.5
  %v3422 = vmul.f32 %v3166, 0.5
  %v3423 = vmul.f32 %v3167, 0.5
  %v3424 = vmul.f32 %v3168, 0.5
  %v3425 = vmul.f32 %v3169, 0.5
  %v3426 = vmul.f32 %v3170, 0.5
  %v3427 = vmul.f32 %v1381, %v3171
  %v3428 = vmul.f32 %v1384, %v3172
  %v3429 = vmul.f32 %v1389, %v3173
  %v3430 = vmul.f32 %v1392, %v3174
  %v3431 = vmul.f32 %v1397, %v3175
  %v3432 = vmul.f32 %v1400, %v3176
  %v3433 = vmul.f32 %v1405, %v3177
  %v3434 = vmul.f32 %v1408, %v3178
  %v3435 = vmul.f32 %v1413, %v3179
  %v3436 = vmul.f32 %v1416, %v3180
  %v3437 = vmul.f32 %v1421, %v3181
  %v3438 = vmul.f32 %v1424, %v3182
  %v3439 = vmul.f32 %v1429, %v3183
  %v3440 = vmul.f32 %v1432, %v3184
  %v3441 = vmul.f32 %v1437, %v3185
  %v3442 = vmul.f32 %v1440, %v3186
  %v3443 = vmul.f32 %v1445, %v3187
  %v3444 = vmul.f32 %v1448, %v3188
  %v3445 = vmul.f32 %v1453, %v3189
  %v3446 = vmul.f32 %v1456, %v3190
  %v3447 = vmul.f32 %v1461, %v3191
  %v3448 = vmul.f32 %v1464, %v3192
  %v3449 = vmul.f32 %v1469, %v3193
  %v3450 = vmul.f32 %v1472, %v3194
  %v3451 = vmul.f32 %v1477, %v3195
  %v3452 = vmul.f32 %v1480, %v3196
  %v3453 = vmul.f32 %v1485, %v3197
  %v3454 = vmul.f32 %v1488, %v3198
  %v3455 = vmul.f32 %v1493, %v3199
  %v3456 = vmul.f32 %v1496, %v3200
  %v3457 = vmul.f32 %v1501, %v3201
  %v3458 = vmul.f32 %v1504, %v3202
  %v3459 = vmul.f32 %v1509, %v3203
  %v3460 = vmul.f32 %v1512, %v3204
  %v3461 = vmul.f32 %v1517, %v3205
  %v3462 = vmul.f32 %v1520, %v3206
  %v3463 = vmul.f32 %v1525, %v3207
  %v3464 = vmul.f32 %v1528, %v3208
  %v3465 = vmul.f32 %v1533, %v3209
  %v3466 = vmul.f32 %v1536, %v3210
  %v3467 = vmul.f32 %v1541, %v3211
  %v3468 = vmul.f32 %v1544, %v3212
  %v3469 = vmul.f32 %v1549, %v3213
  %v3470 = vmul.f32 %v1552, %v3214
  %v3471 = vmul.f32 %v1557, %v3215
  %v3472 = vmul.f32 %v1560, %v3216
  %v3473 = vmul.f32 %v1565, %v3217
  %v3474 = vmul.f32 %v1568, %v3218
  %v3475 = vmul.f32 %v1573, %v3219
  %v3476 = vmul.f32 %v1576, %v3220
  %v3477 = vmul.f32 %v1581, %v3221
  %v3478 = vmul.f32 %v1584, %v3222
  %v3479 = vmul.f32 %v1589, %v3223
  %v3480 = vmul.f32 %v1592, %v3224
  %v3481 = vmul.f32 %v1597, %v3225
  %v3482 = vmul.f32 %v1600, %v3226
  %v3483 = vmul.f32 %v1605, %v3227
  %v3484 = vmul.f32 %v1608, %v3228
  %v3485 = vmul.f32 %v1613, %v3229
  %v3486 = vmul.f32 %v1616, %v3230
  %v3487 = vmul.f32 %v1621, %v3231
  %v3488 = vmul.f32 %v1624, %v3232
  %v3489 = vmul.f32 %v1629, %v3233
  %v3490 = vmul.f32 %v1632, %v3234
  %v3491 = vmul.f32 %v1637, %v3235
  %v3492 = vmul.f32 %v1640, %v3236
  %v3493 = vmul.f32 %v1645, %v3237
  %v3494 = vmul.f32 %v1648, %v3238
  %v3495 = vmul.f32 %v1653, %v3239
  %v3496 = vmul.f32 %v1656, %v3240
  %v3497 = vmul.f32 %v1661, %v3241
  %v3498 = vmul.f32 %v1664, %v3242
  %v3499 = vmul.f32 %v1669, %v3243
  %v3500 = vmul.f32 %v1672, %v3244
  %v3501 = vmul.f32 %v1677, %v3245
  %v3502 = vmul.f32 %v1680, %v3246
  %v3503 = vmul.f32 %v1685, %v3247
  %v3504 = vmul.f32 %v1688, %v3248
  %v3505 = vmul.f32 %v1693, %v3249
  %v3506 = vmul.f32 %v1696, %v3250
  %v3507 = vmul.f32 %v1701, %v3251
  %v3508 = vmul.f32 %v1704, %v3252
  %v3509 = vmul.f32 %v1709, %v3253
  %v3510 = vmul.f32 %v1712, %v3254
  %v3511 = vmul.f32 %v1717, %v3255
  %v3512 = vmul.f32 %v1720, %v3256
  %v3513 = vmul.f32 %v1725, %v3257
  %v3514 = vmul.f32 %v1728, %v3258
  %v3515 = vmul.f32 %v1733, %v3259
  %v3516 = vmul.f32 %v1736, %v3260
  %v3517 = vmul.f32 %v1741, %v3261
  %v3518 = vmul.f32 %v1744, %v3262
  %v3519 = vmul.f32 %v1749, %v3263
  %v3520 = vmul.f32 %v1752, %v3264
  %v3521 = vmul.f32 %v1757, %v3265
  %v3522 = vmul.f32 %v1760, %v3266
  %v3523 = vmul.f32 %v1765, %v3267
  %v3524 = vmul.f32 %v1768, %v3268
  %v3525 = vmul.f32 %v1773, %v3269
  %v3526 = vmul.f32 %v1776, %v3270
  %v3527 = vmul.f32 %v1781, %v3271
  %v3528 = vmul.f32 %v1784, %v3272
  %v3529 = vmul.f32 %v1789, %v3273
  %v3530 = vmul.f32 %v1792, %v3274
  %v3531 = vmul.f32 %v1797, %v3275
  %v3532 = vmul.f32 %v1800, %v3276
  %v3533 = vmul.f32 %v1805, %v3277
  %v3534 = vmul.f32 %v1808, %v3278
  %v3535 = vmul.f32 %v1813, %v3279
  %v3536 = vmul.f32 %v1816, %v3280
  %v3537 = vmul.f32 %v1821, %v3281
  %v3538 = vmul.f32 %v1824, %v3282
  %v3539 = vmul.f32 %v1829, %v3283
  %v3540 = vmul.f32 %v1832, %v3284
  %v3541 = vmul.f32 %v1837, %v3285
  %v3542 = vmul.f32 %v1840, %v3286
  %v3543 = vmul.f32 %v1845, %v3287
  %v3544 = vmul.f32 %v1848, %v3288
  %v3545 = vmul.f32 %v1853, %v3289
  %v3546 = vmul.f32 %v1856, %v3290
  %v3547 = vmul.f32 %v1861, %v3291
  %v3548 = vmul.f32 %v1864, %v3292
  %v3549 = vmul.f32 %v1869, %v3293
  %v3550 = vmul.f32 %v1872, %v3294
  %v3551 = vmul.f32 %v1877, %v3295
  %v3552 = vmul.f32 %v1880, %v3296
  %v3553 = vmul.f32 %v1885, %v3297
  %v3554 = vmul.f32 %v1888, %v3298
  %v3555 = vmul.f32 %v1893, %v3299
  %v3556 = vmul.f32 %v1896, %v3300
  %v3557 = vmul.f32 %v1901, %v3301
  %v3558 = vmul.f32 %v1904, %v3302
  %v3559 = vmul.f32 %v1909, %v3303
  %v3560 = vmul.f32 %v1912, %v3304
  %v3561 = vmul.f32 %v1917, %v3305
  %v3562 = vmul.f32 %v1920, %v3306
  %v3563 = vmul.f32 %v1925, %v3307
  %v3564 = vmul.f32 %v1928, %v3308
  %v3565 = vmul.f32 %v1933, %v3309
  %v3566 = vmul.f32 %v1936, %v3310
  %v3567 = vmul.f32 %v1941, %v3311
  %v3568 = vmul.f32 %v1944, %v3312
  %v3569 = vmul.f32 %v1949, %v3313
  %v3570 = vmul.f32 %v1952, %v3314
  %v3571 = vmul.f32 %v1957, %v3315
  %v3572 = vmul.f32 %v1960, %v3316
  %v3573 = vmul.f32 %v1965, %v3317
  %v3574 = vmul.f32 %v1968, %v3318
  %v3575 = vmul.f32 %v1973, %v3319
  %v3576 = vmul.f32 %v1976, %v3320
  %v3577 = vmul.f32 %v1981, %v3321
  %v3578 = vmul.f32 %v1984, %v3322
  %v3579 = vmul.f32 %v1989, %v3323
  %v3580 = vmul.f32 %v1992, %v3324
  %v3581 = vmul.f32 %v1997, %v3325
  %v3582 = vmul.f32 %v2000, %v3326
  %v3583 = vmul.f32 %v2005, %v3327
  %v3584 = vmul.f32 %v2008, %v3328
  %v3585 = vmul.f32 %v2013, %v3329
  %v3586 = vmul.f32 %v2016, %v3330
  %v3587 = vmul.f32 %v2021, %v3331
  %v3588 = vmul.f32 %v2024, %v3332
  %v3589 = vmul.f32 %v2029, %v3333
  %v3590 = vmul.f32 %v2032, %v3334
  %v3591 = vmul.f32 %v2037, %v3335
  %v3592 = vmul.f32 %v2040, %v3336
  %v3593 = vmul.f32 %v2045, %v3337
  %v3594 = vmul.f32 %v2048, %v3338
  %v3595 = vmul.f32 %v2053, %v3339
  %v3596 = vmul.f32 %v2056, %v3340
  %v3597 = vmul.f32 %v2061, %v3341
  %v3598 = vmul.f32 %v2064, %v3342
  %v3599 = vmul.f32 %v2069, %v3343
  %v3600 = vmul.f32 %v2072, %v3344
  %v3601 = vmul.f32 %v2077, %v3345
  %v3602 = vmul.f32 %v2080, %v3346
  %v3603 = vmul.f32 %v2085, %v3347
  %v3604 = vmul.f32 %v2088, %v3348
  %v3605 = vmul.f32 %v2093, %v3349
  %v3606 = vmul.f32 %v2096, %v3350
  %v3607 = vmul.f32 %v2101, %v3351
  %v3608 = vmul.f32 %v2104, %v3352
  %v3609 = vmul.f32 %v2109, %v3353
  %v3610 = vmul.f32 %v2112, %v3354
  %v3611 = vmul.f32 %v2117, %v3355
  %v3612 = vmul.f32 %v2120, %v3356
  %v3613 = vmul.f32 %v2125, %v3357
  %v3614 = vmul.f32 %v2128, %v3358
  %v3615 = vmul.f32 %v2133, %v3359
  %v3616 = vmul.f32 %v2136, %v3360
  %v3617 = vmul.f32 %v2141, %v3361
  %v3618 = vmul.f32 %v2144, %v3362
  %v3619 = vmul.f32 %v2149, %v3363
  %v3620 = vmul.f32 %v2152, %v3364
  %v3621 = vmul.f32 %v2157, %v3365
  %v3622 = vmul.f32 %v2160, %v3366
  %v3623 = vmul.f32 %v2165, %v3367
  %v3624 = vmul.f32 %v2168, %v3368
  %v3625 = vmul.f32 %v2173, %v3369
  %v3626 = vmul.f32 %v2176, %v3370
  %v3627 = vmul.f32 %v2181, %v3371
  %v3628 = vmul.f32 %v2184, %v3372
  %v3629 = vmul.f32 %v2189, %v3373
  %v3630 = vmul.f32 %v2192, %v3374
  %v3631 = vmul.f32 %v2197, %v3375
  %v3632 = vmul.f32 %v2200, %v3376
  %v3633 = vmul.f32 %v2205, %v3377
  %v3634 = vmul.f32 %v2208, %v3378
  %v3635 = vmul.f32 %v2213, %v3379
  %v3636 = vmul.f32 %v2216, %v3380
  %v3637 = vmul.f32 %v2221, %v3381
  %v3638 = vmul.f32 %v2224, %v3382
  %v3639 = vmul.f32 %v2229, %v3383
  %v3640 = vmul.f32 %v2232, %v3384
  %v3641 = vmul.f32 %v2237, %v3385
  %v3642 = vmul.f32 %v2240, %v3386
  %v3643 = vmul.f32 %v2245, %v3387
  %v3644 = vmul.f32 %v2248, %v3388
  %v3645 = vmul.f32 %v2253, %v3389
  %v3646 = vmul.f32 %v2256, %v3390
  %v3647 = vmul.f32 %v2261, %v3391
  %v3648 = vmul.f32 %v2264, %v3392
  %v3649 = vmul.f32 %v2269, %v3393
  %v3650 = vmul.f32 %v2272, %v3394
  %v3651 = vmul.f32 %v2277, %v3395
  %v3652 = vmul.f32 %v2280, %v3396
  %v3653 = vmul.f32 %v2285, %v3397
  %v3654 = vmul.f32 %v2288, %v3398
  %v3655 = vmul.f32 %v2293, %v3399
  %v3656 = vmul.f32 %v2296, %v3400
  %v3657 = vmul.f32 %v2301, %v3401
  %v3658 = vmul.f32 %v2304, %v3402
  %v3659 = vmul.f32 %v2309, %v3403
  %v3660 = vmul.f32 %v2312, %v3404
  %v3661 = vmul.f32 %v2317, %v3405
  %v3662 = vmul.f32 %v2320, %v3406
  %v3663 = vmul.f32 %v2325, %v3407
  %v3664 = vmul.f32 %v2328, %v3408
  %v3665 = vmul.f32 %v2333, %v3409
  %v3666 = vmul.f32 %v2336, %v3410
  %v3667 = vmul.f32 %v2341, %v3411
  %v3668 = vmul.f32 %v2344, %v3412
  %v3669 = vmul.f32 %v2349, %v3413
  %v3670 = vmul.f32 %v2352, %v3414
  %v3671 = vmul.f32 %v2357, %v3415
  %v3672 = vmul.f32 %v2360, %v3416
  %v3673 = vmul.f32 %v2365, %v3417
  %v3674 = vmul.f32 %v2368, %v3418
  %v3675 = vmul.f32 %v2373, %v3419
  %v3676 = vmul.f32 %v2376, %v3420
  %v3677 = vmul.f32 %v2381, %v3421
  %v3678 = vmul.f32 %v2384, %v3422
  %v3679 = vmul.f32 %v2389, %v3423
  %v3680 = vmul.f32 %v2392, %v3424
  %v3681 = vmul.f32 %v2397, %v3425
  %v3682 = vmul.f32 %v2400, %v3426
  %v3683 = vld [vmem:[%s3] sm:$0xff]
  %v3684 = vld [vmem:[%s3 + $0x8] sm:$0xff]
  %v3685 = vld [vmem:[%s3 + $0x10] sm:$0xff]
  %v3686 = vld [vmem:[%s3 + $0x18] sm:$0xff]
  %v3687 = vld [vmem:[%s3 + $0x20] sm:$0xff]
  %v3688 = vld [vmem:[%s3 + $0x28] sm:$0xff]
  %v3689 = vld [vmem:[%s3 + $0x30] sm:$0xff]
  %v3690 = vld [vmem:[%s3 + $0x38] sm:$0xff]
  %v3691 = vpack.c.bf16 %v3428, %v3427
  %v3692 = vpack.c.bf16 %v3430, %v3429
  %v3693 = vpack.c.bf16 %v3432, %v3431
  %v3694 = vpack.c.bf16 %v3434, %v3433
  %v3695 = vpack.c.bf16 %v3436, %v3435
  %v3696 = vpack.c.bf16 %v3438, %v3437
  %v3697 = vpack.c.bf16 %v3440, %v3439
  %v3698 = vpack.c.bf16 %v3442, %v3441
  %v3699 = vpack.c.bf16 %v3444, %v3443
  %v3700 = vpack.c.bf16 %v3446, %v3445
  %v3701 = vpack.c.bf16 %v3448, %v3447
  %v3702 = vpack.c.bf16 %v3450, %v3449
  %v3703 = vpack.c.bf16 %v3452, %v3451
  %v3704 = vpack.c.bf16 %v3454, %v3453
  %v3705 = vpack.c.bf16 %v3456, %v3455
  %v3706 = vpack.c.bf16 %v3458, %v3457
  %v3707 = vpack.c.bf16 %v3460, %v3459
  %v3708 = vpack.c.bf16 %v3462, %v3461
  %v3709 = vpack.c.bf16 %v3464, %v3463
  %v3710 = vpack.c.bf16 %v3466, %v3465
  %v3711 = vpack.c.bf16 %v3468, %v3467
  %v3712 = vpack.c.bf16 %v3470, %v3469
  %v3713 = vpack.c.bf16 %v3472, %v3471
  %v3714 = vpack.c.bf16 %v3474, %v3473
  %v3715 = vpack.c.bf16 %v3476, %v3475
  %v3716 = vpack.c.bf16 %v3478, %v3477
  %v3717 = vpack.c.bf16 %v3480, %v3479
  %v3718 = vpack.c.bf16 %v3482, %v3481
  %v3719 = vpack.c.bf16 %v3484, %v3483
  %v3720 = vpack.c.bf16 %v3486, %v3485
  %v3721 = vpack.c.bf16 %v3488, %v3487
  %v3722 = vpack.c.bf16 %v3490, %v3489
  %v3723 = vpack.c.bf16 %v3492, %v3491
  %v3724 = vpack.c.bf16 %v3494, %v3493
  %v3725 = vpack.c.bf16 %v3496, %v3495
  %v3726 = vpack.c.bf16 %v3498, %v3497
  %v3727 = vpack.c.bf16 %v3500, %v3499
  %v3728 = vpack.c.bf16 %v3502, %v3501
  %v3729 = vpack.c.bf16 %v3504, %v3503
  %v3730 = vpack.c.bf16 %v3506, %v3505
  %v3731 = vpack.c.bf16 %v3508, %v3507
  %v3732 = vpack.c.bf16 %v3510, %v3509
  %v3733 = vpack.c.bf16 %v3512, %v3511
  %v3734 = vpack.c.bf16 %v3514, %v3513
  %v3735 = vpack.c.bf16 %v3516, %v3515
  %v3736 = vpack.c.bf16 %v3518, %v3517
  %v3737 = vpack.c.bf16 %v3520, %v3519
  %v3738 = vpack.c.bf16 %v3522, %v3521
  %v3739 = vpack.c.bf16 %v3524, %v3523
  %v3740 = vpack.c.bf16 %v3526, %v3525
  %v3741 = vpack.c.bf16 %v3528, %v3527
  %v3742 = vpack.c.bf16 %v3530, %v3529
  %v3743 = vpack.c.bf16 %v3532, %v3531
  %v3744 = vpack.c.bf16 %v3534, %v3533
  %v3745 = vpack.c.bf16 %v3536, %v3535
  %v3746 = vpack.c.bf16 %v3538, %v3537
  %v3747 = vpack.c.bf16 %v3540, %v3539
  %v3748 = vpack.c.bf16 %v3542, %v3541
  %v3749 = vpack.c.bf16 %v3544, %v3543
  %v3750 = vpack.c.bf16 %v3546, %v3545
  %v3751 = vpack.c.bf16 %v3548, %v3547
  %v3752 = vpack.c.bf16 %v3550, %v3549
  %v3753 = vpack.c.bf16 %v3552, %v3551
  %v3754 = vpack.c.bf16 %v3554, %v3553
  %v3755 = vpack.c.bf16 %v3556, %v3555
  %v3756 = vpack.c.bf16 %v3558, %v3557
  %v3757 = vpack.c.bf16 %v3560, %v3559
  %v3758 = vpack.c.bf16 %v3562, %v3561
  %v3759 = vpack.c.bf16 %v3564, %v3563
  %v3760 = vpack.c.bf16 %v3566, %v3565
  %v3761 = vpack.c.bf16 %v3568, %v3567
  %v3762 = vpack.c.bf16 %v3570, %v3569
  %v3763 = vpack.c.bf16 %v3572, %v3571
  %v3764 = vpack.c.bf16 %v3574, %v3573
  %v3765 = vpack.c.bf16 %v3576, %v3575
  %v3766 = vpack.c.bf16 %v3578, %v3577
  %v3767 = vpack.c.bf16 %v3580, %v3579
  %v3768 = vpack.c.bf16 %v3582, %v3581
  %v3769 = vpack.c.bf16 %v3584, %v3583
  %v3770 = vpack.c.bf16 %v3586, %v3585
  %v3771 = vpack.c.bf16 %v3588, %v3587
  %v3772 = vpack.c.bf16 %v3590, %v3589
  %v3773 = vpack.c.bf16 %v3592, %v3591
  %v3774 = vpack.c.bf16 %v3594, %v3593
  %v3775 = vpack.c.bf16 %v3596, %v3595
  %v3776 = vpack.c.bf16 %v3598, %v3597
  %v3777 = vpack.c.bf16 %v3600, %v3599
  %v3778 = vpack.c.bf16 %v3602, %v3601
  %v3779 = vpack.c.bf16 %v3604, %v3603
  %v3780 = vpack.c.bf16 %v3606, %v3605
  %v3781 = vpack.c.bf16 %v3608, %v3607
  %v3782 = vpack.c.bf16 %v3610, %v3609
  %v3783 = vpack.c.bf16 %v3612, %v3611
  %v3784 = vpack.c.bf16 %v3614, %v3613
  %v3785 = vpack.c.bf16 %v3616, %v3615
  %v3786 = vpack.c.bf16 %v3618, %v3617
  %v3787 = vpack.c.bf16 %v3620, %v3619
  %v3788 = vpack.c.bf16 %v3622, %v3621
  %v3789 = vpack.c.bf16 %v3624, %v3623
  %v3790 = vpack.c.bf16 %v3626, %v3625
  %v3791 = vpack.c.bf16 %v3628, %v3627
  %v3792 = vpack.c.bf16 %v3630, %v3629
  %v3793 = vpack.c.bf16 %v3632, %v3631
  %v3794 = vpack.c.bf16 %v3634, %v3633
  %v3795 = vpack.c.bf16 %v3636, %v3635
  %v3796 = vpack.c.bf16 %v3638, %v3637
  %v3797 = vpack.c.bf16 %v3640, %v3639
  %v3798 = vpack.c.bf16 %v3642, %v3641
  %v3799 = vpack.c.bf16 %v3644, %v3643
  %v3800 = vpack.c.bf16 %v3646, %v3645
  %v3801 = vpack.c.bf16 %v3648, %v3647
  %v3802 = vpack.c.bf16 %v3650, %v3649
  %v3803 = vpack.c.bf16 %v3652, %v3651
  %v3804 = vpack.c.bf16 %v3654, %v3653
  %v3805 = vpack.c.bf16 %v3656, %v3655
  %v3806 = vpack.c.bf16 %v3658, %v3657
  %v3807 = vpack.c.bf16 %v3660, %v3659
  %v3808 = vpack.c.bf16 %v3662, %v3661
  %v3809 = vpack.c.bf16 %v3664, %v3663
  %v3810 = vpack.c.bf16 %v3666, %v3665
  %v3811 = vpack.c.bf16 %v3668, %v3667
  %v3812 = vpack.c.bf16 %v3670, %v3669
  %v3813 = vpack.c.bf16 %v3672, %v3671
  %v3814 = vpack.c.bf16 %v3674, %v3673
  %v3815 = vpack.c.bf16 %v3676, %v3675
  %v3816 = vpack.c.bf16 %v3678, %v3677
  %v3817 = vpack.c.bf16 %v3680, %v3679
  %v3818 = vpack.c.bf16 %v3682, %v3681
  %v3827 = vunpack.c.l.b16 %v3683
  %v3828 = vunpack.c.h.b16 %v3683
  %v3829 = vunpack.c.l.b16 %v3684
  %v3830 = vunpack.c.h.b16 %v3684
  %v3831 = vunpack.c.l.b16 %v3685
  %v3832 = vunpack.c.h.b16 %v3685
  %v3833 = vunpack.c.l.b16 %v3686
  %v3834 = vunpack.c.h.b16 %v3686
  %v3835 = vunpack.c.l.b16 %v3687
  %v3836 = vunpack.c.h.b16 %v3687
  %v3837 = vunpack.c.l.b16 %v3688
  %v3838 = vunpack.c.h.b16 %v3688
  %v3839 = vunpack.c.l.b16 %v3689
  %v3840 = vunpack.c.h.b16 %v3689
  %v3841 = vunpack.c.l.b16 %v3690
  %v3842 = vunpack.c.h.b16 %v3690
  %v3843 = vpack.c.b16 %v3827, %v3827
  %v3844 = vpack.c.b16 %v3828, %v3828
  %v3845 = vpack.c.b16 %v3829, %v3829
  %v3846 = vpack.c.b16 %v3830, %v3830
  %v3847 = vpack.c.b16 %v3831, %v3831
  %v3848 = vpack.c.b16 %v3832, %v3832
  %v3849 = vpack.c.b16 %v3833, %v3833
  %v3850 = vpack.c.b16 %v3834, %v3834
  %v3851 = vpack.c.b16 %v3835, %v3835
  %v3852 = vpack.c.b16 %v3836, %v3836
  %v3853 = vpack.c.b16 %v3837, %v3837
  %v3854 = vpack.c.b16 %v3838, %v3838
  %v3855 = vpack.c.b16 %v3839, %v3839
  %v3856 = vpack.c.b16 %v3840, %v3840
  %v3857 = vpack.c.b16 %v3841, %v3841
  %v3858 = vpack.c.b16 %v3842, %v3842
  %3875 = vmatprep.subr.bf16.mxu0 0
  %3876 = vmatpush1.bf16.msra.mxu0 %v3691
  %3877 = vmatprep.subr.bf16.mxu0 0
  %3878 = vmatpush1.bf16.msra.mxu0 %v3692
  %3879 = vmatprep.subr.bf16.mxu0 0
  %3880 = vmatpush1.bf16.msra.mxu0 %v3693
  %3881 = vmatprep.subr.bf16.mxu0 0
  %3882 = vmatpush1.bf16.msra.mxu0 %v3694
  %3883 = vmatprep.subr.bf16.mxu0 0
  %3884 = vmatpush1.bf16.msra.mxu0 %v3695
  %3885 = vmatprep.subr.bf16.mxu0 0
  %3886 = vmatpush1.bf16.msra.mxu0 %v3696
  %3887 = vmatprep.subr.bf16.mxu0 0
  %3888 = vmatpush1.bf16.msra.mxu0 %v3697
  %3889 = vmatprep.subr.bf16.mxu0 0
  %3890 = vmatpush1.bf16.msra.mxu0 %v3698
  %3891 = vmatprep.subr.bf16.mxu0 0
  %3892 = vmatpush1.bf16.msra.mxu0 %v3699
  %3893 = vmatprep.subr.bf16.mxu0 0
  %3894 = vmatpush1.bf16.msra.mxu0 %v3700
  %3895 = vmatprep.subr.bf16.mxu0 0
  %3896 = vmatpush1.bf16.msra.mxu0 %v3701
  %3897 = vmatprep.subr.bf16.mxu0 0
  %3898 = vmatpush1.bf16.msra.mxu0 %v3702
  %3899 = vmatprep.subr.bf16.mxu0 0
  %3900 = vmatpush1.bf16.msra.mxu0 %v3703
  %3901 = vmatprep.subr.bf16.mxu0 0
  %3902 = vmatpush1.bf16.msra.mxu0 %v3704
  %3903 = vmatprep.subr.bf16.mxu0 0
  %3904 = vmatpush1.bf16.msra.mxu0 %v3705
  %3905 = vmatprep.subr.bf16.mxu0 0
  %3906 = vmatpush1.bf16.msra.mxu0 %v3706
  %3907 = vmatprep.mubr.bf16.mxu0 %v3844
  %3908 = vmatmul.mubr.bf16.gmra.mrb[0].mxu0 %v3843
  %v3909 = vpop.f32.mrb[0].mxu0
  %v3910 = vadd.f32 0.0, %v3909
  %v3911 = vpop.f32.mrb[0].mxu0
  %v3912 = vpop.f32.mrb[0].mxu0
  %v3913 = vpop.f32.mrb[0].mxu0
  %3914 = vdwg.mxu0
  %3915 = vmatprep.subr.bf16.mxu0 0
  %3916 = vmatpush1.bf16.msra.mxu0 %v3707
  %3917 = vmatprep.subr.bf16.mxu0 0
  %3918 = vmatpush1.bf16.msra.mxu0 %v3708
  %3919 = vmatprep.subr.bf16.mxu0 0
  %3920 = vmatpush1.bf16.msra.mxu0 %v3709
  %3921 = vmatprep.subr.bf16.mxu0 0
  %3922 = vmatpush1.bf16.msra.mxu0 %v3710
  %3923 = vmatprep.subr.bf16.mxu0 0
  %3924 = vmatpush1.bf16.msra.mxu0 %v3711
  %3925 = vmatprep.subr.bf16.mxu0 0
  %3926 = vmatpush1.bf16.msra.mxu0 %v3712
  %3927 = vmatprep.subr.bf16.mxu0 0
  %3928 = vmatpush1.bf16.msra.mxu0 %v3713
  %3929 = vmatprep.subr.bf16.mxu0 0
  %3930 = vmatpush1.bf16.msra.mxu0 %v3714
  %3931 = vmatprep.subr.bf16.mxu0 0
  %3932 = vmatpush1.bf16.msra.mxu0 %v3715
  %3933 = vmatprep.subr.bf16.mxu0 0
  %3934 = vmatpush1.bf16.msra.mxu0 %v3716
  %3935 = vmatprep.subr.bf16.mxu0 0
  %3936 = vmatpush1.bf16.msra.mxu0 %v3717
  %3937 = vmatprep.subr.bf16.mxu0 0
  %3938 = vmatpush1.bf16.msra.mxu0 %v3718
  %3939 = vmatprep.subr.bf16.mxu0 0
  %3940 = vmatpush1.bf16.msra.mxu0 %v3719
  %3941 = vmatprep.subr.bf16.mxu0 0
  %3942 = vmatpush1.bf16.msra.mxu0 %v3720
  %3943 = vmatprep.subr.bf16.mxu0 0
  %3944 = vmatpush1.bf16.msra.mxu0 %v3721
  %3945 = vmatprep.subr.bf16.mxu0 0
  %3946 = vmatpush1.bf16.msra.mxu0 %v3722
  %3947 = vmatprep.mubr.bf16.mxu0 %v3846
  %3948 = vmatmul.mubr.bf16.gmra.mrb[0].mxu0 %v3845
  %v3949 = vpop.f32.mrb[0].mxu0
  %v3950 = vadd.f32 %v3910, %v3949
  %v3951 = vpop.f32.mrb[0].mxu0
  %v3952 = vpop.f32.mrb[0].mxu0
  %v3953 = vpop.f32.mrb[0].mxu0
  %3954 = vdwg.mxu0
  %3955 = vmatprep.subr.bf16.mxu0 0
  %3956 = vmatpush1.bf16.msra.mxu0 %v3723
  %3957 = vmatprep.subr.bf16.mxu0 0
  %3958 = vmatpush1.bf16.msra.mxu0 %v3724
  %3959 = vmatprep.subr.bf16.mxu0 0
  %3960 = vmatpush1.bf16.msra.mxu0 %v3725
  %3961 = vmatprep.subr.bf16.mxu0 0
  %3962 = vmatpush1.bf16.msra.mxu0 %v3726
  %3963 = vmatprep.subr.bf16.mxu0 0
  %3964 = vmatpush1.bf16.msra.mxu0 %v3727
  %3965 = vmatprep.subr.bf16.mxu0 0
  %3966 = vmatpush1.bf16.msra.mxu0 %v3728
  %3967 = vmatprep.subr.bf16.mxu0 0
  %3968 = vmatpush1.bf16.msra.mxu0 %v3729
  %3969 = vmatprep.subr.bf16.mxu0 0
  %3970 = vmatpush1.bf16.msra.mxu0 %v3730
  %3971 = vmatprep.subr.bf16.mxu0 0
  %3972 = vmatpush1.bf16.msra.mxu0 %v3731
  %3973 = vmatprep.subr.bf16.mxu0 0
  %3974 = vmatpush1.bf16.msra.mxu0 %v3732
  %3975 = vmatprep.subr.bf16.mxu0 0
  %3976 = vmatpush1.bf16.msra.mxu0 %v3733
  %3977 = vmatprep.subr.bf16.mxu0 0
  %3978 = vmatpush1.bf16.msra.mxu0 %v3734
  %3979 = vmatprep.subr.bf16.mxu0 0
  %3980 = vmatpush1.bf16.msra.mxu0 %v3735
  %3981 = vmatprep.subr.bf16.mxu0 0
  %3982 = vmatpush1.bf16.msra.mxu0 %v3736
  %3983 = vmatprep.subr.bf16.mxu0 0
  %3984 = vmatpush1.bf16.msra.mxu0 %v3737
  %3985 = vmatprep.subr.bf16.mxu0 0
  %3986 = vmatpush1.bf16.msra.mxu0 %v3738
  %3987 = vmatprep.mubr.bf16.mxu0 %v3848
  %3988 = vmatmul.mubr.bf16.gmra.mrb[0].mxu0 %v3847
  %v3989 = vpop.f32.mrb[0].mxu0
  %v3990 = vadd.f32 %v3950, %v3989
  %v3991 = vpop.f32.mrb[0].mxu0
  %v3992 = vpop.f32.mrb[0].mxu0
  %v3993 = vpop.f32.mrb[0].mxu0
  %3994 = vdwg.mxu0
  %3995 = vmatprep.subr.bf16.mxu0 0
  %3996 = vmatpush1.bf16.msra.mxu0 %v3739
  %3997 = vmatprep.subr.bf16.mxu0 0
  %3998 = vmatpush1.bf16.msra.mxu0 %v3740
  %3999 = vmatprep.subr.bf16.mxu0 0
  %4000 = vmatpush1.bf16.msra.mxu0 %v3741
  %4001 = vmatprep.subr.bf16.mxu0 0
  %4002 = vmatpush1.bf16.msra.mxu0 %v3742
  %4003 = vmatprep.subr.bf16.mxu0 0
  %4004 = vmatpush1.bf16.msra.mxu0 %v3743
  %4005 = vmatprep.subr.bf16.mxu0 0
  %4006 = vmatpush1.bf16.msra.mxu0 %v3744
  %4007 = vmatprep.subr.bf16.mxu0 0
  %4008 = vmatpush1.bf16.msra.mxu0 %v3745
  %4009 = vmatprep.subr.bf16.mxu0 0
  %4010 = vmatpush1.bf16.msra.mxu0 %v3746
  %4011 = vmatprep.subr.bf16.mxu0 0
  %4012 = vmatpush1.bf16.msra.mxu0 %v3747
  %4013 = vmatprep.subr.bf16.mxu0 0
  %4014 = vmatpush1.bf16.msra.mxu0 %v3748
  %4015 = vmatprep.subr.bf16.mxu0 0
  %4016 = vmatpush1.bf16.msra.mxu0 %v3749
  %4017 = vmatprep.subr.bf16.mxu0 0
  %4018 = vmatpush1.bf16.msra.mxu0 %v3750
  %4019 = vmatprep.subr.bf16.mxu0 0
  %4020 = vmatpush1.bf16.msra.mxu0 %v3751
  %4021 = vmatprep.subr.bf16.mxu0 0
  %4022 = vmatpush1.bf16.msra.mxu0 %v3752
  %4023 = vmatprep.subr.bf16.mxu0 0
  %4024 = vmatpush1.bf16.msra.mxu0 %v3753
  %4025 = vmatprep.subr.bf16.mxu0 0
  %4026 = vmatpush1.bf16.msra.mxu0 %v3754
  %4027 = vmatprep.mubr.bf16.mxu0 %v3850
  %4028 = vmatmul.mubr.bf16.gmra.mrb[0].mxu0 %v3849
  %v4029 = vpop.f32.mrb[0].mxu0
  %v4030 = vadd.f32 %v3990, %v4029
  %v4031 = vpop.f32.mrb[0].mxu0
  %v4032 = vpop.f32.mrb[0].mxu0
  %v4033 = vpop.f32.mrb[0].mxu0
  %4034 = vdwg.mxu0
  %4035 = vmatprep.subr.bf16.mxu0 0
  %4036 = vmatpush1.bf16.msra.mxu0 %v3755
  %4037 = vmatprep.subr.bf16.mxu0 0
  %4038 = vmatpush1.bf16.msra.mxu0 %v3756
  %4039 = vmatprep.subr.bf16.mxu0 0
  %4040 = vmatpush1.bf16.msra.mxu0 %v3757
  %4041 = vmatprep.subr.bf16.mxu0 0
  %4042 = vmatpush1.bf16.msra.mxu0 %v3758
  %4043 = vmatprep.subr.bf16.mxu0 0
  %4044 = vmatpush1.bf16.msra.mxu0 %v3759
  %4045 = vmatprep.subr.bf16.mxu0 0
  %4046 = vmatpush1.bf16.msra.mxu0 %v3760
  %4047 = vmatprep.subr.bf16.mxu0 0
  %4048 = vmatpush1.bf16.msra.mxu0 %v3761
  %4049 = vmatprep.subr.bf16.mxu0 0
  %4050 = vmatpush1.bf16.msra.mxu0 %v3762
  %4051 = vmatprep.subr.bf16.mxu0 0
  %4052 = vmatpush1.bf16.msra.mxu0 %v3763
  %4053 = vmatprep.subr.bf16.mxu0 0
  %4054 = vmatpush1.bf16.msra.mxu0 %v3764
  %4055 = vmatprep.subr.bf16.mxu0 0
  %4056 = vmatpush1.bf16.msra.mxu0 %v3765
  %4057 = vmatprep.subr.bf16.mxu0 0
  %4058 = vmatpush1.bf16.msra.mxu0 %v3766
  %4059 = vmatprep.subr.bf16.mxu0 0
  %4060 = vmatpush1.bf16.msra.mxu0 %v3767
  %4061 = vmatprep.subr.bf16.mxu0 0
  %4062 = vmatpush1.bf16.msra.mxu0 %v3768
  %4063 = vmatprep.subr.bf16.mxu0 0
  %4064 = vmatpush1.bf16.msra.mxu0 %v3769
  %4065 = vmatprep.subr.bf16.mxu0 0
  %4066 = vmatpush1.bf16.msra.mxu0 %v3770
  %4067 = vmatprep.mubr.bf16.mxu0 %v3852
  %4068 = vmatmul.mubr.bf16.gmra.mrb[0].mxu0 %v3851
  %v4069 = vpop.f32.mrb[0].mxu0
  %v4070 = vadd.f32 %v4030, %v4069
  %v4071 = vpop.f32.mrb[0].mxu0
  %v4072 = vpop.f32.mrb[0].mxu0
  %v4073 = vpop.f32.mrb[0].mxu0
  %4074 = vdwg.mxu0
  %4075 = vmatprep.subr.bf16.mxu0 0
  %4076 = vmatpush1.bf16.msra.mxu0 %v3771
  %4077 = vmatprep.subr.bf16.mxu0 0
  %4078 = vmatpush1.bf16.msra.mxu0 %v3772
  %4079 = vmatprep.subr.bf16.mxu0 0
  %4080 = vmatpush1.bf16.msra.mxu0 %v3773
  %4081 = vmatprep.subr.bf16.mxu0 0
  %4082 = vmatpush1.bf16.msra.mxu0 %v3774
  %4083 = vmatprep.subr.bf16.mxu0 0
  %4084 = vmatpush1.bf16.msra.mxu0 %v3775
  %4085 = vmatprep.subr.bf16.mxu0 0
  %4086 = vmatpush1.bf16.msra.mxu0 %v3776
  %4087 = vmatprep.subr.bf16.mxu0 0
  %4088 = vmatpush1.bf16.msra.mxu0 %v3777
  %4089 = vmatprep.subr.bf16.mxu0 0
  %4090 = vmatpush1.bf16.msra.mxu0 %v3778
  %4091 = vmatprep.subr.bf16.mxu0 0
  %4092 = vmatpush1.bf16.msra.mxu0 %v3779
  %4093 = vmatprep.subr.bf16.mxu0 0
  %4094 = vmatpush1.bf16.msra.mxu0 %v3780
  %4095 = vmatprep.subr.bf16.mxu0 0
  %4096 = vmatpush1.bf16.msra.mxu0 %v3781
  %4097 = vmatprep.subr.bf16.mxu0 0
  %4098 = vmatpush1.bf16.msra.mxu0 %v3782
  %4099 = vmatprep.subr.bf16.mxu0 0
  %4100 = vmatpush1.bf16.msra.mxu0 %v3783
  %4101 = vmatprep.subr.bf16.mxu0 0
  %4102 = vmatpush1.bf16.msra.mxu0 %v3784
  %4103 = vmatprep.subr.bf16.mxu0 0
  %4104 = vmatpush1.bf16.msra.mxu0 %v3785
  %4105 = vmatprep.subr.bf16.mxu0 0
  %4106 = vmatpush1.bf16.msra.mxu0 %v3786
  %4107 = vmatprep.mubr.bf16.mxu0 %v3854
  %4108 = vmatmul.mubr.bf16.gmra.mrb[0].mxu0 %v3853
  %v4109 = vpop.f32.mrb[0].mxu0
  %v4110 = vadd.f32 %v4070, %v4109
  %v4111 = vpop.f32.mrb[0].mxu0
  %v4112 = vpop.f32.mrb[0].mxu0
  %v4113 = vpop.f32.mrb[0].mxu0
  %4114 = vdwg.mxu0
  %4115 = vmatprep.subr.bf16.mxu0 0
  %4116 = vmatpush1.bf16.msra.mxu0 %v3787
  %4117 = vmatprep.subr.bf16.mxu0 0
  %4118 = vmatpush1.bf16.msra.mxu0 %v3788
  %4119 = vmatprep.subr.bf16.mxu0 0
  %4120 = vmatpush1.bf16.msra.mxu0 %v3789
  %4121 = vmatprep.subr.bf16.mxu0 0
  %4122 = vmatpush1.bf16.msra.mxu0 %v3790
  %4123 = vmatprep.subr.bf16.mxu0 0
  %4124 = vmatpush1.bf16.msra.mxu0 %v3791
  %4125 = vmatprep.subr.bf16.mxu0 0
  %4126 = vmatpush1.bf16.msra.mxu0 %v3792
  %4127 = vmatprep.subr.bf16.mxu0 0
  %4128 = vmatpush1.bf16.msra.mxu0 %v3793
  %4129 = vmatprep.subr.bf16.mxu0 0
  %4130 = vmatpush1.bf16.msra.mxu0 %v3794
  %4131 = vmatprep.subr.bf16.mxu0 0
  %4132 = vmatpush1.bf16.msra.mxu0 %v3795
  %4133 = vmatprep.subr.bf16.mxu0 0
  %4134 = vmatpush1.bf16.msra.mxu0 %v3796
  %4135 = vmatprep.subr.bf16.mxu0 0
  %4136 = vmatpush1.bf16.msra.mxu0 %v3797
  %4137 = vmatprep.subr.bf16.mxu0 0
  %4138 = vmatpush1.bf16.msra.mxu0 %v3798
  %4139 = vmatprep.subr.bf16.mxu0 0
  %4140 = vmatpush1.bf16.msra.mxu0 %v3799
  %4141 = vmatprep.subr.bf16.mxu0 0
  %4142 = vmatpush1.bf16.msra.mxu0 %v3800
  %4143 = vmatprep.subr.bf16.mxu0 0
  %4144 = vmatpush1.bf16.msra.mxu0 %v3801
  %4145 = vmatprep.subr.bf16.mxu0 0
  %4146 = vmatpush1.bf16.msra.mxu0 %v3802
  %4147 = vmatprep.mubr.bf16.mxu0 %v3856
  %4148 = vmatmul.mubr.bf16.gmra.mrb[0].mxu0 %v3855
  %v4149 = vpop.f32.mrb[0].mxu0
  %v4150 = vadd.f32 %v4110, %v4149
  %v4151 = vpop.f32.mrb[0].mxu0
  %v4152 = vpop.f32.mrb[0].mxu0
  %v4153 = vpop.f32.mrb[0].mxu0
  %4154 = vdwg.mxu0
  %4155 = vmatprep.subr.bf16.mxu0 0
  %4156 = vmatpush1.bf16.msra.mxu0 %v3803
  %4157 = vmatprep.subr.bf16.mxu0 0
  %4158 = vmatpush1.bf16.msra.mxu0 %v3804
  %4159 = vmatprep.subr.bf16.mxu0 0
  %4160 = vmatpush1.bf16.msra.mxu0 %v3805
  %4161 = vmatprep.subr.bf16.mxu0 0
  %4162 = vmatpush1.bf16.msra.mxu0 %v3806
  %4163 = vmatprep.subr.bf16.mxu0 0
  %4164 = vmatpush1.bf16.msra.mxu0 %v3807
  %4165 = vmatprep.subr.bf16.mxu0 0
  %4166 = vmatpush1.bf16.msra.mxu0 %v3808
  %4167 = vmatprep.subr.bf16.mxu0 0
  %4168 = vmatpush1.bf16.msra.mxu0 %v3809
  %4169 = vmatprep.subr.bf16.mxu0 0
  %4170 = vmatpush1.bf16.msra.mxu0 %v3810
  %4171 = vmatprep.subr.bf16.mxu0 0
  %4172 = vmatpush1.bf16.msra.mxu0 %v3811
  %4173 = vmatprep.subr.bf16.mxu0 0
  %4174 = vmatpush1.bf16.msra.mxu0 %v3812
  %4175 = vmatprep.subr.bf16.mxu0 0
  %4176 = vmatpush1.bf16.msra.mxu0 %v3813
  %4177 = vmatprep.subr.bf16.mxu0 0
  %4178 = vmatpush1.bf16.msra.mxu0 %v3814
  %4179 = vmatprep.subr.bf16.mxu0 0
  %4180 = vmatpush1.bf16.msra.mxu0 %v3815
  %4181 = vmatprep.subr.bf16.mxu0 0
  %4182 = vmatpush1.bf16.msra.mxu0 %v3816
  %4183 = vmatprep.subr.bf16.mxu0 0
  %4184 = vmatpush1.bf16.msra.mxu0 %v3817
  %4185 = vmatprep.subr.bf16.mxu0 0
  %4186 = vmatpush1.bf16.msra.mxu0 %v3818
  %4187 = vmatprep.mubr.bf16.mxu0 %v3858
  %4188 = vmatmul.mubr.bf16.gmra.mrb[0].mxu0 %v3857
  %v4189 = vpop.f32.mrb[0].mxu0
  %v4190 = vadd.f32 %v4150, %v4189
  %v4191 = vpop.f32.mrb[0].mxu0
  %v4192 = vpop.f32.mrb[0].mxu0
  %v4193 = vpop.f32.mrb[0].mxu0
  %4194 = vdwg.mxu0
  %v4195 = vpack.c.bf16 %v4190, %v4190
  %v4196 = vld [vmem:[%s4] sm:$0xf]
  %v4197 = vld [vmem:[%s4 + $0x4] sm:$0xf]
  %v4198 = vld [vmem:[%s4 + $0x8] sm:$0xf]
  %v4199 = vld [vmem:[%s4 + $0xc] sm:$0xf]
  %v4200 = vld [vmem:[%s5] sm:$0x1]
  %v4202 = vlaneseq
  %v4203 = vshrl.u32 %v4202, 7
  %v4204 = vsub.s32 0, %v4203
  %v4205 = vrot.slane %v4200, %v4204
  %v4211 = vunpack.c.l.b16 %v4196
  %v4212 = vunpack.c.l.b16 %v4197
  %v4213 = vunpack.c.l.b16 %v4198
  %v4214 = vunpack.c.l.b16 %v4199
  %v4215 = vpack.c.b16 %v4212, %v4211
  %v4216 = vpack.c.b16 %v4214, %v4213
  %vm4219 = vcmask 261120
  %v4221 = vsel %vm4219, %v4195, 0
  %4223 = vmatprep.subr.bf16.mxu0 0
  %4224 = vmatpush1.bf16.msra.mxu0 %v4215
  %4225 = vmatprep.subr.bf16.mxu0 0
  %4226 = vmatpush1.bf16.msra.mxu0 %v4216
  %4227 = vmatprep.subr.bf16.mxu0 0
  %4228 = vmatpush1.bf16.msra.mxu0 0
  %4229 = vmatprep.subr.bf16.mxu0 0
  %4230 = vmatpush1.bf16.msra.mxu0 0
  %4231 = vmatprep.subr.bf16.mxu0 0
  %4232 = vmatpush1.bf16.msra.mxu0 0
  %4233 = vmatprep.subr.bf16.mxu0 0
  %4234 = vmatpush1.bf16.msra.mxu0 0
  %4235 = vmatprep.subr.bf16.mxu0 0
  %4236 = vmatpush1.bf16.msra.mxu0 0
  %4237 = vmatprep.subr.bf16.mxu0 0
  %4238 = vmatpush1.bf16.msra.mxu0 0
  %4239 = vmatprep.subr.bf16.mxu0 0
  %4240 = vmatpush1.bf16.msra.mxu0 0
  %4241 = vmatprep.subr.bf16.mxu0 0
  %4242 = vmatpush1.bf16.msra.mxu0 0
  %4243 = vmatprep.subr.bf16.mxu0 0
  %4244 = vmatpush1.bf16.msra.mxu0 0
  %4245 = vmatprep.subr.bf16.mxu0 0
  %4246 = vmatpush1.bf16.msra.mxu0 0
  %4247 = vmatprep.subr.bf16.mxu0 0
  %4248 = vmatpush1.bf16.msra.mxu0 0
  %4249 = vmatprep.subr.bf16.mxu0 0
  %4250 = vmatpush1.bf16.msra.mxu0 0
  %4251 = vmatprep.subr.bf16.mxu0 0
  %4252 = vmatpush1.bf16.msra.mxu0 0
  %4253 = vmatprep.subr.bf16.mxu0 0
  %4254 = vmatpush1.bf16.msra.mxu0 0
  %4255 = vmatprep.mubr.bf16.mxu0 0
  %4256 = vmatmul.mubr.bf16.gmra.mrb[0].mxu0 %v4221
  %v4257 = vpop.f32.mrb[0].mxu0
  %v4258 = vadd.f32 %v4205, %v4257
  %v4259 = vpop.f32.mrb[0].mxu0
  %v4260 = vpop.f32.mrb[0].mxu0
  %v4261 = vpop.f32.mrb[0].mxu0
  %4262 = vdwg.mxu0
  %v4263 = vmax.f32 %v4258, 0.0
  %v4264 = vpack.c.bf16 %v4263, %v4263
  %v4265 = vld [vmem:[%s6] sm:$0xf]
  %v4266 = vld [vmem:[%s6 + $0x4] sm:$0xf]
  %v4267 = vld [vmem:[%s6 + $0x8] sm:$0xf]
  %v4268 = vld [vmem:[%s6 + $0xc] sm:$0xf]
  %v4269 = vld [vmem:[%s6 + $0x10] sm:$0xf]
  %v4270 = vld [vmem:[%s6 + $0x14] sm:$0xf]
  %v4271 = vld [vmem:[%s6 + $0x18] sm:$0xf]
  %v4272 = vld [vmem:[%s6 + $0x1c] sm:$0xf]
  %v4273 = vld [vmem:[%s6 + $0x20] sm:$0xf]
  %v4274 = vld [vmem:[%s6 + $0x24] sm:$0xf]
  %v4275 = vld [vmem:[%s6 + $0x28] sm:$0xf]
  %v4276 = vld [vmem:[%s6 + $0x2c] sm:$0xf]
  %v4277 = vld [vmem:[%s6 + $0x30] sm:$0xf]
  %v4278 = vld [vmem:[%s6 + $0x34] sm:$0xf]
  %v4279 = vld [vmem:[%s6 + $0x38] sm:$0xf]
  %v4280 = vld [vmem:[%s6 + $0x3c] sm:$0xf]
  %v4281 = vld [vmem:[%s7] sm:$0x1]
  %v4283 = vlaneseq
  %v4284 = vshrl.u32 %v4283, 7
  %v4285 = vsub.s32 0, %v4284
  %v4286 = vrot.slane %v4281, %v4285
  %v4304 = vunpack.c.l.b16 %v4265
  %v4305 = vunpack.c.l.b16 %v4266
  %v4306 = vunpack.c.l.b16 %v4267
  %v4307 = vunpack.c.l.b16 %v4268
  %v4308 = vunpack.c.l.b16 %v4269
  %v4309 = vunpack.c.l.b16 %v4270
  %v4310 = vunpack.c.l.b16 %v4271
  %v4311 = vunpack.c.l.b16 %v4272
  %v4312 = vunpack.c.l.b16 %v4273
  %v4313 = vunpack.c.l.b16 %v4274
  %v4314 = vunpack.c.l.b16 %v4275
  %v4315 = vunpack.c.l.b16 %v4276
  %v4316 = vunpack.c.l.b16 %v4277
  %v4317 = vunpack.c.l.b16 %v4278
  %v4318 = vunpack.c.l.b16 %v4279
  %v4319 = vunpack.c.l.b16 %v4280
  %v4320 = vpack.c.b16 %v4305, %v4304
  %v4321 = vpack.c.b16 %v4307, %v4306
  %v4322 = vpack.c.b16 %v4309, %v4308
  %v4323 = vpack.c.b16 %v4311, %v4310
  %v4324 = vpack.c.b16 %v4313, %v4312
  %v4325 = vpack.c.b16 %v4315, %v4314
  %v4326 = vpack.c.b16 %v4317, %v4316
  %v4327 = vpack.c.b16 %v4319, %v4318
  %4336 = vmatprep.subr.bf16.mxu0 0
  %4337 = vmatpush1.bf16.msra.mxu0 %v4320
  %4338 = vmatprep.subr.bf16.mxu0 0
  %4339 = vmatpush1.bf16.msra.mxu0 %v4321
  %4340 = vmatprep.subr.bf16.mxu0 0
  %4341 = vmatpush1.bf16.msra.mxu0 %v4322
  %4342 = vmatprep.subr.bf16.mxu0 0
  %4343 = vmatpush1.bf16.msra.mxu0 %v4323
  %4344 = vmatprep.subr.bf16.mxu0 0
  %4345 = vmatpush1.bf16.msra.mxu0 %v4324
  %4346 = vmatprep.subr.bf16.mxu0 0
  %4347 = vmatpush1.bf16.msra.mxu0 %v4325
  %4348 = vmatprep.subr.bf16.mxu0 0
  %4349 = vmatpush1.bf16.msra.mxu0 %v4326
  %4350 = vmatprep.subr.bf16.mxu0 0
  %4351 = vmatpush1.bf16.msra.mxu0 %v4327
  %4352 = vmatprep.subr.bf16.mxu0 0
  %4353 = vmatpush1.bf16.msra.mxu0 0
  %4354 = vmatprep.subr.bf16.mxu0 0
  %4355 = vmatpush1.bf16.msra.mxu0 0
  %4356 = vmatprep.subr.bf16.mxu0 0
  %4357 = vmatpush1.bf16.msra.mxu0 0
  %4358 = vmatprep.subr.bf16.mxu0 0
  %4359 = vmatpush1.bf16.msra.mxu0 0
  %4360 = vmatprep.subr.bf16.mxu0 0
  %4361 = vmatpush1.bf16.msra.mxu0 0
  %4362 = vmatprep.subr.bf16.mxu0 0
  %4363 = vmatpush1.bf16.msra.mxu0 0
  %4364 = vmatprep.subr.bf16.mxu0 0
  %4365 = vmatpush1.bf16.msra.mxu0 0
  %4366 = vmatprep.subr.bf16.mxu0 0
  %4367 = vmatpush1.bf16.msra.mxu0 0
  %4368 = vmatprep.mubr.bf16.mxu0 0
  %4369 = vmatmul.mubr.bf16.gmra.mrb[0].mxu0 %v4264
  %v4370 = vpop.f32.mrb[0].mxu0
  %v4371 = vadd.f32 %v4286, %v4370
  %v4372 = vpop.f32.mrb[0].mxu0
  %v4373 = vpop.f32.mrb[0].mxu0
  %v4374 = vpop.f32.mrb[0].mxu0
  %4375 = vdwg.mxu0
  %vm4376 = vcmask 294144
  %v4377 = vsel %vm4376, %v4371, -inf
  %4378 = vmax.xlane.f32.xlu0 %v4377
  %v4379 = vpop.xlane.xlu0 %4378
  %v4380 = vsub.f32 %v4371, %v4379
  %v4381 = vmul.f32 %v4380, 1.442695
  %v4382 = vpow.pop %v4381
  %4384 = vrot.lane.b32.xlu0 %v4382, 96
  %v4385 = vpop.permute.xlu0 %4384
  %vm4387 = vcmask 31744
  %v4388 = vsel %vm4387, %v4385, 0.0
  %4389 = vadd.xlane.f32.xlu0 %v4388
  %v4390 = vpop.xlane.xlu0 %4389
  %v4391 = vrcp.pop %v4390
  %v4392 = vmul.f32 %v4390, %v4391
  %v4393 = vsub.f32 2.0, %v4392
  %v4394 = vmul.f32 %v4391, %v4393
  %v4395 = vmul.f32 %v4382, %v4394
  %v4396 = vsel %vm4219, %v4371, -inf
  %4397 = vmax.xlane.f32.xlu0 %v4396
  %v4398 = vpop.xlane.xlu0 %4397
  %v4399 = vsub.f32 %v4371, %v4398
  %v4400 = vmul.f32 %v4399, 1.442695
  %v4401 = vpow.pop %v4400
  %v4402 = vld [vmem:[%s8] sm:$0xff]
  %v4403 = vld [vmem:[%s8 + $0x8] sm:$0xff]
  %v4404 = vld [vmem:[%s8 + $0x10] sm:$0xff]
  %v4405 = vld [vmem:[%s8 + $0x18] sm:$0xff]
  %v4407 = vsel %vm4219, %v4401, 0
  %4409 = vmatprep.subr.mxu0 0.0
  %4410 = vmatpush1.msra.mxu0 %v4402
  %4411 = vmatprep.subr.mxu0 0.0
  %4412 = vmatpush1.msra.mxu0 %v4403
  %4413 = vmatprep.subr.mxu0 0.0
  %4414 = vmatpush1.msra.mxu0 %v4404
  %4415 = vmatprep.subr.mxu0 0.0
  %4416 = vmatpush1.msra.mxu0 %v4405
  %4417 = vmatprep.subr.mxu0 0.0
  %4418 = vmatpush1.msra.mxu0 0.0
  %4419 = vmatprep.subr.mxu0 0.0
  %4420 = vmatpush1.msra.mxu0 0.0
  %4421 = vmatprep.subr.mxu0 0.0
  %4422 = vmatpush1.msra.mxu0 0.0
  %4423 = vmatprep.subr.mxu0 0.0
  %4424 = vmatpush1.msra.mxu0 0.0
  %4425 = vmatprep.subr.mxu0 0.0
  %4426 = vmatpush1.msra.mxu0 0.0
  %4427 = vmatprep.subr.mxu0 0.0
  %4428 = vmatpush1.msra.mxu0 0.0
  %4429 = vmatprep.subr.mxu0 0.0
  %4430 = vmatpush1.msra.mxu0 0.0
  %4431 = vmatprep.subr.mxu0 0.0
  %4432 = vmatpush1.msra.mxu0 0.0
  %4433 = vmatprep.subr.mxu0 0.0
  %4434 = vmatpush1.msra.mxu0 0.0
  %4435 = vmatprep.subr.mxu0 0.0
  %4436 = vmatpush1.msra.mxu0 0.0
  %4437 = vmatprep.subr.mxu0 0.0
  %4438 = vmatpush1.msra.mxu0 0.0
  %4439 = vmatprep.subr.mxu0 0.0
  %4440 = vmatpush1.msra.mxu0 0.0
  %4441 = vmatprep.subr.mxu0 0.0
  %4442 = vmatpush1.msra.mxu0 0.0
  %4443 = vmatprep.subr.mxu0 0.0
  %4444 = vmatpush1.msra.mxu0 0.0
  %4445 = vmatprep.subr.mxu0 0.0
  %4446 = vmatpush1.msra.mxu0 0.0
  %4447 = vmatprep.subr.mxu0 0.0
  %4448 = vmatpush1.msra.mxu0 0.0
  %4449 = vmatprep.subr.mxu0 0.0
  %4450 = vmatpush1.msra.mxu0 0.0
  %4451 = vmatprep.subr.mxu0 0.0
  %4452 = vmatpush1.msra.mxu0 0.0
  %4453 = vmatprep.subr.mxu0 0.0
  %4454 = vmatpush1.msra.mxu0 0.0
  %4455 = vmatprep.subr.mxu0 0.0
  %4456 = vmatpush1.msra.mxu0 0.0
  %4457 = vmatprep.subr.mxu0 0.0
  %4458 = vmatpush1.msra.mxu0 0.0
  %4459 = vmatprep.subr.mxu0 0.0
  %4460 = vmatpush1.msra.mxu0 0.0
  %4461 = vmatprep.subr.mxu0 0.0
  %4462 = vmatpush1.msra.mxu0 0.0
  %4463 = vmatprep.subr.mxu0 0.0
  %4464 = vmatpush1.msra.mxu0 0.0
  %4465 = vmatprep.subr.mxu0 0.0
  %4466 = vmatpush1.msra.mxu0 0.0
  %4467 = vmatprep.subr.mxu0 0.0
  %4468 = vmatpush1.msra.mxu0 0.0
  %4469 = vmatprep.subr.mxu0 0.0
  %4470 = vmatpush1.msra.mxu0 0.0
  %4471 = vmatprep.subr.mxu0 0.0
  %4472 = vmatpush1.msra.mxu0 0.0
  %4473 = vmatprep.mubr.f32.mxu0 0.0
  %4474 = vmatmul.mubr.f32.gmra.mrb[0].mxu0 %v4407
  %v4475 = vpop.f32.mrb[0].mxu0
  %v4476 = vadd.f32 0.0, %v4475
  %v4477 = vpop.f32.mrb[0].mxu0
  %4478 = vdwg.mxu0
  %v4479 = vmax.f32 %v4476, 1e-30
  %v4480 = vrcp.pop %v4479
  %v4481 = vmul.f32 %v4479, %v4480
  %v4482 = vsub.f32 2.0, %v4481
  %v4483 = vmul.f32 %v4480, %v4482
  %4485 = vrot.lane.b32.xlu0 %v4483, 32
  %v4486 = vpop.permute.xlu0 %4485
  %v4488 = vmul.f32 %v4395, %v4486
  %v4489 = vld [vmem:[%s9] sm:$0xf]
  %4491 = vrot.lane.b32.xlu0 %v4488, 96
  %v4492 = vpop.permute.xlu0 %4491
  %v4493 = vsel %vm4387, %v4492, 0
  %vm4495 = vcmask 1043456
  %v4497 = vsel %vm4495, %v4489, 0
  %4499 = vmatprep.subr.mxu0 0.0
  %4500 = vmatpush1.msra.mxu0 %v4497
  %4501 = vmatprep.subr.mxu0 0.0
  %4502 = vmatpush1.msra.mxu0 0.0
  %4503 = vmatprep.subr.mxu0 0.0
  %4504 = vmatpush1.msra.mxu0 0.0
  %4505 = vmatprep.subr.mxu0 0.0
  %4506 = vmatpush1.msra.mxu0 0.0
  %4507 = vmatprep.subr.mxu0 0.0
  %4508 = vmatpush1.msra.mxu0 0.0
  %4509 = vmatprep.subr.mxu0 0.0
  %4510 = vmatpush1.msra.mxu0 0.0
  %4511 = vmatprep.subr.mxu0 0.0
  %4512 = vmatpush1.msra.mxu0 0.0
  %4513 = vmatprep.subr.mxu0 0.0
  %4514 = vmatpush1.msra.mxu0 0.0
  %4515 = vmatprep.subr.mxu0 0.0
  %4516 = vmatpush1.msra.mxu0 0.0
  %4517 = vmatprep.subr.mxu0 0.0
  %4518 = vmatpush1.msra.mxu0 0.0
  %4519 = vmatprep.subr.mxu0 0.0
  %4520 = vmatpush1.msra.mxu0 0.0
  %4521 = vmatprep.subr.mxu0 0.0
  %4522 = vmatpush1.msra.mxu0 0.0
  %4523 = vmatprep.subr.mxu0 0.0
  %4524 = vmatpush1.msra.mxu0 0.0
  %4525 = vmatprep.subr.mxu0 0.0
  %4526 = vmatpush1.msra.mxu0 0.0
  %4527 = vmatprep.subr.mxu0 0.0
  %4528 = vmatpush1.msra.mxu0 0.0
  %4529 = vmatprep.subr.mxu0 0.0
  %4530 = vmatpush1.msra.mxu0 0.0
  %4531 = vmatprep.subr.mxu0 0.0
  %4532 = vmatpush1.msra.mxu0 0.0
  %4533 = vmatprep.subr.mxu0 0.0
  %4534 = vmatpush1.msra.mxu0 0.0
  %4535 = vmatprep.subr.mxu0 0.0
  %4536 = vmatpush1.msra.mxu0 0.0
  %4537 = vmatprep.subr.mxu0 0.0
  %4538 = vmatpush1.msra.mxu0 0.0
  %4539 = vmatprep.subr.mxu0 0.0
  %4540 = vmatpush1.msra.mxu0 0.0
  %4541 = vmatprep.subr.mxu0 0.0
  %4542 = vmatpush1.msra.mxu0 0.0
  %4543 = vmatprep.subr.mxu0 0.0
  %4544 = vmatpush1.msra.mxu0 0.0
  %4545 = vmatprep.subr.mxu0 0.0
  %4546 = vmatpush1.msra.mxu0 0.0
  %4547 = vmatprep.subr.mxu0 0.0
  %4548 = vmatpush1.msra.mxu0 0.0
  %4549 = vmatprep.subr.mxu0 0.0
  %4550 = vmatpush1.msra.mxu0 0.0
  %4551 = vmatprep.subr.mxu0 0.0
  %4552 = vmatpush1.msra.mxu0 0.0
  %4553 = vmatprep.subr.mxu0 0.0
  %4554 = vmatpush1.msra.mxu0 0.0
  %4555 = vmatprep.subr.mxu0 0.0
  %4556 = vmatpush1.msra.mxu0 0.0
  %4557 = vmatprep.subr.mxu0 0.0
  %4558 = vmatpush1.msra.mxu0 0.0
  %4559 = vmatprep.subr.mxu0 0.0
  %4560 = vmatpush1.msra.mxu0 0.0
  %4561 = vmatprep.subr.mxu0 0.0
  %4562 = vmatpush1.msra.mxu0 0.0
  %4563 = vmatprep.mubr.f32.mxu0 0.0
  %4564 = vmatmul.mubr.f32.gmra.mrb[0].mxu0 %v4493
  %v4565 = vpop.f32.mrb[0].mxu0
  %v4566 = vadd.f32 0.0, %v4565
  %v4567 = vpop.f32.mrb[0].mxu0
  %4568 = vdwg.mxu0
  %v4569 = vmul.f32 %v4401, %v4566
  %4570 = vst.msk [vmem:[%s10] sm:$0xff] %vm4219, %v4569
  // Predicated region
  $region42: #{hierarchical_efficientnet_forward.1} parent=0 // pred_check
    _
  $region43: #{hierarchical_efficientnet_forward.1} parent=0 // pred_check_branch
    %4572 = sbr.rel (0) target = $region45
  $region44: #{hierarchical_efficientnet_forward.1} parent=0 // pred_region
    _
  $region45: #{hierarchical_efficientnet_forward.1} parent=0 // pred_fallthru
    _
  // Predicated region
  $region46: #{hierarchical_efficientnet_forward.1} parent=0 // pred_check
    _
  $region47: #{hierarchical_efficientnet_forward.1} parent=0 // pred_check_branch
    %4574 = sbr.rel (0) target = $region49
  $region48: #{hierarchical_efficientnet_forward.1} parent=0 // pred_region
    _
  $region49: #{hierarchical_efficientnet_forward.1} parent=0 // pred_fallthru
    _

</llo_original>
